<compile_context>
chip_gen: v7x
topology: tpu7x:2x2x1
jax: 0.10.0
libtpu: 0.0.40
codegen_flags: <defaults>
</compile_context>

<pallas_src>
import functools

import jax
import jax.numpy as jnp
from jax.experimental import pallas as pl
from jax.experimental.pallas import tpu as pltpu

EPS = 1e-5
LANE = 128


def _fused_kernel(x_ref, r_ref, w_ref, g1_ref, b1_ref, g2_ref, b2_ref, o_ref,
                  *, p_real):
    # x_ref, r_ref : (Cin, P_pad)      f32  (zero-padded past p_real)
    # w_ref        : (Cout_blk, Cin)   bf16 (1x1 conv weight, matmul form)
    # g1/b1        : (Cin, 1)          f32
    # g2/b2        : (Cout_blk, 1)     f32
    # o_ref        : (Cout_blk, P_pad) f32
    x = x_ref[...]
    r = r_ref[...]
    p_pad = x.shape[-1]
    inv_p = 1.0 / p_real                       # real spatial count, NOT padded

    # --- BN1 (72 ch): one-pass batch stats over the (lane) spatial axis.
    # Padded columns of x are zero, so they add nothing to the sums.
    s1 = jnp.sum(x, axis=-1, keepdims=True)
    ss1 = jnp.sum(x * x, axis=-1, keepdims=True)
    mean1 = s1 * inv_p
    var1 = jnp.maximum(ss1 * inv_p - mean1 * mean1, 0.0)    # biased var
    scale1 = g1_ref[...] * jax.lax.rsqrt(var1 + EPS)        # (Cin, 1)
    shift1 = b1_ref[...] - mean1 * scale1                   # (Cin, 1)

    # Fused BN1 apply + residual add.
    xh = x * scale1 + shift1 + r                            # (Cin, P_pad) f32

    # Keep the padded columns exactly zero so BN2 sums stay exact.
    if p_pad != p_real:
        lane = jax.lax.broadcasted_iota(jnp.int32, (1, p_pad), 1)
        xh = jnp.where(lane < p_real, xh, 0.0)

    # --- 1x1 conv == channel matmul on the MXU, bf16 operands, f32 acc.
    y = jnp.dot(w_ref[...], xh.astype(jnp.bfloat16),
                preferred_element_type=jnp.float32)         # (Cout_blk, P_pad)

    # --- BN2 (432 ch): one-pass batch stats (per-channel -> split-safe).
    s2 = jnp.sum(y, axis=-1, keepdims=True)
    ss2 = jnp.sum(y * y, axis=-1, keepdims=True)
    mean2 = s2 * inv_p
    var2 = jnp.maximum(ss2 * inv_p - mean2 * mean2, 0.0)
    scale2 = g2_ref[...] * jax.lax.rsqrt(var2 + EPS)        # (Cout_blk, 1)
    shift2 = b2_ref[...] - mean2 * scale2
    o_ref[...] = y * scale2 + shift2


def _split_and_semantics():
    """1 grid step on single-TC chips (v5e/v6e); core-parallel 2-way on v7x."""
    try:
        kind = jax.devices()[0].device_kind.lower()
    except Exception:
        kind = ""
    if "v7" in kind:
        core_par = getattr(pltpu, "CORE_PARALLEL", "parallel")
        return 2, (core_par,)
    return 1, ("arbitrary",)


@jax.jit
def fused_bn_add_conv_bn(x217, x204, w, g1, b1, g2, b2):
    """x217, x204: (N, Cin, H, W) f32.  Returns (N, Cout, H, W) f32."""
    N, Cin, H, W = x217.shape
    Cout = w.shape[0]
    P = N * H * W
    P_pad = ((P + LANE - 1) // LANE) * LANE

    # NCHW with N == 1 is already channels-major: pure reshape, no transpose.
    if N == 1:
        x2d = x217.reshape(Cin, P)
        r2d = x204.reshape(Cin, P)
    else:  # general-N fallback (not hit by this module)
        x2d = jnp.transpose(x217, (1, 0, 2, 3)).reshape(Cin, P)
        r2d = jnp.transpose(x204, (1, 0, 2, 3)).reshape(Cin, P)

    # Zero-pad the lane axis to a multiple of 128 for unmasked, fully-packed
    # vector stores; BN math inside the kernel still divides by the real P.
    if P_pad != P:
        pad = ((0, 0), (0, P_pad - P))
        x2d = jnp.pad(x2d, pad)
        r2d = jnp.pad(r2d, pad)

    w2d = w.reshape(Cout, Cin).astype(jnp.bfloat16)   # cast once, halves DMA
    g1c = g1.reshape(Cin, 1).astype(jnp.float32)
    b1c = b1.reshape(Cin, 1).astype(jnp.float32)
    g2c = g2.reshape(Cout, 1).astype(jnp.float32)
    b2c = b2.reshape(Cout, 1).astype(jnp.float32)

    n_split, dim_sem = _split_and_semantics()
    c_blk = Cout // n_split                  # 432 or 216, multiples of 8

    cost = pl.CostEstimate(
        flops=2 * Cout * Cin * P,
        transcendentals=Cin + Cout,          # the two rsqrt's
        bytes_accessed=int(2 * Cin * P_pad * 4 + Cout * Cin * 2
                           + Cout * P_pad * 4 + 2 * (Cin + Cout) * 4),
    )

    out2d = pl.pallas_call(
        functools.partial(_fused_kernel, p_real=P),
        out_shape=jax.ShapeDtypeStruct((Cout, P_pad), jnp.float32),
        grid=(n_split,),
        in_specs=[
            pl.BlockSpec((Cin, P_pad), lambda j: (0, 0)),
            pl.BlockSpec((Cin, P_pad), lambda j: (0, 0)),
            pl.BlockSpec((c_blk, Cin), lambda j: (j, 0)),
            pl.BlockSpec((Cin, 1), lambda j: (0, 0)),
            pl.BlockSpec((Cin, 1), lambda j: (0, 0)),
            pl.BlockSpec((c_blk, 1), lambda j: (j, 0)),
            pl.BlockSpec((c_blk, 1), lambda j: (j, 0)),
        ],
        out_specs=pl.BlockSpec((c_blk, P_pad), lambda j: (j, 0)),
        compiler_params=pltpu.CompilerParams(dimension_semantics=dim_sem),
        cost_estimate=cost,
    )(x2d, r2d, w2d, g1c, b1c, g2c, b2c)

    out2d = out2d[:, :P]                      # drop padded lanes

    # (Cout, P) -> NCHW: pure reshape for N == 1.
    if N == 1:
        return out2d.reshape(1, Cout, H, W)
    return jnp.transpose(out2d.reshape(Cout, N, H, W), (1, 0, 2, 3))


def _reference(x217, x204, w, g1, b1, g2, b2):
    # Pure-JAX f32 reference replicating PyTorch training-mode BN semantics.
    # TODO(synk): running_mean/running_var buffer updates (BN side effects)
    # are not reproduced; only the forward activation is.
    def bn(x, g, b):
        m = jnp.mean(x, axis=(0, 2, 3), keepdims=True)
        v = jnp.mean((x - m) ** 2, axis=(0, 2, 3), keepdims=True)
        return (x - m) * jax.lax.rsqrt(v + EPS) * g.reshape(1, -1, 1, 1) \
            + b.reshape(1, -1, 1, 1)

    y = bn(x217, g1, b1) + x204
    y = jax.lax.conv_general_dilated(y, w, (1, 1), "VALID",
                                     dimension_numbers=("NCHW", "OIHW", "NCHW"))
    return bn(y, g2, b2)


if __name__ == "__main__":
    key = jax.random.PRNGKey(0)
    k1, k2, k3, k4, k5, k6, k7 = jax.random.split(key, 7)

    N, Cin, H, W = 1, 72, 28, 28
    Cout = 432

    x217 = jax.random.normal(k1, (N, Cin, H, W), dtype=jnp.float32)
    x204 = jax.random.normal(k2, (N, Cin, H, W), dtype=jnp.float32)

    # Deterministic parameter init (shapes match the PyTorch module).
    bound = 1.0 / jnp.sqrt(float(Cin))
    w = jax.random.uniform(k3, (Cout, Cin, 1, 1), jnp.float32, -bound, bound)
    g1 = 1.0 + 0.1 * jax.random.normal(k4, (Cin,), jnp.float32)
    b1 = 0.1 * jax.random.normal(k5, (Cin,), jnp.float32)
    g2 = 1.0 + 0.1 * jax.random.normal(k6, (Cout,), jnp.float32)
    b2 = 0.1 * jax.random.normal(k7, (Cout,), jnp.float32)

    out = fused_bn_add_conv_bn(x217, x204, w, g1, b1, g2, b2)
    out = jax.block_until_ready(out)

    ref = _reference(x217, x204, w, g1, b1, g2, b2)
    assert out.shape == (N, Cout, H, W)
    # bf16 MXU operands give ~1e-3 relative deviation vs the f32 reference.
    assert jnp.allclose(out, ref, atol=3e-2, rtol=1e-2), "mismatch vs reference"

    print("KERNEL_OK")
</pallas_src>

<mosaic_0001>
module attributes {stable_mosaic.version = 11 : i64} {
  func.func @_fused_kernel(%arg0: i32, %arg1: memref<72x896xf32, #tpu.memory_space<vmem>>, %arg2: memref<72x896xf32, #tpu.memory_space<vmem>>, %arg3: memref<432x72xbf16, #tpu.memory_space<vmem>>, %arg4: memref<72x1xf32, #tpu.memory_space<vmem>>, %arg5: memref<72x1xf32, #tpu.memory_space<vmem>>, %arg6: memref<432x1xf32, #tpu.memory_space<vmem>>, %arg7: memref<432x1xf32, #tpu.memory_space<vmem>>, %arg8: memref<432x896xf32, #tpu.memory_space<vmem>>) attributes {dimension_semantics = [#tpu.dimension_semantics<arbitrary>], iteration_bounds = array<i64: 1>, scalar_prefetch = 0 : i64, scratch_operands = 0 : i64, tpu.core_type = #tpu.core_type<tc>, window_params = [{pipeline_mode = #tpu.pipeline_mode<synchronous>, transform_indices = @transform_0, window_bounds = array<i64: 72, 896>}, {pipeline_mode = #tpu.pipeline_mode<synchronous>, transform_indices = @transform_1, window_bounds = array<i64: 72, 896>}, {transform_indices = @transform_2, window_bounds = array<i64: 432, 72>}, {pipeline_mode = #tpu.pipeline_mode<synchronous>, transform_indices = @transform_3, window_bounds = array<i64: 72, 1>}, {pipeline_mode = #tpu.pipeline_mode<synchronous>, transform_indices = @transform_4, window_bounds = array<i64: 72, 1>}, {transform_indices = @transform_5, window_bounds = array<i64: 432, 1>}, {transform_indices = @transform_6, window_bounds = array<i64: 432, 1>}, {transform_indices = @transform_7, window_bounds = array<i64: 432, 896>}]} {
    %c0 = arith.constant 0 : index
    %c0_0 = arith.constant 0 : index
    %0 = vector.load %arg1[%c0, %c0_0] : memref<72x896xf32, #tpu.memory_space<vmem>>, vector<72x896xf32>
    %c0_1 = arith.constant 0 : index
    %c0_2 = arith.constant 0 : index
    %1 = vector.load %arg2[%c0_1, %c0_2] : memref<72x896xf32, #tpu.memory_space<vmem>>, vector<72x896xf32>
    %cst = arith.constant dense<0.000000e+00> : vector<72xf32>
    %2 = vector.multi_reduction <add>, %0, %cst [1] : vector<72x896xf32> to vector<72xf32>
    %3 = vector.shape_cast %2 : vector<72xf32> to vector<72x1xf32>
    %4 = arith.mulf %0, %0 : vector<72x896xf32>
    %cst_3 = arith.constant dense<0.000000e+00> : vector<72xf32>
    %5 = vector.multi_reduction <add>, %4, %cst_3 [1] : vector<72x896xf32> to vector<72xf32>
    %6 = vector.shape_cast %5 : vector<72xf32> to vector<72x1xf32>
    %cst_4 = arith.constant 0.00127551018 : f32
    %7 = vector.broadcast %cst_4 : f32 to vector<72x1xf32>
    %8 = arith.mulf %3, %7 : vector<72x1xf32>
    %cst_5 = arith.constant 0.00127551018 : f32
    %9 = vector.broadcast %cst_5 : f32 to vector<72x1xf32>
    %10 = arith.mulf %6, %9 : vector<72x1xf32>
    %11 = arith.mulf %8, %8 : vector<72x1xf32>
    %12 = arith.subf %10, %11 : vector<72x1xf32>
    %cst_6 = arith.constant 0.000000e+00 : f32
    %13 = vector.broadcast %cst_6 : f32 to vector<72x1xf32>
    %14 = arith.maximumf %12, %13 : vector<72x1xf32>
    %c0_7 = arith.constant 0 : index
    %c0_8 = arith.constant 0 : index
    %15 = vector.load %arg4[%c0_7, %c0_8] : memref<72x1xf32, #tpu.memory_space<vmem>>, vector<72x1xf32>
    %cst_9 = arith.constant 9.99999974E-6 : f32
    %16 = vector.broadcast %cst_9 : f32 to vector<72x1xf32>
    %17 = arith.addf %14, %16 : vector<72x1xf32>
    %18 = math.rsqrt %17 : vector<72x1xf32>
    %19 = arith.mulf %15, %18 : vector<72x1xf32>
    %c0_10 = arith.constant 0 : index
    %c0_11 = arith.constant 0 : index
    %20 = vector.load %arg5[%c0_10, %c0_11] : memref<72x1xf32, #tpu.memory_space<vmem>>, vector<72x1xf32>
    %21 = arith.mulf %8, %19 : vector<72x1xf32>
    %22 = arith.subf %20, %21 : vector<72x1xf32>
    %23 = vector.broadcast %19 : vector<72x1xf32> to vector<72x896xf32>
    %24 = arith.mulf %0, %23 : vector<72x896xf32>
    %25 = vector.broadcast %22 : vector<72x1xf32> to vector<72x896xf32>
    %26 = arith.addf %24, %25 : vector<72x896xf32>
    %27 = arith.addf %26, %1 : vector<72x896xf32>
    %28 = tpu.iota {dimensions = array<i32: 1>} : vector<1x896xi32>
    %c784_i32 = arith.constant 784 : i32
    %29 = vector.broadcast %c784_i32 : i32 to vector<1x896xi32>
    %30 = arith.cmpi slt, %28, %29 : vector<1x896xi32>
    %cst_12 = arith.constant 0.000000e+00 : f32
    %31 = vector.shape_cast %30 : vector<1x896xi1> to vector<1x896xi1>
    %32 = vector.broadcast %31 : vector<1x896xi1> to vector<72x896xi1>
    %33 = vector.broadcast %cst_12 : f32 to vector<72x896xf32>
    %34 = arith.select %32, %27, %33 : vector<72x896xi1>, vector<72x896xf32>
    %c0_13 = arith.constant 0 : index
    %c0_14 = arith.constant 0 : index
    %35 = vector.load %arg3[%c0_13, %c0_14] : memref<432x72xbf16, #tpu.memory_space<vmem>>, vector<432x72xbf16>
    %36 = arith.truncf %34 : vector<72x896xf32> to vector<72x896xbf16>
    %cst_15 = arith.constant dense<0.000000e+00> : vector<432x896xf32>
    %37 = tpu.matmul %35, %36, %cst_15 {dimension_numbers = #tpu.dot_dimension_numbers<[1], [0], [0], [1], [0, 0, 1, 1], [], []>} : vector<432x72xbf16>, vector<72x896xbf16>, vector<432x896xf32> -> vector<432x896xf32>
    %cst_16 = arith.constant dense<0.000000e+00> : vector<432xf32>
    %38 = vector.multi_reduction <add>, %37, %cst_16 [1] : vector<432x896xf32> to vector<432xf32>
    %39 = vector.shape_cast %38 : vector<432xf32> to vector<432x1xf32>
    %40 = arith.mulf %37, %37 : vector<432x896xf32>
    %cst_17 = arith.constant dense<0.000000e+00> : vector<432xf32>
    %41 = vector.multi_reduction <add>, %40, %cst_17 [1] : vector<432x896xf32> to vector<432xf32>
    %42 = vector.shape_cast %41 : vector<432xf32> to vector<432x1xf32>
    %cst_18 = arith.constant 0.00127551018 : f32
    %43 = vector.broadcast %cst_18 : f32 to vector<432x1xf32>
    %44 = arith.mulf %39, %43 : vector<432x1xf32>
    %cst_19 = arith.constant 0.00127551018 : f32
    %45 = vector.broadcast %cst_19 : f32 to vector<432x1xf32>
    %46 = arith.mulf %42, %45 : vector<432x1xf32>
    %47 = arith.mulf %44, %44 : vector<432x1xf32>
    %48 = arith.subf %46, %47 : vector<432x1xf32>
    %cst_20 = arith.constant 0.000000e+00 : f32
    %49 = vector.broadcast %cst_20 : f32 to vector<432x1xf32>
    %50 = arith.maximumf %48, %49 : vector<432x1xf32>
    %c0_21 = arith.constant 0 : index
    %c0_22 = arith.constant 0 : index
    %51 = vector.load %arg6[%c0_21, %c0_22] : memref<432x1xf32, #tpu.memory_space<vmem>>, vector<432x1xf32>
    %cst_23 = arith.constant 9.99999974E-6 : f32
    %52 = vector.broadcast %cst_23 : f32 to vector<432x1xf32>
    %53 = arith.addf %50, %52 : vector<432x1xf32>
    %54 = math.rsqrt %53 : vector<432x1xf32>
    %55 = arith.mulf %51, %54 : vector<432x1xf32>
    %c0_24 = arith.constant 0 : index
    %c0_25 = arith.constant 0 : index
    %56 = vector.load %arg7[%c0_24, %c0_25] : memref<432x1xf32, #tpu.memory_space<vmem>>, vector<432x1xf32>
    %57 = arith.mulf %44, %55 : vector<432x1xf32>
    %58 = arith.subf %56, %57 : vector<432x1xf32>
    %59 = vector.broadcast %55 : vector<432x1xf32> to vector<432x896xf32>
    %60 = arith.mulf %37, %59 : vector<432x896xf32>
    %61 = vector.broadcast %58 : vector<432x1xf32> to vector<432x896xf32>
    %62 = arith.addf %60, %61 : vector<432x896xf32>
    %c0_26 = arith.constant 0 : index
    %c0_27 = arith.constant 0 : index
    %63 = vector.load %arg8[%c0_26, %c0_27] : memref<432x896xf32, #tpu.memory_space<vmem>>, vector<432x896xf32>
    tpu.vector_store %arg8[%c0_26, %c0_27], %62 {strides = array<i32>} : memref<432x896xf32, #tpu.memory_space<vmem>>, vector<432x896xf32>,
    return
  }
  func.func @transform_0(%arg0: i32) -> (i32, i32) {
    %c0_i32 = arith.constant 0 : i32
    %c0_i32_0 = arith.constant 0 : i32
    %c0_i32_1 = arith.constant 0 : i32
    return %c0_i32, %c0_i32_0 : i32, i32
  }
  func.func @transform_1(%arg0: i32) -> (i32, i32) {
    %c0_i32 = arith.constant 0 : i32
    %c0_i32_0 = arith.constant 0 : i32
    %c0_i32_1 = arith.constant 0 : i32
    return %c0_i32, %c0_i32_0 : i32, i32
  }
  func.func @transform_2(%arg0: i32) -> (i32, i32) {
    %c0_i32 = arith.constant 0 : i32
    %c0_i32_0 = arith.constant 0 : i32
    return %arg0, %c0_i32 : i32, i32
  }
  func.func @transform_3(%arg0: i32) -> (i32, i32) {
    %c0_i32 = arith.constant 0 : i32
    %c0_i32_0 = arith.constant 0 : i32
    %c0_i32_1 = arith.constant 0 : i32
    return %c0_i32, %c0_i32_0 : i32, i32
  }
  func.func @transform_4(%arg0: i32) -> (i32, i32) {
    %c0_i32 = arith.constant 0 : i32
    %c0_i32_0 = arith.constant 0 : i32
    %c0_i32_1 = arith.constant 0 : i32
    return %c0_i32, %c0_i32_0 : i32, i32
  }
  func.func @transform_5(%arg0: i32) -> (i32, i32) {
    %c0_i32 = arith.constant 0 : i32
    %c0_i32_0 = arith.constant 0 : i32
    return %arg0, %c0_i32 : i32, i32
  }
  func.func @transform_6(%arg0: i32) -> (i32, i32) {
    %c0_i32 = arith.constant 0 : i32
    %c0_i32_0 = arith.constant 0 : i32
    return %arg0, %c0_i32 : i32, i32
  }
  func.func @transform_7(%arg0: i32) -> (i32, i32) {
    %c0_i32 = arith.constant 0 : i32
    %c0_i32_0 = arith.constant 0 : i32
    return %arg0, %c0_i32 : i32, i32
  }
}

</mosaic_0001>

<llo_original>
// kernel: fused_bn_add_conv_bn.1
$region0: #{fused_bn_add_conv_bn.1}
  #allocation0 [shape = 'u32[]', space=smem, size = 0x4, offset = 0x4, fixed_abs, tag = 'smem constant byte address 0x4 - core index']
  #allocation1 [shape = 'u32[144,128]{1,0:T(1,128)}', space=vmem, size = 0x12000, scoped, tag = 'internal scratch']
  %s0 = inlined_call_operand.vmem [shape: f32[72,896], index: 0, kind: input, shape index: {}]
  %s1 = inlined_call_operand.vmem [shape: f32[72,896], index: 1, kind: input, shape index: {}]
  %s2 = inlined_call_operand.vmem [shape: bf16[432,72], index: 2, kind: input, shape index: {}]
  %s3 = inlined_call_operand.vmem [shape: f32[72,1], index: 3, kind: input, shape index: {}]
  %s4 = inlined_call_operand.vmem [shape: f32[72,1], index: 4, kind: input, shape index: {}]
  %s5 = inlined_call_operand.vmem [shape: f32[432,1], index: 5, kind: input, shape index: {}]
  %s6 = inlined_call_operand.vmem [shape: f32[432,1], index: 6, kind: input, shape index: {}]
  %s7 = inlined_call_operand.vmem [shape: f32[432,896], index: 7, kind: output, shape index: {}]
  %s8 = sld [smem:[#allocation0]]
  $region38: #{fused_bn_add_conv_bn.1} parent=0
    _
  %s10 = ssub.s32 1, %s8
  %s11 = scalar_select 0, %s10, %s8
  // Predicated region
  $region2: #{fused_bn_add_conv_bn.1} parent=0 // pred_check
    _
  $region3: #{fused_bn_add_conv_bn.1} parent=0 // pred_check_branch
    %13 = sbr.rel (0) target = $region5
  $region4: #{fused_bn_add_conv_bn.1} parent=0 // pred_region
    _
  $region5: #{fused_bn_add_conv_bn.1} parent=0 // pred_fallthru
    _
  // Predicated region
  $region6: #{fused_bn_add_conv_bn.1} parent=0 // pred_check
    _
  $region7: #{fused_bn_add_conv_bn.1} parent=0 // pred_check_branch
    %15 = sbr.rel (0) target = $region9
  $region8: #{fused_bn_add_conv_bn.1} parent=0 // pred_region
    _
  $region9: #{fused_bn_add_conv_bn.1} parent=0 // pred_fallthru
    _
  // Predicated region
  $region10: #{fused_bn_add_conv_bn.1} parent=0 // pred_check
    _
  $region11: #{fused_bn_add_conv_bn.1} parent=0 // pred_check_branch
    %17 = sbr.rel (0) target = $region13
  $region12: #{fused_bn_add_conv_bn.1} parent=0 // pred_region
    _
  $region13: #{fused_bn_add_conv_bn.1} parent=0 // pred_fallthru
    _
  // Predicated region
  $region14: #{fused_bn_add_conv_bn.1} parent=0 // pred_check
    _
  $region15: #{fused_bn_add_conv_bn.1} parent=0 // pred_check_branch
    %19 = sbr.rel (0) target = $region17
  $region16: #{fused_bn_add_conv_bn.1} parent=0 // pred_region
    _
  $region17: #{fused_bn_add_conv_bn.1} parent=0 // pred_fallthru
    _
  // Predicated region
  $region18: #{fused_bn_add_conv_bn.1} parent=0 // pred_check
    _
  $region19: #{fused_bn_add_conv_bn.1} parent=0 // pred_check_branch
    %21 = sbr.rel (0) target = $region21
  $region20: #{fused_bn_add_conv_bn.1} parent=0 // pred_region
    _
  $region21: #{fused_bn_add_conv_bn.1} parent=0 // pred_fallthru
    _
  // Predicated region
  $region22: #{fused_bn_add_conv_bn.1} parent=0 // pred_check
    _
  $region23: #{fused_bn_add_conv_bn.1} parent=0 // pred_check_branch
    %23 = sbr.rel (0) target = $region25
  $region24: #{fused_bn_add_conv_bn.1} parent=0 // pred_region
    _
  $region25: #{fused_bn_add_conv_bn.1} parent=0 // pred_fallthru
    _
  // Predicated region
  $region26: #{fused_bn_add_conv_bn.1} parent=0 // pred_check
    _
  $region27: #{fused_bn_add_conv_bn.1} parent=0 // pred_check_branch
    %25 = sbr.rel (0) target = $region29
  $region28: #{fused_bn_add_conv_bn.1} parent=0 // pred_region
    _
  $region29: #{fused_bn_add_conv_bn.1} parent=0 // pred_fallthru
    _
  %v27 = vld [vmem:[%s0] sm:$0xff]
  %v28 = vld [vmem:[%s0 + $0x8] sm:$0xff]
  %v29 = vld [vmem:[%s0 + $0x10] sm:$0xff]
  %v30 = vld [vmem:[%s0 + $0x18] sm:$0xff]
  %v31 = vld [vmem:[%s0 + $0x20] sm:$0xff]
  %v32 = vld [vmem:[%s0 + $0x28] sm:$0xff]
  %v33 = vld [vmem:[%s0 + $0x30] sm:$0xff]
  %v34 = vld [vmem:[%s0 + $0x38] sm:$0xff]
  %v35 = vld [vmem:[%s0 + $0x40] sm:$0xff]
  %v36 = vld [vmem:[%s0 + $0x48] sm:$0xff]
  %v37 = vld [vmem:[%s0 + $0x50] sm:$0xff]
  %v38 = vld [vmem:[%s0 + $0x58] sm:$0xff]
  %v39 = vld [vmem:[%s0 + $0x60] sm:$0xff]
  %v40 = vld [vmem:[%s0 + $0x68] sm:$0xff]
  %v41 = vld [vmem:[%s0 + $0x70] sm:$0xff]
  %v42 = vld [vmem:[%s0 + $0x78] sm:$0xff]
  %v43 = vld [vmem:[%s0 + $0x80] sm:$0xff]
  %v44 = vld [vmem:[%s0 + $0x88] sm:$0xff]
  %v45 = vld [vmem:[%s0 + $0x90] sm:$0xff]
  %v46 = vld [vmem:[%s0 + $0x98] sm:$0xff]
  %v47 = vld [vmem:[%s0 + $0xa0] sm:$0xff]
  %v48 = vld [vmem:[%s0 + $0xa8] sm:$0xff]
  %v49 = vld [vmem:[%s0 + $0xb0] sm:$0xff]
  %v50 = vld [vmem:[%s0 + $0xb8] sm:$0xff]
  %v51 = vld [vmem:[%s0 + $0xc0] sm:$0xff]
  %v52 = vld [vmem:[%s0 + $0xc8] sm:$0xff]
  %v53 = vld [vmem:[%s0 + $0xd0] sm:$0xff]
  %v54 = vld [vmem:[%s0 + $0xd8] sm:$0xff]
  %v55 = vld [vmem:[%s0 + $0xe0] sm:$0xff]
  %v56 = vld [vmem:[%s0 + $0xe8] sm:$0xff]
  %v57 = vld [vmem:[%s0 + $0xf0] sm:$0xff]
  %v58 = vld [vmem:[%s0 + $0xf8] sm:$0xff]
  %v59 = vld [vmem:[%s0 + $0x100] sm:$0xff]
  %v60 = vld [vmem:[%s0 + $0x108] sm:$0xff]
  %v61 = vld [vmem:[%s0 + $0x110] sm:$0xff]
  %v62 = vld [vmem:[%s0 + $0x118] sm:$0xff]
  %v63 = vld [vmem:[%s0 + $0x120] sm:$0xff]
  %v64 = vld [vmem:[%s0 + $0x128] sm:$0xff]
  %v65 = vld [vmem:[%s0 + $0x130] sm:$0xff]
  %v66 = vld [vmem:[%s0 + $0x138] sm:$0xff]
  %v67 = vld [vmem:[%s0 + $0x140] sm:$0xff]
  %v68 = vld [vmem:[%s0 + $0x148] sm:$0xff]
  %v69 = vld [vmem:[%s0 + $0x150] sm:$0xff]
  %v70 = vld [vmem:[%s0 + $0x158] sm:$0xff]
  %v71 = vld [vmem:[%s0 + $0x160] sm:$0xff]
  %v72 = vld [vmem:[%s0 + $0x168] sm:$0xff]
  %v73 = vld [vmem:[%s0 + $0x170] sm:$0xff]
  %v74 = vld [vmem:[%s0 + $0x178] sm:$0xff]
  %v75 = vld [vmem:[%s0 + $0x180] sm:$0xff]
  %v76 = vld [vmem:[%s0 + $0x188] sm:$0xff]
  %v77 = vld [vmem:[%s0 + $0x190] sm:$0xff]
  %v78 = vld [vmem:[%s0 + $0x198] sm:$0xff]
  %v79 = vld [vmem:[%s0 + $0x1a0] sm:$0xff]
  %v80 = vld [vmem:[%s0 + $0x1a8] sm:$0xff]
  %v81 = vld [vmem:[%s0 + $0x1b0] sm:$0xff]
  %v82 = vld [vmem:[%s0 + $0x1b8] sm:$0xff]
  %v83 = vld [vmem:[%s0 + $0x1c0] sm:$0xff]
  %v84 = vld [vmem:[%s0 + $0x1c8] sm:$0xff]
  %v85 = vld [vmem:[%s0 + $0x1d0] sm:$0xff]
  %v86 = vld [vmem:[%s0 + $0x1d8] sm:$0xff]
  %v87 = vld [vmem:[%s0 + $0x1e0] sm:$0xff]
  %v88 = vld [vmem:[%s0 + $0x1e8] sm:$0xff]
  %v89 = vld [vmem:[%s0 + $0x1f0] sm:$0xff]
  %v90 = vld [vmem:[%s1] sm:$0xff]
  %v91 = vld [vmem:[%s1 + $0x8] sm:$0xff]
  %v92 = vld [vmem:[%s1 + $0x10] sm:$0xff]
  %v93 = vld [vmem:[%s1 + $0x18] sm:$0xff]
  %v94 = vld [vmem:[%s1 + $0x20] sm:$0xff]
  %v95 = vld [vmem:[%s1 + $0x28] sm:$0xff]
  %v96 = vld [vmem:[%s1 + $0x30] sm:$0xff]
  %v97 = vld [vmem:[%s1 + $0x38] sm:$0xff]
  %v98 = vld [vmem:[%s1 + $0x40] sm:$0xff]
  %v99 = vld [vmem:[%s1 + $0x48] sm:$0xff]
  %v100 = vld [vmem:[%s1 + $0x50] sm:$0xff]
  %v101 = vld [vmem:[%s1 + $0x58] sm:$0xff]
  %v102 = vld [vmem:[%s1 + $0x60] sm:$0xff]
  %v103 = vld [vmem:[%s1 + $0x68] sm:$0xff]
  %v104 = vld [vmem:[%s1 + $0x70] sm:$0xff]
  %v105 = vld [vmem:[%s1 + $0x78] sm:$0xff]
  %v106 = vld [vmem:[%s1 + $0x80] sm:$0xff]
  %v107 = vld [vmem:[%s1 + $0x88] sm:$0xff]
  %v108 = vld [vmem:[%s1 + $0x90] sm:$0xff]
  %v109 = vld [vmem:[%s1 + $0x98] sm:$0xff]
  %v110 = vld [vmem:[%s1 + $0xa0] sm:$0xff]
  %v111 = vld [vmem:[%s1 + $0xa8] sm:$0xff]
  %v112 = vld [vmem:[%s1 + $0xb0] sm:$0xff]
  %v113 = vld [vmem:[%s1 + $0xb8] sm:$0xff]
  %v114 = vld [vmem:[%s1 + $0xc0] sm:$0xff]
  %v115 = vld [vmem:[%s1 + $0xc8] sm:$0xff]
  %v116 = vld [vmem:[%s1 + $0xd0] sm:$0xff]
  %v117 = vld [vmem:[%s1 + $0xd8] sm:$0xff]
  %v118 = vld [vmem:[%s1 + $0xe0] sm:$0xff]
  %v119 = vld [vmem:[%s1 + $0xe8] sm:$0xff]
  %v120 = vld [vmem:[%s1 + $0xf0] sm:$0xff]
  %v121 = vld [vmem:[%s1 + $0xf8] sm:$0xff]
  %v122 = vld [vmem:[%s1 + $0x100] sm:$0xff]
  %v123 = vld [vmem:[%s1 + $0x108] sm:$0xff]
  %v124 = vld [vmem:[%s1 + $0x110] sm:$0xff]
  %v125 = vld [vmem:[%s1 + $0x118] sm:$0xff]
  %v126 = vld [vmem:[%s1 + $0x120] sm:$0xff]
  %v127 = vld [vmem:[%s1 + $0x128] sm:$0xff]
  %v128 = vld [vmem:[%s1 + $0x130] sm:$0xff]
  %v129 = vld [vmem:[%s1 + $0x138] sm:$0xff]
  %v130 = vld [vmem:[%s1 + $0x140] sm:$0xff]
  %v131 = vld [vmem:[%s1 + $0x148] sm:$0xff]
  %v132 = vld [vmem:[%s1 + $0x150] sm:$0xff]
  %v133 = vld [vmem:[%s1 + $0x158] sm:$0xff]
  %v134 = vld [vmem:[%s1 + $0x160] sm:$0xff]
  %v135 = vld [vmem:[%s1 + $0x168] sm:$0xff]
  %v136 = vld [vmem:[%s1 + $0x170] sm:$0xff]
  %v137 = vld [vmem:[%s1 + $0x178] sm:$0xff]
  %v138 = vld [vmem:[%s1 + $0x180] sm:$0xff]
  %v139 = vld [vmem:[%s1 + $0x188] sm:$0xff]
  %v140 = vld [vmem:[%s1 + $0x190] sm:$0xff]
  %v141 = vld [vmem:[%s1 + $0x198] sm:$0xff]
  %v142 = vld [vmem:[%s1 + $0x1a0] sm:$0xff]
  %v143 = vld [vmem:[%s1 + $0x1a8] sm:$0xff]
  %v144 = vld [vmem:[%s1 + $0x1b0] sm:$0xff]
  %v145 = vld [vmem:[%s1 + $0x1b8] sm:$0xff]
  %v146 = vld [vmem:[%s1 + $0x1c0] sm:$0xff]
  %v147 = vld [vmem:[%s1 + $0x1c8] sm:$0xff]
  %v148 = vld [vmem:[%s1 + $0x1d0] sm:$0xff]
  %v149 = vld [vmem:[%s1 + $0x1d8] sm:$0xff]
  %v150 = vld [vmem:[%s1 + $0x1e0] sm:$0xff]
  %v151 = vld [vmem:[%s1 + $0x1e8] sm:$0xff]
  %v152 = vld [vmem:[%s1 + $0x1f0] sm:$0xff]
  %v153 = vadd.f32 %v27, %v28
  %v154 = vadd.f32 %v153, %v29
  %v155 = vadd.f32 %v154, %v30
  %v156 = vadd.f32 %v155, %v31
  %v157 = vadd.f32 %v156, %v32
  %v158 = vadd.f32 %v157, %v33
  %159 = vadd.xlane.f32.xlu0 %v158
  %v160 = vpop.xlane.xlu0 %159
  %v161 = vadd.f32 %v34, %v35
  %v162 = vadd.f32 %v161, %v36
  %v163 = vadd.f32 %v162, %v37
  %v164 = vadd.f32 %v163, %v38
  %v165 = vadd.f32 %v164, %v39
  %v166 = vadd.f32 %v165, %v40
  %167 = vadd.xlane.f32.xlu0 %v166
  %v168 = vpop.xlane.xlu0 %167
  %v169 = vadd.f32 %v41, %v42
  %v170 = vadd.f32 %v169, %v43
  %v171 = vadd.f32 %v170, %v44
  %v172 = vadd.f32 %v171, %v45
  %v173 = vadd.f32 %v172, %v46
  %v174 = vadd.f32 %v173, %v47
  %175 = vadd.xlane.f32.xlu0 %v174
  %v176 = vpop.xlane.xlu0 %175
  %v177 = vadd.f32 %v48, %v49
  %v178 = vadd.f32 %v177, %v50
  %v179 = vadd.f32 %v178, %v51
  %v180 = vadd.f32 %v179, %v52
  %v181 = vadd.f32 %v180, %v53
  %v182 = vadd.f32 %v181, %v54
  %183 = vadd.xlane.f32.xlu0 %v182
  %v184 = vpop.xlane.xlu0 %183
  %v185 = vadd.f32 %v55, %v56
  %v186 = vadd.f32 %v185, %v57
  %v187 = vadd.f32 %v186, %v58
  %v188 = vadd.f32 %v187, %v59
  %v189 = vadd.f32 %v188, %v60
  %v190 = vadd.f32 %v189, %v61
  %191 = vadd.xlane.f32.xlu0 %v190
  %v192 = vpop.xlane.xlu0 %191
  %v193 = vadd.f32 %v62, %v63
  %v194 = vadd.f32 %v193, %v64
  %v195 = vadd.f32 %v194, %v65
  %v196 = vadd.f32 %v195, %v66
  %v197 = vadd.f32 %v196, %v67
  %v198 = vadd.f32 %v197, %v68
  %199 = vadd.xlane.f32.xlu0 %v198
  %v200 = vpop.xlane.xlu0 %199
  %v201 = vadd.f32 %v69, %v70
  %v202 = vadd.f32 %v201, %v71
  %v203 = vadd.f32 %v202, %v72
  %v204 = vadd.f32 %v203, %v73
  %v205 = vadd.f32 %v204, %v74
  %v206 = vadd.f32 %v205, %v75
  %207 = vadd.xlane.f32.xlu0 %v206
  %v208 = vpop.xlane.xlu0 %207
  %v209 = vadd.f32 %v76, %v77
  %v210 = vadd.f32 %v209, %v78
  %v211 = vadd.f32 %v210, %v79
  %v212 = vadd.f32 %v211, %v80
  %v213 = vadd.f32 %v212, %v81
  %v214 = vadd.f32 %v213, %v82
  %215 = vadd.xlane.f32.xlu0 %v214
  %v216 = vpop.xlane.xlu0 %215
  %v217 = vadd.f32 %v83, %v84
  %v218 = vadd.f32 %v217, %v85
  %v219 = vadd.f32 %v218, %v86
  %v220 = vadd.f32 %v219, %v87
  %v221 = vadd.f32 %v220, %v88
  %v222 = vadd.f32 %v221, %v89
  %223 = vadd.xlane.f32.xlu0 %v222
  %v224 = vpop.xlane.xlu0 %223
  %v225 = vmul.f32 %v27, %v27
  %v226 = vmul.f32 %v28, %v28
  %v227 = vmul.f32 %v29, %v29
  %v228 = vmul.f32 %v30, %v30
  %v229 = vmul.f32 %v31, %v31
  %v230 = vmul.f32 %v32, %v32
  %v231 = vmul.f32 %v33, %v33
  %v232 = vmul.f32 %v34, %v34
  %v233 = vmul.f32 %v35, %v35
  %v234 = vmul.f32 %v36, %v36
  %v235 = vmul.f32 %v37, %v37
  %v236 = vmul.f32 %v38, %v38
  %v237 = vmul.f32 %v39, %v39
  %v238 = vmul.f32 %v40, %v40
  %v239 = vmul.f32 %v41, %v41
  %v240 = vmul.f32 %v42, %v42
  %v241 = vmul.f32 %v43, %v43
  %v242 = vmul.f32 %v44, %v44
  %v243 = vmul.f32 %v45, %v45
  %v244 = vmul.f32 %v46, %v46
  %v245 = vmul.f32 %v47, %v47
  %v246 = vmul.f32 %v48, %v48
  %v247 = vmul.f32 %v49, %v49
  %v248 = vmul.f32 %v50, %v50
  %v249 = vmul.f32 %v51, %v51
  %v250 = vmul.f32 %v52, %v52
  %v251 = vmul.f32 %v53, %v53
  %v252 = vmul.f32 %v54, %v54
  %v253 = vmul.f32 %v55, %v55
  %v254 = vmul.f32 %v56, %v56
  %v255 = vmul.f32 %v57, %v57
  %v256 = vmul.f32 %v58, %v58
  %v257 = vmul.f32 %v59, %v59
  %v258 = vmul.f32 %v60, %v60
  %v259 = vmul.f32 %v61, %v61
  %v260 = vmul.f32 %v62, %v62
  %v261 = vmul.f32 %v63, %v63
  %v262 = vmul.f32 %v64, %v64
  %v263 = vmul.f32 %v65, %v65
  %v264 = vmul.f32 %v66, %v66
  %v265 = vmul.f32 %v67, %v67
  %v266 = vmul.f32 %v68, %v68
  %v267 = vmul.f32 %v69, %v69
  %v268 = vmul.f32 %v70, %v70
  %v269 = vmul.f32 %v71, %v71
  %v270 = vmul.f32 %v72, %v72
  %v271 = vmul.f32 %v73, %v73
  %v272 = vmul.f32 %v74, %v74
  %v273 = vmul.f32 %v75, %v75
  %v274 = vmul.f32 %v76, %v76
  %v275 = vmul.f32 %v77, %v77
  %v276 = vmul.f32 %v78, %v78
  %v277 = vmul.f32 %v79, %v79
  %v278 = vmul.f32 %v80, %v80
  %v279 = vmul.f32 %v81, %v81
  %v280 = vmul.f32 %v82, %v82
  %v281 = vmul.f32 %v83, %v83
  %v282 = vmul.f32 %v84, %v84
  %v283 = vmul.f32 %v85, %v85
  %v284 = vmul.f32 %v86, %v86
  %v285 = vmul.f32 %v87, %v87
  %v286 = vmul.f32 %v88, %v88
  %v287 = vmul.f32 %v89, %v89
  %v288 = vadd.f32 %v225, %v226
  %v289 = vadd.f32 %v288, %v227
  %v290 = vadd.f32 %v289, %v228
  %v291 = vadd.f32 %v290, %v229
  %v292 = vadd.f32 %v291, %v230
  %v293 = vadd.f32 %v292, %v231
  %294 = vadd.xlane.f32.xlu0 %v293
  %v295 = vpop.xlane.xlu0 %294
  %v296 = vadd.f32 %v232, %v233
  %v297 = vadd.f32 %v296, %v234
  %v298 = vadd.f32 %v297, %v235
  %v299 = vadd.f32 %v298, %v236
  %v300 = vadd.f32 %v299, %v237
  %v301 = vadd.f32 %v300, %v238
  %302 = vadd.xlane.f32.xlu0 %v301
  %v303 = vpop.xlane.xlu0 %302
  %v304 = vadd.f32 %v239, %v240
  %v305 = vadd.f32 %v304, %v241
  %v306 = vadd.f32 %v305, %v242
  %v307 = vadd.f32 %v306, %v243
  %v308 = vadd.f32 %v307, %v244
  %v309 = vadd.f32 %v308, %v245
  %310 = vadd.xlane.f32.xlu0 %v309
  %v311 = vpop.xlane.xlu0 %310
  %v312 = vadd.f32 %v246, %v247
  %v313 = vadd.f32 %v312, %v248
  %v314 = vadd.f32 %v313, %v249
  %v315 = vadd.f32 %v314, %v250
  %v316 = vadd.f32 %v315, %v251
  %v317 = vadd.f32 %v316, %v252
  %318 = vadd.xlane.f32.xlu0 %v317
  %v319 = vpop.xlane.xlu0 %318
  %v320 = vadd.f32 %v253, %v254
  %v321 = vadd.f32 %v320, %v255
  %v322 = vadd.f32 %v321, %v256
  %v323 = vadd.f32 %v322, %v257
  %v324 = vadd.f32 %v323, %v258
  %v325 = vadd.f32 %v324, %v259
  %326 = vadd.xlane.f32.xlu0 %v325
  %v327 = vpop.xlane.xlu0 %326
  %v328 = vadd.f32 %v260, %v261
  %v329 = vadd.f32 %v328, %v262
  %v330 = vadd.f32 %v329, %v263
  %v331 = vadd.f32 %v330, %v264
  %v332 = vadd.f32 %v331, %v265
  %v333 = vadd.f32 %v332, %v266
  %334 = vadd.xlane.f32.xlu0 %v333
  %v335 = vpop.xlane.xlu0 %334
  %v336 = vadd.f32 %v267, %v268
  %v337 = vadd.f32 %v336, %v269
  %v338 = vadd.f32 %v337, %v270
  %v339 = vadd.f32 %v338, %v271
  %v340 = vadd.f32 %v339, %v272
  %v341 = vadd.f32 %v340, %v273
  %342 = vadd.xlane.f32.xlu0 %v341
  %v343 = vpop.xlane.xlu0 %342
  %v344 = vadd.f32 %v274, %v275
  %v345 = vadd.f32 %v344, %v276
  %v346 = vadd.f32 %v345, %v277
  %v347 = vadd.f32 %v346, %v278
  %v348 = vadd.f32 %v347, %v279
  %v349 = vadd.f32 %v348, %v280
  %350 = vadd.xlane.f32.xlu0 %v349
  %v351 = vpop.xlane.xlu0 %350
  %v352 = vadd.f32 %v281, %v282
  %v353 = vadd.f32 %v352, %v283
  %v354 = vadd.f32 %v353, %v284
  %v355 = vadd.f32 %v354, %v285
  %v356 = vadd.f32 %v355, %v286
  %v357 = vadd.f32 %v356, %v287
  %358 = vadd.xlane.f32.xlu0 %v357
  %v359 = vpop.xlane.xlu0 %358
  %v360 = vmul.f32 %v160, 0.0012755102
  %v361 = vmul.f32 %v168, 0.0012755102
  %v362 = vmul.f32 %v176, 0.0012755102
  %v363 = vmul.f32 %v184, 0.0012755102
  %v364 = vmul.f32 %v192, 0.0012755102
  %v365 = vmul.f32 %v200, 0.0012755102
  %v366 = vmul.f32 %v208, 0.0012755102
  %v367 = vmul.f32 %v216, 0.0012755102
  %v368 = vmul.f32 %v224, 0.0012755102
  %v369 = vmul.f32 %v295, 0.0012755102
  %v370 = vmul.f32 %v303, 0.0012755102
  %v371 = vmul.f32 %v311, 0.0012755102
  %v372 = vmul.f32 %v319, 0.0012755102
  %v373 = vmul.f32 %v327, 0.0012755102
  %v374 = vmul.f32 %v335, 0.0012755102
  %v375 = vmul.f32 %v343, 0.0012755102
  %v376 = vmul.f32 %v351, 0.0012755102
  %v377 = vmul.f32 %v359, 0.0012755102
  %v378 = vmul.f32 %v360, %v360
  %v379 = vmul.f32 %v361, %v361
  %v380 = vmul.f32 %v362, %v362
  %v381 = vmul.f32 %v363, %v363
  %v382 = vmul.f32 %v364, %v364
  %v383 = vmul.f32 %v365, %v365
  %v384 = vmul.f32 %v366, %v366
  %v385 = vmul.f32 %v367, %v367
  %v386 = vmul.f32 %v368, %v368
  %v387 = vsub.f32 %v369, %v378
  %v388 = vsub.f32 %v370, %v379
  %v389 = vsub.f32 %v371, %v380
  %v390 = vsub.f32 %v372, %v381
  %v391 = vsub.f32 %v373, %v382
  %v392 = vsub.f32 %v374, %v383
  %v393 = vsub.f32 %v375, %v384
  %v394 = vsub.f32 %v376, %v385
  %v395 = vsub.f32 %v377, %v386
  %v396 = vmax.f32 %v387, 0.0
  %v397 = vmax.f32 %v388, 0.0
  %v398 = vmax.f32 %v389, 0.0
  %v399 = vmax.f32 %v390, 0.0
  %v400 = vmax.f32 %v391, 0.0
  %v401 = vmax.f32 %v392, 0.0
  %v402 = vmax.f32 %v393, 0.0
  %v403 = vmax.f32 %v394, 0.0
  %v404 = vmax.f32 %v395, 0.0
  %v405 = vld [vmem:[%s3] sm:$0xff]
  %v406 = vld [vmem:[%s3 + $0x8] sm:$0xff]
  %v407 = vld [vmem:[%s3 + $0x10] sm:$0xff]
  %v408 = vld [vmem:[%s3 + $0x18] sm:$0xff]
  %v409 = vld [vmem:[%s3 + $0x20] sm:$0xff]
  %v410 = vld [vmem:[%s3 + $0x28] sm:$0xff]
  %v411 = vld [vmem:[%s3 + $0x30] sm:$0xff]
  %v412 = vld [vmem:[%s3 + $0x38] sm:$0xff]
  %v413 = vld [vmem:[%s3 + $0x40] sm:$0xff]
  %v414 = vadd.f32 %v396, 1e-05
  %v415 = vadd.f32 %v397, 1e-05
  %v416 = vadd.f32 %v398, 1e-05
  %v417 = vadd.f32 %v399, 1e-05
  %v418 = vadd.f32 %v400, 1e-05
  %v419 = vadd.f32 %v401, 1e-05
  %v420 = vadd.f32 %v402, 1e-05
  %v421 = vadd.f32 %v403, 1e-05
  %v422 = vadd.f32 %v404, 1e-05
  %v423 = vrsqrt.pop %v414
  %v424 = vrsqrt.pop %v415
  %v425 = vrsqrt.pop %v416
  %v426 = vrsqrt.pop %v417
  %v427 = vrsqrt.pop %v418
  %v428 = vrsqrt.pop %v419
  %v429 = vrsqrt.pop %v420
  %v430 = vrsqrt.pop %v421
  %v431 = vrsqrt.pop %v422
  %v432 = vmul.f32 %v405, %v423
  %v433 = vmul.f32 %v406, %v424
  %v434 = vmul.f32 %v407, %v425
  %v435 = vmul.f32 %v408, %v426
  %v436 = vmul.f32 %v409, %v427
  %v437 = vmul.f32 %v410, %v428
  %v438 = vmul.f32 %v411, %v429
  %v439 = vmul.f32 %v412, %v430
  %v440 = vmul.f32 %v413, %v431
  %v441 = vld [vmem:[%s4] sm:$0xff]
  %v442 = vld [vmem:[%s4 + $0x8] sm:$0xff]
  %v443 = vld [vmem:[%s4 + $0x10] sm:$0xff]
  %v444 = vld [vmem:[%s4 + $0x18] sm:$0xff]
  %v445 = vld [vmem:[%s4 + $0x20] sm:$0xff]
  %v446 = vld [vmem:[%s4 + $0x28] sm:$0xff]
  %v447 = vld [vmem:[%s4 + $0x30] sm:$0xff]
  %v448 = vld [vmem:[%s4 + $0x38] sm:$0xff]
  %v449 = vld [vmem:[%s4 + $0x40] sm:$0xff]
  %v450 = vmul.f32 %v360, %v432
  %v451 = vmul.f32 %v361, %v433
  %v452 = vmul.f32 %v362, %v434
  %v453 = vmul.f32 %v363, %v435
  %v454 = vmul.f32 %v364, %v436
  %v455 = vmul.f32 %v365, %v437
  %v456 = vmul.f32 %v366, %v438
  %v457 = vmul.f32 %v367, %v439
  %v458 = vmul.f32 %v368, %v440
  %v459 = vsub.f32 %v441, %v450
  %v460 = vsub.f32 %v442, %v451
  %v461 = vsub.f32 %v443, %v452
  %v462 = vsub.f32 %v444, %v453
  %v463 = vsub.f32 %v445, %v454
  %v464 = vsub.f32 %v446, %v455
  %v465 = vsub.f32 %v447, %v456
  %v466 = vsub.f32 %v448, %v457
  %v467 = vsub.f32 %v449, %v458
  %469 = vset.pattern.permute.xlu0 0
  %470 = vperm.xlu0 %469, %v432
  %v471 = vpop.permute.xlu0 %470
  %474 = vset.pattern.permute.xlu0 0
  %475 = vperm.xlu0 %474, %v433
  %v476 = vpop.permute.xlu0 %475
  %479 = vset.pattern.permute.xlu0 0
  %480 = vperm.xlu0 %479, %v434
  %v481 = vpop.permute.xlu0 %480
  %484 = vset.pattern.permute.xlu0 0
  %485 = vperm.xlu0 %484, %v435
  %v486 = vpop.permute.xlu0 %485
  %489 = vset.pattern.permute.xlu0 0
  %490 = vperm.xlu0 %489, %v436
  %v491 = vpop.permute.xlu0 %490
  %494 = vset.pattern.permute.xlu0 0
  %495 = vperm.xlu0 %494, %v437
  %v496 = vpop.permute.xlu0 %495
  %499 = vset.pattern.permute.xlu0 0
  %500 = vperm.xlu0 %499, %v438
  %v501 = vpop.permute.xlu0 %500
  %504 = vset.pattern.permute.xlu0 0
  %505 = vperm.xlu0 %504, %v439
  %v506 = vpop.permute.xlu0 %505
  %509 = vset.pattern.permute.xlu0 0
  %510 = vperm.xlu0 %509, %v440
  %v511 = vpop.permute.xlu0 %510
  %v513 = vmul.f32 %v27, %v471
  %v514 = vmul.f32 %v28, %v471
  %v515 = vmul.f32 %v29, %v471
  %v516 = vmul.f32 %v30, %v471
  %v517 = vmul.f32 %v31, %v471
  %v518 = vmul.f32 %v32, %v471
  %v519 = vmul.f32 %v33, %v471
  %v520 = vmul.f32 %v34, %v476
  %v521 = vmul.f32 %v35, %v476
  %v522 = vmul.f32 %v36, %v476
  %v523 = vmul.f32 %v37, %v476
  %v524 = vmul.f32 %v38, %v476
  %v525 = vmul.f32 %v39, %v476
  %v526 = vmul.f32 %v40, %v476
  %v527 = vmul.f32 %v41, %v481
  %v528 = vmul.f32 %v42, %v481
  %v529 = vmul.f32 %v43, %v481
  %v530 = vmul.f32 %v44, %v481
  %v531 = vmul.f32 %v45, %v481
  %v532 = vmul.f32 %v46, %v481
  %v533 = vmul.f32 %v47, %v481
  %v534 = vmul.f32 %v48, %v486
  %v535 = vmul.f32 %v49, %v486
  %v536 = vmul.f32 %v50, %v486
  %v537 = vmul.f32 %v51, %v486
  %v538 = vmul.f32 %v52, %v486
  %v539 = vmul.f32 %v53, %v486
  %v540 = vmul.f32 %v54, %v486
  %v541 = vmul.f32 %v55, %v491
  %v542 = vmul.f32 %v56, %v491
  %v543 = vmul.f32 %v57, %v491
  %v544 = vmul.f32 %v58, %v491
  %v545 = vmul.f32 %v59, %v491
  %v546 = vmul.f32 %v60, %v491
  %v547 = vmul.f32 %v61, %v491
  %v548 = vmul.f32 %v62, %v496
  %v549 = vmul.f32 %v63, %v496
  %v550 = vmul.f32 %v64, %v496
  %v551 = vmul.f32 %v65, %v496
  %v552 = vmul.f32 %v66, %v496
  %v553 = vmul.f32 %v67, %v496
  %v554 = vmul.f32 %v68, %v496
  %v555 = vmul.f32 %v69, %v501
  %v556 = vmul.f32 %v70, %v501
  %v557 = vmul.f32 %v71, %v501
  %v558 = vmul.f32 %v72, %v501
  %v559 = vmul.f32 %v73, %v501
  %v560 = vmul.f32 %v74, %v501
  %v561 = vmul.f32 %v75, %v501
  %v562 = vmul.f32 %v76, %v506
  %v563 = vmul.f32 %v77, %v506
  %v564 = vmul.f32 %v78, %v506
  %v565 = vmul.f32 %v79, %v506
  %v566 = vmul.f32 %v80, %v506
  %v567 = vmul.f32 %v81, %v506
  %v568 = vmul.f32 %v82, %v506
  %v569 = vmul.f32 %v83, %v511
  %v570 = vmul.f32 %v84, %v511
  %v571 = vmul.f32 %v85, %v511
  %v572 = vmul.f32 %v86, %v511
  %v573 = vmul.f32 %v87, %v511
  %v574 = vmul.f32 %v88, %v511
  %v575 = vmul.f32 %v89, %v511
  %577 = vset.pattern.permute.xlu0 0
  %578 = vperm.xlu0 %577, %v459
  %v579 = vpop.permute.xlu0 %578
  %582 = vset.pattern.permute.xlu0 0
  %583 = vperm.xlu0 %582, %v460
  %v584 = vpop.permute.xlu0 %583
  %587 = vset.pattern.permute.xlu0 0
  %588 = vperm.xlu0 %587, %v461
  %v589 = vpop.permute.xlu0 %588
  %592 = vset.pattern.permute.xlu0 0
  %593 = vperm.xlu0 %592, %v462
  %v594 = vpop.permute.xlu0 %593
  %597 = vset.pattern.permute.xlu0 0
  %598 = vperm.xlu0 %597, %v463
  %v599 = vpop.permute.xlu0 %598
  %602 = vset.pattern.permute.xlu0 0
  %603 = vperm.xlu0 %602, %v464
  %v604 = vpop.permute.xlu0 %603
  %607 = vset.pattern.permute.xlu0 0
  %608 = vperm.xlu0 %607, %v465
  %v609 = vpop.permute.xlu0 %608
  %612 = vset.pattern.permute.xlu0 0
  %613 = vperm.xlu0 %612, %v466
  %v614 = vpop.permute.xlu0 %613
  %617 = vset.pattern.permute.xlu0 0
  %618 = vperm.xlu0 %617, %v467
  %v619 = vpop.permute.xlu0 %618
  %v621 = vadd.f32 %v513, %v579
  %v622 = vadd.f32 %v514, %v579
  %v623 = vadd.f32 %v515, %v579
  %v624 = vadd.f32 %v516, %v579
  %v625 = vadd.f32 %v517, %v579
  %v626 = vadd.f32 %v518, %v579
  %v627 = vadd.f32 %v519, %v579
  %v628 = vadd.f32 %v520, %v584
  %v629 = vadd.f32 %v521, %v584
  %v630 = vadd.f32 %v522, %v584
  %v631 = vadd.f32 %v523, %v584
  %v632 = vadd.f32 %v524, %v584
  %v633 = vadd.f32 %v525, %v584
  %v634 = vadd.f32 %v526, %v584
  %v635 = vadd.f32 %v527, %v589
  %v636 = vadd.f32 %v528, %v589
  %v637 = vadd.f32 %v529, %v589
  %v638 = vadd.f32 %v530, %v589
  %v639 = vadd.f32 %v531, %v589
  %v640 = vadd.f32 %v532, %v589
  %v641 = vadd.f32 %v533, %v589
  %v642 = vadd.f32 %v534, %v594
  %v643 = vadd.f32 %v535, %v594
  %v644 = vadd.f32 %v536, %v594
  %v645 = vadd.f32 %v537, %v594
  %v646 = vadd.f32 %v538, %v594
  %v647 = vadd.f32 %v539, %v594
  %v648 = vadd.f32 %v540, %v594
  %v649 = vadd.f32 %v541, %v599
  %v650 = vadd.f32 %v542, %v599
  %v651 = vadd.f32 %v543, %v599
  %v652 = vadd.f32 %v544, %v599
  %v653 = vadd.f32 %v545, %v599
  %v654 = vadd.f32 %v546, %v599
  %v655 = vadd.f32 %v547, %v599
  %v656 = vadd.f32 %v548, %v604
  %v657 = vadd.f32 %v549, %v604
  %v658 = vadd.f32 %v550, %v604
  %v659 = vadd.f32 %v551, %v604
  %v660 = vadd.f32 %v552, %v604
  %v661 = vadd.f32 %v553, %v604
  %v662 = vadd.f32 %v554, %v604
  %v663 = vadd.f32 %v555, %v609
  %v664 = vadd.f32 %v556, %v609
  %v665 = vadd.f32 %v557, %v609
  %v666 = vadd.f32 %v558, %v609
  %v667 = vadd.f32 %v559, %v609
  %v668 = vadd.f32 %v560, %v609
  %v669 = vadd.f32 %v561, %v609
  %v670 = vadd.f32 %v562, %v614
  %v671 = vadd.f32 %v563, %v614
  %v672 = vadd.f32 %v564, %v614
  %v673 = vadd.f32 %v565, %v614
  %v674 = vadd.f32 %v566, %v614
  %v675 = vadd.f32 %v567, %v614
  %v676 = vadd.f32 %v568, %v614
  %v677 = vadd.f32 %v569, %v619
  %v678 = vadd.f32 %v570, %v619
  %v679 = vadd.f32 %v571, %v619
  %v680 = vadd.f32 %v572, %v619
  %v681 = vadd.f32 %v573, %v619
  %v682 = vadd.f32 %v574, %v619
  %v683 = vadd.f32 %v575, %v619
  %v684 = vadd.f32 %v621, %v90
  %v685 = vadd.f32 %v622, %v91
  %v686 = vadd.f32 %v623, %v92
  %v687 = vadd.f32 %v624, %v93
  %v688 = vadd.f32 %v625, %v94
  %v689 = vadd.f32 %v626, %v95
  %v690 = vadd.f32 %v627, %v96
  %v691 = vadd.f32 %v628, %v97
  %v692 = vadd.f32 %v629, %v98
  %v693 = vadd.f32 %v630, %v99
  %v694 = vadd.f32 %v631, %v100
  %v695 = vadd.f32 %v632, %v101
  %v696 = vadd.f32 %v633, %v102
  %v697 = vadd.f32 %v634, %v103
  %v698 = vadd.f32 %v635, %v104
  %v699 = vadd.f32 %v636, %v105
  %v700 = vadd.f32 %v637, %v106
  %v701 = vadd.f32 %v638, %v107
  %v702 = vadd.f32 %v639, %v108
  %v703 = vadd.f32 %v640, %v109
  %v704 = vadd.f32 %v641, %v110
  %v705 = vadd.f32 %v642, %v111
  %v706 = vadd.f32 %v643, %v112
  %v707 = vadd.f32 %v644, %v113
  %v708 = vadd.f32 %v645, %v114
  %v709 = vadd.f32 %v646, %v115
  %v710 = vadd.f32 %v647, %v116
  %v711 = vadd.f32 %v648, %v117
  %v712 = vadd.f32 %v649, %v118
  %v713 = vadd.f32 %v650, %v119
  %v714 = vadd.f32 %v651, %v120
  %v715 = vadd.f32 %v652, %v121
  %v716 = vadd.f32 %v653, %v122
  %v717 = vadd.f32 %v654, %v123
  %v718 = vadd.f32 %v655, %v124
  %v719 = vadd.f32 %v656, %v125
  %v720 = vadd.f32 %v657, %v126
  %v721 = vadd.f32 %v658, %v127
  %v722 = vadd.f32 %v659, %v128
  %v723 = vadd.f32 %v660, %v129
  %v724 = vadd.f32 %v661, %v130
  %v725 = vadd.f32 %v662, %v131
  %v726 = vadd.f32 %v663, %v132
  %v727 = vadd.f32 %v664, %v133
  %v728 = vadd.f32 %v665, %v134
  %v729 = vadd.f32 %v666, %v135
  %v730 = vadd.f32 %v667, %v136
  %v731 = vadd.f32 %v668, %v137
  %v732 = vadd.f32 %v669, %v138
  %v733 = vadd.f32 %v670, %v139
  %v734 = vadd.f32 %v671, %v140
  %v735 = vadd.f32 %v672, %v141
  %v736 = vadd.f32 %v673, %v142
  %v737 = vadd.f32 %v674, %v143
  %v738 = vadd.f32 %v675, %v144
  %v739 = vadd.f32 %v676, %v145
  %v740 = vadd.f32 %v677, %v146
  %v741 = vadd.f32 %v678, %v147
  %v742 = vadd.f32 %v679, %v148
  %v743 = vadd.f32 %v680, %v149
  %v744 = vadd.f32 %v681, %v150
  %v745 = vadd.f32 %v682, %v151
  %v746 = vadd.f32 %v683, %v152
  %v747 = vlaneseq
  %v748 = vand.u32 %v747, 127
  %v749 = vadd.s32 %v748, 128
  %v750 = vadd.s32 %v748, 256
  %v751 = vadd.s32 %v748, 384
  %v752 = vadd.s32 %v748, 512
  %v753 = vadd.s32 %v748, 640
  %v754 = vadd.s32 %v748, 768
  %vm755 = vcmp.lt.s32.totalorder %v748, 784
  %vm756 = vcmp.lt.s32.totalorder %v749, 784
  %vm757 = vcmp.lt.s32.totalorder %v750, 784
  %vm758 = vcmp.lt.s32.totalorder %v751, 784
  %vm759 = vcmp.lt.s32.totalorder %v752, 784
  %vm760 = vcmp.lt.s32.totalorder %v753, 784
  %vm761 = vcmp.lt.s32.totalorder %v754, 784
  %v762 = vsel %vm755, 1, 0
  %v763 = vsel %vm756, 1, 0
  %v764 = vsel %vm757, 1, 0
  %v765 = vsel %vm758, 1, 0
  %v766 = vsel %vm759, 1, 0
  %v767 = vsel %vm760, 1, 0
  %v768 = vsel %vm761, 1, 0
  %vm769 = vcmp.eq.s32.totalorder %v762, 1
  %vm770 = vcmp.eq.s32.totalorder %v763, 1
  %vm771 = vcmp.eq.s32.totalorder %v764, 1
  %vm772 = vcmp.eq.s32.totalorder %v765, 1
  %vm773 = vcmp.eq.s32.totalorder %v766, 1
  %vm774 = vcmp.eq.s32.totalorder %v767, 1
  %vm775 = vcmp.eq.s32.totalorder %v768, 1
  %v776 = vsel %vm769, %v684, 0.0
  %v777 = vsel %vm770, %v685, 0.0
  %v778 = vsel %vm771, %v686, 0.0
  %v779 = vsel %vm772, %v687, 0.0
  %v780 = vsel %vm773, %v688, 0.0
  %v781 = vsel %vm774, %v689, 0.0
  %v782 = vsel %vm775, %v690, 0.0
  %v783 = vsel %vm769, %v691, 0.0
  %v784 = vsel %vm770, %v692, 0.0
  %v785 = vsel %vm771, %v693, 0.0
  %v786 = vsel %vm772, %v694, 0.0
  %v787 = vsel %vm773, %v695, 0.0
  %v788 = vsel %vm774, %v696, 0.0
  %v789 = vsel %vm775, %v697, 0.0
  %v790 = vsel %vm769, %v698, 0.0
  %v791 = vsel %vm770, %v699, 0.0
  %v792 = vsel %vm771, %v700, 0.0
  %v793 = vsel %vm772, %v701, 0.0
  %v794 = vsel %vm773, %v702, 0.0
  %v795 = vsel %vm774, %v703, 0.0
  %v796 = vsel %vm775, %v704, 0.0
  %v797 = vsel %vm769, %v705, 0.0
  %v798 = vsel %vm770, %v706, 0.0
  %v799 = vsel %vm771, %v707, 0.0
  %v800 = vsel %vm772, %v708, 0.0
  %v801 = vsel %vm773, %v709, 0.0
  %v802 = vsel %vm774, %v710, 0.0
  %v803 = vsel %vm775, %v711, 0.0
  %v804 = vsel %vm769, %v712, 0.0
  %v805 = vsel %vm770, %v713, 0.0
  %v806 = vsel %vm771, %v714, 0.0
  %v807 = vsel %vm772, %v715, 0.0
  %v808 = vsel %vm773, %v716, 0.0
  %v809 = vsel %vm774, %v717, 0.0
  %v810 = vsel %vm775, %v718, 0.0
  %v811 = vsel %vm769, %v719, 0.0
  %v812 = vsel %vm770, %v720, 0.0
  %v813 = vsel %vm771, %v721, 0.0
  %v814 = vsel %vm772, %v722, 0.0
  %v815 = vsel %vm773, %v723, 0.0
  %v816 = vsel %vm774, %v724, 0.0
  %v817 = vsel %vm775, %v725, 0.0
  %v818 = vsel %vm769, %v726, 0.0
  %v819 = vsel %vm770, %v727, 0.0
  %v820 = vsel %vm771, %v728, 0.0
  %v821 = vsel %vm772, %v729, 0.0
  %v822 = vsel %vm773, %v730, 0.0
  %v823 = vsel %vm774, %v731, 0.0
  %v824 = vsel %vm775, %v732, 0.0
  %v825 = vsel %vm769, %v733, 0.0
  %v826 = vsel %vm770, %v734, 0.0
  %v827 = vsel %vm771, %v735, 0.0
  %v828 = vsel %vm772, %v736, 0.0
  %v829 = vsel %vm773, %v737, 0.0
  %v830 = vsel %vm774, %v738, 0.0
  %v831 = vsel %vm775, %v739, 0.0
  %v832 = vsel %vm769, %v740, 0.0
  %v833 = vsel %vm770, %v741, 0.0
  %v834 = vsel %vm771, %v742, 0.0
  %v835 = vsel %vm772, %v743, 0.0
  %v836 = vsel %vm773, %v744, 0.0
  %v837 = vsel %vm774, %v745, 0.0
  %v838 = vsel %vm775, %v746, 0.0
  %v839 = vld [vmem:[%s2] sm:$0xf]
  %v840 = vld [vmem:[%s2 + $0x4] sm:$0xf]
  %v841 = vld [vmem:[%s2 + $0x8] sm:$0xf]
  %v842 = vld [vmem:[%s2 + $0xc] sm:$0xf]
  %v843 = vld [vmem:[%s2 + $0x10] sm:$0xf]
  %v844 = vld [vmem:[%s2 + $0x14] sm:$0xf]
  %v845 = vld [vmem:[%s2 + $0x18] sm:$0xf]
  %v846 = vld [vmem:[%s2 + $0x1c] sm:$0xf]
  %v847 = vld [vmem:[%s2 + $0x20] sm:$0xf]
  %v848 = vld [vmem:[%s2 + $0x24] sm:$0xf]
  %v849 = vld [vmem:[%s2 + $0x28] sm:$0xf]
  %v850 = vld [vmem:[%s2 + $0x2c] sm:$0xf]
  %v851 = vld [vmem:[%s2 + $0x30] sm:$0xf]
  %v852 = vld [vmem:[%s2 + $0x34] sm:$0xf]
  %v853 = vld [vmem:[%s2 + $0x38] sm:$0xf]
  %v854 = vld [vmem:[%s2 + $0x3c] sm:$0xf]
  %v855 = vld [vmem:[%s2 + $0x40] sm:$0xf]
  %v856 = vld [vmem:[%s2 + $0x44] sm:$0xf]
  %v857 = vld [vmem:[%s2 + $0x48] sm:$0xf]
  %v858 = vld [vmem:[%s2 + $0x4c] sm:$0xf]
  %v859 = vld [vmem:[%s2 + $0x50] sm:$0xf]
  %v860 = vld [vmem:[%s2 + $0x54] sm:$0xf]
  %v861 = vld [vmem:[%s2 + $0x58] sm:$0xf]
  %v862 = vld [vmem:[%s2 + $0x5c] sm:$0xf]
  %v863 = vld [vmem:[%s2 + $0x60] sm:$0xf]
  %v864 = vld [vmem:[%s2 + $0x64] sm:$0xf]
  %v865 = vld [vmem:[%s2 + $0x68] sm:$0xf]
  %v866 = vld [vmem:[%s2 + $0x6c] sm:$0xf]
  %v867 = vld [vmem:[%s2 + $0x70] sm:$0xf]
  %v868 = vld [vmem:[%s2 + $0x74] sm:$0xf]
  %v869 = vld [vmem:[%s2 + $0x78] sm:$0xf]
  %v870 = vld [vmem:[%s2 + $0x7c] sm:$0xf]
  %v871 = vld [vmem:[%s2 + $0x80] sm:$0xf]
  %v872 = vld [vmem:[%s2 + $0x84] sm:$0xf]
  %v873 = vld [vmem:[%s2 + $0x88] sm:$0xf]
  %v874 = vld [vmem:[%s2 + $0x8c] sm:$0xf]
  %v875 = vld [vmem:[%s2 + $0x90] sm:$0xf]
  %v876 = vld [vmem:[%s2 + $0x94] sm:$0xf]
  %v877 = vld [vmem:[%s2 + $0x98] sm:$0xf]
  %v878 = vld [vmem:[%s2 + $0x9c] sm:$0xf]
  %v879 = vld [vmem:[%s2 + $0xa0] sm:$0xf]
  %v880 = vld [vmem:[%s2 + $0xa4] sm:$0xf]
  %v881 = vld [vmem:[%s2 + $0xa8] sm:$0xf]
  %v882 = vld [vmem:[%s2 + $0xac] sm:$0xf]
  %v883 = vld [vmem:[%s2 + $0xb0] sm:$0xf]
  %v884 = vld [vmem:[%s2 + $0xb4] sm:$0xf]
  %v885 = vld [vmem:[%s2 + $0xb8] sm:$0xf]
  %v886 = vld [vmem:[%s2 + $0xbc] sm:$0xf]
  %v887 = vld [vmem:[%s2 + $0xc0] sm:$0xf]
  %v888 = vld [vmem:[%s2 + $0xc4] sm:$0xf]
  %v889 = vld [vmem:[%s2 + $0xc8] sm:$0xf]
  %v890 = vld [vmem:[%s2 + $0xcc] sm:$0xf]
  %v891 = vld [vmem:[%s2 + $0xd0] sm:$0xf]
  %v892 = vld [vmem:[%s2 + $0xd4] sm:$0xf]
  %v893 = vpack.c.bf16 %v783, %v776
  %v894 = vpack.c.bf16 %v784, %v777
  %v895 = vpack.c.bf16 %v785, %v778
  %v896 = vpack.c.bf16 %v786, %v779
  %v897 = vpack.c.bf16 %v787, %v780
  %v898 = vpack.c.bf16 %v788, %v781
  %v899 = vpack.c.bf16 %v789, %v782
  %v900 = vpack.c.bf16 %v797, %v790
  %v901 = vpack.c.bf16 %v798, %v791
  %v902 = vpack.c.bf16 %v799, %v792
  %v903 = vpack.c.bf16 %v800, %v793
  %v904 = vpack.c.bf16 %v801, %v794
  %v905 = vpack.c.bf16 %v802, %v795
  %v906 = vpack.c.bf16 %v803, %v796
  %v907 = vpack.c.bf16 %v811, %v804
  %v908 = vpack.c.bf16 %v812, %v805
  %v909 = vpack.c.bf16 %v813, %v806
  %v910 = vpack.c.bf16 %v814, %v807
  %v911 = vpack.c.bf16 %v815, %v808
  %v912 = vpack.c.bf16 %v816, %v809
  %v913 = vpack.c.bf16 %v817, %v810
  %v914 = vpack.c.bf16 %v825, %v818
  %v915 = vpack.c.bf16 %v826, %v819
  %v916 = vpack.c.bf16 %v827, %v820
  %v917 = vpack.c.bf16 %v828, %v821
  %v918 = vpack.c.bf16 %v829, %v822
  %v919 = vpack.c.bf16 %v830, %v823
  %v920 = vpack.c.bf16 %v831, %v824
  %v921 = vpack.c.bf16 %v832, %v832
  %v922 = vpack.c.bf16 %v833, %v833
  %v923 = vpack.c.bf16 %v834, %v834
  %v924 = vpack.c.bf16 %v835, %v835
  %v925 = vpack.c.bf16 %v836, %v836
  %v926 = vpack.c.bf16 %v837, %v837
  %v927 = vpack.c.bf16 %v838, %v838
  %v982 = vunpack.c.l.b16 %v839
  %v983 = vunpack.c.l.b16 %v840
  %v984 = vunpack.c.l.b16 %v841
  %v985 = vunpack.c.l.b16 %v842
  %v986 = vunpack.c.l.b16 %v843
  %v987 = vunpack.c.l.b16 %v844
  %v988 = vunpack.c.l.b16 %v845
  %v989 = vunpack.c.l.b16 %v846
  %v990 = vunpack.c.l.b16 %v847
  %v991 = vunpack.c.l.b16 %v848
  %v992 = vunpack.c.l.b16 %v849
  %v993 = vunpack.c.l.b16 %v850
  %v994 = vunpack.c.l.b16 %v851
  %v995 = vunpack.c.l.b16 %v852
  %v996 = vunpack.c.l.b16 %v853
  %v997 = vunpack.c.l.b16 %v854
  %v998 = vunpack.c.l.b16 %v855
  %v999 = vunpack.c.l.b16 %v856
  %v1000 = vunpack.c.l.b16 %v857
  %v1001 = vunpack.c.l.b16 %v858
  %v1002 = vunpack.c.l.b16 %v859
  %v1003 = vunpack.c.l.b16 %v860
  %v1004 = vunpack.c.l.b16 %v861
  %v1005 = vunpack.c.l.b16 %v862
  %v1006 = vunpack.c.l.b16 %v863
  %v1007 = vunpack.c.l.b16 %v864
  %v1008 = vunpack.c.l.b16 %v865
  %v1009 = vunpack.c.l.b16 %v866
  %v1010 = vunpack.c.l.b16 %v867
  %v1011 = vunpack.c.l.b16 %v868
  %v1012 = vunpack.c.l.b16 %v869
  %v1013 = vunpack.c.l.b16 %v870
  %v1014 = vunpack.c.l.b16 %v871
  %v1015 = vunpack.c.l.b16 %v872
  %v1016 = vunpack.c.l.b16 %v873
  %v1017 = vunpack.c.l.b16 %v874
  %v1018 = vunpack.c.l.b16 %v875
  %v1019 = vunpack.c.l.b16 %v876
  %v1020 = vunpack.c.l.b16 %v877
  %v1021 = vunpack.c.l.b16 %v878
  %v1022 = vunpack.c.l.b16 %v879
  %v1023 = vunpack.c.l.b16 %v880
  %v1024 = vunpack.c.l.b16 %v881
  %v1025 = vunpack.c.l.b16 %v882
  %v1026 = vunpack.c.l.b16 %v883
  %v1027 = vunpack.c.l.b16 %v884
  %v1028 = vunpack.c.l.b16 %v885
  %v1029 = vunpack.c.l.b16 %v886
  %v1030 = vunpack.c.l.b16 %v887
  %v1031 = vunpack.c.l.b16 %v888
  %v1032 = vunpack.c.l.b16 %v889
  %v1033 = vunpack.c.l.b16 %v890
  %v1034 = vunpack.c.l.b16 %v891
  %v1035 = vunpack.c.l.b16 %v892
  %v1036 = vpack.c.b16 %v983, %v982
  %v1037 = vpack.c.b16 %v985, %v984
  %v1038 = vpack.c.b16 %v987, %v986
  %v1039 = vpack.c.b16 %v989, %v988
  %v1040 = vpack.c.b16 %v991, %v990
  %v1041 = vpack.c.b16 %v993, %v992
  %v1042 = vpack.c.b16 %v995, %v994
  %v1043 = vpack.c.b16 %v997, %v996
  %v1044 = vpack.c.b16 %v999, %v998
  %v1045 = vpack.c.b16 %v1001, %v1000
  %v1046 = vpack.c.b16 %v1003, %v1002
  %v1047 = vpack.c.b16 %v1005, %v1004
  %v1048 = vpack.c.b16 %v1007, %v1006
  %v1049 = vpack.c.b16 %v1009, %v1008
  %v1050 = vpack.c.b16 %v1011, %v1010
  %v1051 = vpack.c.b16 %v1013, %v1012
  %v1052 = vpack.c.b16 %v1015, %v1014
  %v1053 = vpack.c.b16 %v1017, %v1016
  %v1054 = vpack.c.b16 %v1019, %v1018
  %v1055 = vpack.c.b16 %v1021, %v1020
  %v1056 = vpack.c.b16 %v1023, %v1022
  %v1057 = vpack.c.b16 %v1025, %v1024
  %v1058 = vpack.c.b16 %v1027, %v1026
  %v1059 = vpack.c.b16 %v1029, %v1028
  %v1060 = vpack.c.b16 %v1031, %v1030
  %v1061 = vpack.c.b16 %v1033, %v1032
  %v1062 = vpack.c.b16 %v1035, %v1034
  %vm1063 = vcmask 588800
  %v1065 = vsel %vm1063, %v1036, 0
  %v1068 = vsel %vm1063, %v1037, 0
  %v1071 = vsel %vm1063, %v1038, 0
  %v1074 = vsel %vm1063, %v1039, 0
  %v1077 = vsel %vm1063, %v1040, 0
  %v1080 = vsel %vm1063, %v1041, 0
  %v1083 = vsel %vm1063, %v1042, 0
  %v1086 = vsel %vm1063, %v1043, 0
  %v1089 = vsel %vm1063, %v1044, 0
  %v1092 = vsel %vm1063, %v1045, 0
  %v1095 = vsel %vm1063, %v1046, 0
  %v1098 = vsel %vm1063, %v1047, 0
  %v1101 = vsel %vm1063, %v1048, 0
  %v1104 = vsel %vm1063, %v1049, 0
  %v1107 = vsel %vm1063, %v1050, 0
  %v1110 = vsel %vm1063, %v1051, 0
  %v1113 = vsel %vm1063, %v1052, 0
  %v1116 = vsel %vm1063, %v1053, 0
  %v1119 = vsel %vm1063, %v1054, 0
  %v1122 = vsel %vm1063, %v1055, 0
  %v1125 = vsel %vm1063, %v1056, 0
  %v1128 = vsel %vm1063, %v1057, 0
  %v1131 = vsel %vm1063, %v1058, 0
  %v1134 = vsel %vm1063, %v1059, 0
  %v1137 = vsel %vm1063, %v1060, 0
  %v1140 = vsel %vm1063, %v1061, 0
  %v1143 = vsel %vm1063, %v1062, 0
  %vm1145 = vcmask 1043456
  %v1147 = vsel %vm1145, %v921, 0
  %v1150 = vsel %vm1145, %v922, 0
  %v1153 = vsel %vm1145, %v923, 0
  %v1156 = vsel %vm1145, %v924, 0
  %v1159 = vsel %vm1145, %v925, 0
  %v1162 = vsel %vm1145, %v926, 0
  %v1165 = vsel %vm1145, %v927, 0
  %1167 = vmatprep.subr.bf16.mxu0 %v894
  %1168 = vmatpush1.bf16.msra.mxu0 %v893
  %1169 = vmatprep.subr.bf16.mxu0 %v901
  %1170 = vmatpush1.bf16.msra.mxu0 %v900
  %1171 = vmatprep.subr.bf16.mxu0 %v908
  %1172 = vmatpush1.bf16.msra.mxu0 %v907
  %1173 = vmatprep.subr.bf16.mxu0 %v915
  %1174 = vmatpush1.bf16.msra.mxu0 %v914
  %1175 = vmatprep.subr.bf16.mxu0 %v1150
  %1176 = vmatpush1.bf16.msra.mxu0 %v1147
  %1177 = vmatprep.subr.bf16.mxu0 0
  %1178 = vmatpush1.bf16.msra.mxu0 0
  %1179 = vmatprep.subr.bf16.mxu0 0
  %1180 = vmatpush1.bf16.msra.mxu0 0
  %1181 = vmatprep.subr.bf16.mxu0 0
  %1182 = vmatpush1.bf16.msra.mxu0 0
  %1183 = vmatprep.subr.bf16.mxu0 0
  %1184 = vmatpush1.bf16.msra.mxu0 0
  %1185 = vmatprep.subr.bf16.mxu0 0
  %1186 = vmatpush1.bf16.msra.mxu0 0
  %1187 = vmatprep.subr.bf16.mxu0 0
  %1188 = vmatpush1.bf16.msra.mxu0 0
  %1189 = vmatprep.subr.bf16.mxu0 0
  %1190 = vmatpush1.bf16.msra.mxu0 0
  %1191 = vmatprep.subr.bf16.mxu0 0
  %1192 = vmatpush1.bf16.msra.mxu0 0
  %1193 = vmatprep.subr.bf16.mxu0 0
  %1194 = vmatpush1.bf16.msra.mxu0 0
  %1195 = vmatprep.subr.bf16.mxu0 0
  %1196 = vmatpush1.bf16.msra.mxu0 0
  %1197 = vmatprep.subr.bf16.mxu0 0
  %1198 = vmatpush1.bf16.msra.mxu0 0
  %1199 = vmatprep.mubr.bf16.mxu0 0
  %1200 = vmatmul.mubr.bf16.gmra.mrb[0].mxu0 %v1065
  %v1201 = vpop.f32.mrb[0].mxu0
  %v1202 = vadd.f32 0.0, %v1201
  %v1203 = vpop.f32.mrb[0].mxu0
  %v1204 = vadd.f32 0.0, %v1203
  %v1205 = vpop.f32.mrb[0].mxu0
  %v1206 = vadd.f32 0.0, %v1205
  %v1207 = vpop.f32.mrb[0].mxu0
  %v1208 = vadd.f32 0.0, %v1207
  %1209 = vmatprep.mubr.bf16.mxu0 0
  %1210 = vmatmul.mubr.bf16.gmra.mrb[0].mxu0 %v1068
  %v1211 = vpop.f32.mrb[0].mxu0
  %v1212 = vadd.f32 0.0, %v1211
  %v1213 = vpop.f32.mrb[0].mxu0
  %v1214 = vadd.f32 0.0, %v1213
  %v1215 = vpop.f32.mrb[0].mxu0
  %v1216 = vadd.f32 0.0, %v1215
  %v1217 = vpop.f32.mrb[0].mxu0
  %v1218 = vadd.f32 0.0, %v1217
  %1219 = vmatprep.mubr.bf16.mxu0 0
  %1220 = vmatmul.mubr.bf16.gmra.mrb[0].mxu0 %v1071
  %v1221 = vpop.f32.mrb[0].mxu0
  %v1222 = vadd.f32 0.0, %v1221
  %v1223 = vpop.f32.mrb[0].mxu0
  %v1224 = vadd.f32 0.0, %v1223
  %v1225 = vpop.f32.mrb[0].mxu0
  %v1226 = vadd.f32 0.0, %v1225
  %v1227 = vpop.f32.mrb[0].mxu0
  %v1228 = vadd.f32 0.0, %v1227
  %1229 = vmatprep.mubr.bf16.mxu0 0
  %1230 = vmatmul.mubr.bf16.gmra.mrb[0].mxu0 %v1074
  %v1231 = vpop.f32.mrb[0].mxu0
  %v1232 = vadd.f32 0.0, %v1231
  %v1233 = vpop.f32.mrb[0].mxu0
  %v1234 = vadd.f32 0.0, %v1233
  %v1235 = vpop.f32.mrb[0].mxu0
  %v1236 = vadd.f32 0.0, %v1235
  %v1237 = vpop.f32.mrb[0].mxu0
  %v1238 = vadd.f32 0.0, %v1237
  %1239 = vmatprep.mubr.bf16.mxu0 0
  %1240 = vmatmul.mubr.bf16.gmra.mrb[0].mxu0 %v1077
  %v1241 = vpop.f32.mrb[0].mxu0
  %v1242 = vadd.f32 0.0, %v1241
  %v1243 = vpop.f32.mrb[0].mxu0
  %v1244 = vadd.f32 0.0, %v1243
  %v1245 = vpop.f32.mrb[0].mxu0
  %v1246 = vadd.f32 0.0, %v1245
  %v1247 = vpop.f32.mrb[0].mxu0
  %v1248 = vadd.f32 0.0, %v1247
  %1249 = vmatprep.mubr.bf16.mxu0 0
  %1250 = vmatmul.mubr.bf16.gmra.mrb[0].mxu0 %v1080
  %v1251 = vpop.f32.mrb[0].mxu0
  %v1252 = vadd.f32 0.0, %v1251
  %v1253 = vpop.f32.mrb[0].mxu0
  %v1254 = vadd.f32 0.0, %v1253
  %v1255 = vpop.f32.mrb[0].mxu0
  %v1256 = vadd.f32 0.0, %v1255
  %v1257 = vpop.f32.mrb[0].mxu0
  %v1258 = vadd.f32 0.0, %v1257
  %1259 = vmatprep.mubr.bf16.mxu0 0
  %1260 = vmatmul.mubr.bf16.gmra.mrb[0].mxu0 %v1083
  %v1261 = vpop.f32.mrb[0].mxu0
  %v1262 = vadd.f32 0.0, %v1261
  %v1263 = vpop.f32.mrb[0].mxu0
  %v1264 = vadd.f32 0.0, %v1263
  %v1265 = vpop.f32.mrb[0].mxu0
  %v1266 = vadd.f32 0.0, %v1265
  %v1267 = vpop.f32.mrb[0].mxu0
  %v1268 = vadd.f32 0.0, %v1267
  %1269 = vmatprep.mubr.bf16.mxu0 0
  %1270 = vmatmul.mubr.bf16.gmra.mrb[0].mxu0 %v1086
  %v1271 = vpop.f32.mrb[0].mxu0
  %v1272 = vadd.f32 0.0, %v1271
  %v1273 = vpop.f32.mrb[0].mxu0
  %v1274 = vadd.f32 0.0, %v1273
  %v1275 = vpop.f32.mrb[0].mxu0
  %v1276 = vadd.f32 0.0, %v1275
  %v1277 = vpop.f32.mrb[0].mxu0
  %v1278 = vadd.f32 0.0, %v1277
  %1279 = vmatprep.mubr.bf16.mxu0 0
  %1280 = vmatmul.mubr.bf16.gmra.mrb[0].mxu0 %v1089
  %v1281 = vpop.f32.mrb[0].mxu0
  %v1282 = vadd.f32 0.0, %v1281
  %v1283 = vpop.f32.mrb[0].mxu0
  %v1284 = vadd.f32 0.0, %v1283
  %v1285 = vpop.f32.mrb[0].mxu0
  %v1286 = vadd.f32 0.0, %v1285
  %v1287 = vpop.f32.mrb[0].mxu0
  %v1288 = vadd.f32 0.0, %v1287
  %1289 = vmatprep.mubr.bf16.mxu0 0
  %1290 = vmatmul.mubr.bf16.gmra.mrb[0].mxu0 %v1092
  %v1291 = vpop.f32.mrb[0].mxu0
  %v1292 = vadd.f32 0.0, %v1291
  %v1293 = vpop.f32.mrb[0].mxu0
  %v1294 = vadd.f32 0.0, %v1293
  %v1295 = vpop.f32.mrb[0].mxu0
  %v1296 = vadd.f32 0.0, %v1295
  %v1297 = vpop.f32.mrb[0].mxu0
  %v1298 = vadd.f32 0.0, %v1297
  %1299 = vmatprep.mubr.bf16.mxu0 0
  %1300 = vmatmul.mubr.bf16.gmra.mrb[0].mxu0 %v1095
  %v1301 = vpop.f32.mrb[0].mxu0
  %v1302 = vadd.f32 0.0, %v1301
  %v1303 = vpop.f32.mrb[0].mxu0
  %v1304 = vadd.f32 0.0, %v1303
  %v1305 = vpop.f32.mrb[0].mxu0
  %v1306 = vadd.f32 0.0, %v1305
  %v1307 = vpop.f32.mrb[0].mxu0
  %v1308 = vadd.f32 0.0, %v1307
  %1309 = vmatprep.mubr.bf16.mxu0 0
  %1310 = vmatmul.mubr.bf16.gmra.mrb[0].mxu0 %v1098
  %v1311 = vpop.f32.mrb[0].mxu0
  %v1312 = vadd.f32 0.0, %v1311
  %v1313 = vpop.f32.mrb[0].mxu0
  %v1314 = vadd.f32 0.0, %v1313
  %v1315 = vpop.f32.mrb[0].mxu0
  %v1316 = vadd.f32 0.0, %v1315
  %v1317 = vpop.f32.mrb[0].mxu0
  %v1318 = vadd.f32 0.0, %v1317
  %1319 = vmatprep.mubr.bf16.mxu0 0
  %1320 = vmatmul.mubr.bf16.gmra.mrb[0].mxu0 %v1101
  %v1321 = vpop.f32.mrb[0].mxu0
  %v1322 = vadd.f32 0.0, %v1321
  %v1323 = vpop.f32.mrb[0].mxu0
  %v1324 = vadd.f32 0.0, %v1323
  %v1325 = vpop.f32.mrb[0].mxu0
  %v1326 = vadd.f32 0.0, %v1325
  %v1327 = vpop.f32.mrb[0].mxu0
  %v1328 = vadd.f32 0.0, %v1327
  %1329 = vmatprep.mubr.bf16.mxu0 0
  %1330 = vmatmul.mubr.bf16.gmra.mrb[0].mxu0 %v1104
  %v1331 = vpop.f32.mrb[0].mxu0
  %v1332 = vadd.f32 0.0, %v1331
  %v1333 = vpop.f32.mrb[0].mxu0
  %v1334 = vadd.f32 0.0, %v1333
  %v1335 = vpop.f32.mrb[0].mxu0
  %v1336 = vadd.f32 0.0, %v1335
  %v1337 = vpop.f32.mrb[0].mxu0
  %v1338 = vadd.f32 0.0, %v1337
  %1339 = vmatprep.mubr.bf16.mxu0 0
  %1340 = vmatmul.mubr.bf16.gmra.mrb[0].mxu0 %v1107
  %v1341 = vpop.f32.mrb[0].mxu0
  %v1342 = vadd.f32 0.0, %v1341
  %v1343 = vpop.f32.mrb[0].mxu0
  %v1344 = vadd.f32 0.0, %v1343
  %v1345 = vpop.f32.mrb[0].mxu0
  %v1346 = vadd.f32 0.0, %v1345
  %v1347 = vpop.f32.mrb[0].mxu0
  %v1348 = vadd.f32 0.0, %v1347
  %1349 = vmatprep.mubr.bf16.mxu0 0
  %1350 = vmatmul.mubr.bf16.gmra.mrb[0].mxu0 %v1110
  %v1351 = vpop.f32.mrb[0].mxu0
  %v1352 = vadd.f32 0.0, %v1351
  %v1353 = vpop.f32.mrb[0].mxu0
  %v1354 = vadd.f32 0.0, %v1353
  %v1355 = vpop.f32.mrb[0].mxu0
  %v1356 = vadd.f32 0.0, %v1355
  %v1357 = vpop.f32.mrb[0].mxu0
  %v1358 = vadd.f32 0.0, %v1357
  %1359 = vmatprep.mubr.bf16.mxu0 0
  %1360 = vmatmul.mubr.bf16.gmra.mrb[0].mxu0 %v1113
  %v1361 = vpop.f32.mrb[0].mxu0
  %v1362 = vadd.f32 0.0, %v1361
  %v1363 = vpop.f32.mrb[0].mxu0
  %v1364 = vadd.f32 0.0, %v1363
  %v1365 = vpop.f32.mrb[0].mxu0
  %v1366 = vadd.f32 0.0, %v1365
  %v1367 = vpop.f32.mrb[0].mxu0
  %v1368 = vadd.f32 0.0, %v1367
  %1369 = vmatprep.mubr.bf16.mxu0 0
  %1370 = vmatmul.mubr.bf16.gmra.mrb[0].mxu0 %v1116
  %v1371 = vpop.f32.mrb[0].mxu0
  %v1372 = vadd.f32 0.0, %v1371
  %v1373 = vpop.f32.mrb[0].mxu0
  %v1374 = vadd.f32 0.0, %v1373
  %v1375 = vpop.f32.mrb[0].mxu0
  %v1376 = vadd.f32 0.0, %v1375
  %v1377 = vpop.f32.mrb[0].mxu0
  %v1378 = vadd.f32 0.0, %v1377
  %1379 = vmatprep.mubr.bf16.mxu0 0
  %1380 = vmatmul.mubr.bf16.gmra.mrb[0].mxu0 %v1119
  %v1381 = vpop.f32.mrb[0].mxu0
  %v1382 = vadd.f32 0.0, %v1381
  %v1383 = vpop.f32.mrb[0].mxu0
  %v1384 = vadd.f32 0.0, %v1383
  %v1385 = vpop.f32.mrb[0].mxu0
  %v1386 = vadd.f32 0.0, %v1385
  %v1387 = vpop.f32.mrb[0].mxu0
  %v1388 = vadd.f32 0.0, %v1387
  %1389 = vmatprep.mubr.bf16.mxu0 0
  %1390 = vmatmul.mubr.bf16.gmra.mrb[0].mxu0 %v1122
  %v1391 = vpop.f32.mrb[0].mxu0
  %v1392 = vadd.f32 0.0, %v1391
  %v1393 = vpop.f32.mrb[0].mxu0
  %v1394 = vadd.f32 0.0, %v1393
  %v1395 = vpop.f32.mrb[0].mxu0
  %v1396 = vadd.f32 0.0, %v1395
  %v1397 = vpop.f32.mrb[0].mxu0
  %v1398 = vadd.f32 0.0, %v1397
  %1399 = vmatprep.mubr.bf16.mxu0 0
  %1400 = vmatmul.mubr.bf16.gmra.mrb[0].mxu0 %v1125
  %v1401 = vpop.f32.mrb[0].mxu0
  %v1402 = vadd.f32 0.0, %v1401
  %v1403 = vpop.f32.mrb[0].mxu0
  %v1404 = vadd.f32 0.0, %v1403
  %v1405 = vpop.f32.mrb[0].mxu0
  %v1406 = vadd.f32 0.0, %v1405
  %v1407 = vpop.f32.mrb[0].mxu0
  %v1408 = vadd.f32 0.0, %v1407
  %1409 = vmatprep.mubr.bf16.mxu0 0
  %1410 = vmatmul.mubr.bf16.gmra.mrb[0].mxu0 %v1128
  %v1411 = vpop.f32.mrb[0].mxu0
  %v1412 = vadd.f32 0.0, %v1411
  %v1413 = vpop.f32.mrb[0].mxu0
  %v1414 = vadd.f32 0.0, %v1413
  %v1415 = vpop.f32.mrb[0].mxu0
  %v1416 = vadd.f32 0.0, %v1415
  %v1417 = vpop.f32.mrb[0].mxu0
  %v1418 = vadd.f32 0.0, %v1417
  %1419 = vmatprep.mubr.bf16.mxu0 0
  %1420 = vmatmul.mubr.bf16.gmra.mrb[0].mxu0 %v1131
  %v1421 = vpop.f32.mrb[0].mxu0
  %v1422 = vadd.f32 0.0, %v1421
  %v1423 = vpop.f32.mrb[0].mxu0
  %v1424 = vadd.f32 0.0, %v1423
  %v1425 = vpop.f32.mrb[0].mxu0
  %v1426 = vadd.f32 0.0, %v1425
  %v1427 = vpop.f32.mrb[0].mxu0
  %v1428 = vadd.f32 0.0, %v1427
  %1429 = vmatprep.mubr.bf16.mxu0 0
  %1430 = vmatmul.mubr.bf16.gmra.mrb[0].mxu0 %v1134
  %v1431 = vpop.f32.mrb[0].mxu0
  %v1432 = vadd.f32 0.0, %v1431
  %v1433 = vpop.f32.mrb[0].mxu0
  %v1434 = vadd.f32 0.0, %v1433
  %v1435 = vpop.f32.mrb[0].mxu0
  %v1436 = vadd.f32 0.0, %v1435
  %v1437 = vpop.f32.mrb[0].mxu0
  %v1438 = vadd.f32 0.0, %v1437
  %1439 = vmatprep.mubr.bf16.mxu0 0
  %1440 = vmatmul.mubr.bf16.gmra.mrb[0].mxu0 %v1137
  %v1441 = vpop.f32.mrb[0].mxu0
  %v1442 = vadd.f32 0.0, %v1441
  %v1443 = vpop.f32.mrb[0].mxu0
  %v1444 = vadd.f32 0.0, %v1443
  %v1445 = vpop.f32.mrb[0].mxu0
  %v1446 = vadd.f32 0.0, %v1445
  %v1447 = vpop.f32.mrb[0].mxu0
  %v1448 = vadd.f32 0.0, %v1447
  %1449 = vmatprep.mubr.bf16.mxu0 0
  %1450 = vmatmul.mubr.bf16.gmra.mrb[0].mxu0 %v1140
  %v1451 = vpop.f32.mrb[0].mxu0
  %v1452 = vadd.f32 0.0, %v1451
  %v1453 = vpop.f32.mrb[0].mxu0
  %v1454 = vadd.f32 0.0, %v1453
  %v1455 = vpop.f32.mrb[0].mxu0
  %v1456 = vadd.f32 0.0, %v1455
  %v1457 = vpop.f32.mrb[0].mxu0
  %v1458 = vadd.f32 0.0, %v1457
  %1459 = vmatprep.mubr.bf16.mxu0 0
  %1460 = vmatmul.mubr.bf16.gmra.mrb[0].mxu0 %v1143
  %v1461 = vpop.f32.mrb[0].mxu0
  %v1462 = vadd.f32 0.0, %v1461
  %v1463 = vpop.f32.mrb[0].mxu0
  %v1464 = vadd.f32 0.0, %v1463
  %v1465 = vpop.f32.mrb[0].mxu0
  %v1466 = vadd.f32 0.0, %v1465
  %v1467 = vpop.f32.mrb[0].mxu0
  %v1468 = vadd.f32 0.0, %v1467
  %1469 = vdwg.mxu0
  %1470 = vmatprep.subr.bf16.mxu0 %v896
  %1471 = vmatpush1.bf16.msra.mxu0 %v895
  %1472 = vmatprep.subr.bf16.mxu0 %v903
  %1473 = vmatpush1.bf16.msra.mxu0 %v902
  %1474 = vmatprep.subr.bf16.mxu0 %v910
  %1475 = vmatpush1.bf16.msra.mxu0 %v909
  %1476 = vmatprep.subr.bf16.mxu0 %v917
  %1477 = vmatpush1.bf16.msra.mxu0 %v916
  %1478 = vmatprep.subr.bf16.mxu0 %v1156
  %1479 = vmatpush1.bf16.msra.mxu0 %v1153
  %1480 = vmatprep.subr.bf16.mxu0 0
  %1481 = vmatpush1.bf16.msra.mxu0 0
  %1482 = vmatprep.subr.bf16.mxu0 0
  %1483 = vmatpush1.bf16.msra.mxu0 0
  %1484 = vmatprep.subr.bf16.mxu0 0
  %1485 = vmatpush1.bf16.msra.mxu0 0
  %1486 = vmatprep.subr.bf16.mxu0 0
  %1487 = vmatpush1.bf16.msra.mxu0 0
  %1488 = vmatprep.subr.bf16.mxu0 0
  %1489 = vmatpush1.bf16.msra.mxu0 0
  %1490 = vmatprep.subr.bf16.mxu0 0
  %1491 = vmatpush1.bf16.msra.mxu0 0
  %1492 = vmatprep.subr.bf16.mxu0 0
  %1493 = vmatpush1.bf16.msra.mxu0 0
  %1494 = vmatprep.subr.bf16.mxu0 0
  %1495 = vmatpush1.bf16.msra.mxu0 0
  %1496 = vmatprep.subr.bf16.mxu0 0
  %1497 = vmatpush1.bf16.msra.mxu0 0
  %1498 = vmatprep.subr.bf16.mxu0 0
  %1499 = vmatpush1.bf16.msra.mxu0 0
  %1500 = vmatprep.subr.bf16.mxu0 0
  %1501 = vmatpush1.bf16.msra.mxu0 0
  %1502 = vmatprep.mubr.bf16.mxu0 0
  %1503 = vmatmul.mubr.bf16.gmra.mrb[0].mxu0 %v1065
  %v1504 = vpop.f32.mrb[0].mxu0
  %v1505 = vadd.f32 0.0, %v1504
  %v1506 = vpop.f32.mrb[0].mxu0
  %v1507 = vadd.f32 0.0, %v1506
  %v1508 = vpop.f32.mrb[0].mxu0
  %v1509 = vadd.f32 0.0, %v1508
  %v1510 = vpop.f32.mrb[0].mxu0
  %v1511 = vadd.f32 0.0, %v1510
  %1512 = vmatprep.mubr.bf16.mxu0 0
  %1513 = vmatmul.mubr.bf16.gmra.mrb[0].mxu0 %v1068
  %v1514 = vpop.f32.mrb[0].mxu0
  %v1515 = vadd.f32 0.0, %v1514
  %v1516 = vpop.f32.mrb[0].mxu0
  %v1517 = vadd.f32 0.0, %v1516
  %v1518 = vpop.f32.mrb[0].mxu0
  %v1519 = vadd.f32 0.0, %v1518
  %v1520 = vpop.f32.mrb[0].mxu0
  %v1521 = vadd.f32 0.0, %v1520
  %1522 = vmatprep.mubr.bf16.mxu0 0
  %1523 = vmatmul.mubr.bf16.gmra.mrb[0].mxu0 %v1071
  %v1524 = vpop.f32.mrb[0].mxu0
  %v1525 = vadd.f32 0.0, %v1524
  %v1526 = vpop.f32.mrb[0].mxu0
  %v1527 = vadd.f32 0.0, %v1526
  %v1528 = vpop.f32.mrb[0].mxu0
  %v1529 = vadd.f32 0.0, %v1528
  %v1530 = vpop.f32.mrb[0].mxu0
  %v1531 = vadd.f32 0.0, %v1530
  %1532 = vmatprep.mubr.bf16.mxu0 0
  %1533 = vmatmul.mubr.bf16.gmra.mrb[0].mxu0 %v1074
  %v1534 = vpop.f32.mrb[0].mxu0
  %v1535 = vadd.f32 0.0, %v1534
  %v1536 = vpop.f32.mrb[0].mxu0
  %v1537 = vadd.f32 0.0, %v1536
  %v1538 = vpop.f32.mrb[0].mxu0
  %v1539 = vadd.f32 0.0, %v1538
  %v1540 = vpop.f32.mrb[0].mxu0
  %v1541 = vadd.f32 0.0, %v1540
  %1542 = vmatprep.mubr.bf16.mxu0 0
  %1543 = vmatmul.mubr.bf16.gmra.mrb[0].mxu0 %v1077
  %v1544 = vpop.f32.mrb[0].mxu0
  %v1545 = vadd.f32 0.0, %v1544
  %v1546 = vpop.f32.mrb[0].mxu0
  %v1547 = vadd.f32 0.0, %v1546
  %v1548 = vpop.f32.mrb[0].mxu0
  %v1549 = vadd.f32 0.0, %v1548
  %v1550 = vpop.f32.mrb[0].mxu0
  %v1551 = vadd.f32 0.0, %v1550
  %1552 = vmatprep.mubr.bf16.mxu0 0
  %1553 = vmatmul.mubr.bf16.gmra.mrb[0].mxu0 %v1080
  %v1554 = vpop.f32.mrb[0].mxu0
  %v1555 = vadd.f32 0.0, %v1554
  %v1556 = vpop.f32.mrb[0].mxu0
  %v1557 = vadd.f32 0.0, %v1556
  %v1558 = vpop.f32.mrb[0].mxu0
  %v1559 = vadd.f32 0.0, %v1558
  %v1560 = vpop.f32.mrb[0].mxu0
  %v1561 = vadd.f32 0.0, %v1560
  %1562 = vmatprep.mubr.bf16.mxu0 0
  %1563 = vmatmul.mubr.bf16.gmra.mrb[0].mxu0 %v1083
  %v1564 = vpop.f32.mrb[0].mxu0
  %v1565 = vadd.f32 0.0, %v1564
  %v1566 = vpop.f32.mrb[0].mxu0
  %v1567 = vadd.f32 0.0, %v1566
  %v1568 = vpop.f32.mrb[0].mxu0
  %v1569 = vadd.f32 0.0, %v1568
  %v1570 = vpop.f32.mrb[0].mxu0
  %v1571 = vadd.f32 0.0, %v1570
  %1572 = vmatprep.mubr.bf16.mxu0 0
  %1573 = vmatmul.mubr.bf16.gmra.mrb[0].mxu0 %v1086
  %v1574 = vpop.f32.mrb[0].mxu0
  %v1575 = vadd.f32 0.0, %v1574
  %v1576 = vpop.f32.mrb[0].mxu0
  %v1577 = vadd.f32 0.0, %v1576
  %v1578 = vpop.f32.mrb[0].mxu0
  %v1579 = vadd.f32 0.0, %v1578
  %v1580 = vpop.f32.mrb[0].mxu0
  %v1581 = vadd.f32 0.0, %v1580
  %1582 = vmatprep.mubr.bf16.mxu0 0
  %1583 = vmatmul.mubr.bf16.gmra.mrb[0].mxu0 %v1089
  %v1584 = vpop.f32.mrb[0].mxu0
  %v1585 = vadd.f32 0.0, %v1584
  %v1586 = vpop.f32.mrb[0].mxu0
  %v1587 = vadd.f32 0.0, %v1586
  %v1588 = vpop.f32.mrb[0].mxu0
  %v1589 = vadd.f32 0.0, %v1588
  %v1590 = vpop.f32.mrb[0].mxu0
  %v1591 = vadd.f32 0.0, %v1590
  %1592 = vmatprep.mubr.bf16.mxu0 0
  %1593 = vmatmul.mubr.bf16.gmra.mrb[0].mxu0 %v1092
  %v1594 = vpop.f32.mrb[0].mxu0
  %v1595 = vadd.f32 0.0, %v1594
  %v1596 = vpop.f32.mrb[0].mxu0
  %v1597 = vadd.f32 0.0, %v1596
  %v1598 = vpop.f32.mrb[0].mxu0
  %v1599 = vadd.f32 0.0, %v1598
  %v1600 = vpop.f32.mrb[0].mxu0
  %v1601 = vadd.f32 0.0, %v1600
  %1602 = vmatprep.mubr.bf16.mxu0 0
  %1603 = vmatmul.mubr.bf16.gmra.mrb[0].mxu0 %v1095
  %v1604 = vpop.f32.mrb[0].mxu0
  %v1605 = vadd.f32 0.0, %v1604
  %v1606 = vpop.f32.mrb[0].mxu0
  %v1607 = vadd.f32 0.0, %v1606
  %v1608 = vpop.f32.mrb[0].mxu0
  %v1609 = vadd.f32 0.0, %v1608
  %v1610 = vpop.f32.mrb[0].mxu0
  %v1611 = vadd.f32 0.0, %v1610
  %1612 = vmatprep.mubr.bf16.mxu0 0
  %1613 = vmatmul.mubr.bf16.gmra.mrb[0].mxu0 %v1098
  %v1614 = vpop.f32.mrb[0].mxu0
  %v1615 = vadd.f32 0.0, %v1614
  %v1616 = vpop.f32.mrb[0].mxu0
  %v1617 = vadd.f32 0.0, %v1616
  %v1618 = vpop.f32.mrb[0].mxu0
  %v1619 = vadd.f32 0.0, %v1618
  %v1620 = vpop.f32.mrb[0].mxu0
  %v1621 = vadd.f32 0.0, %v1620
  %1622 = vmatprep.mubr.bf16.mxu0 0
  %1623 = vmatmul.mubr.bf16.gmra.mrb[0].mxu0 %v1101
  %v1624 = vpop.f32.mrb[0].mxu0
  %v1625 = vadd.f32 0.0, %v1624
  %v1626 = vpop.f32.mrb[0].mxu0
  %v1627 = vadd.f32 0.0, %v1626
  %v1628 = vpop.f32.mrb[0].mxu0
  %v1629 = vadd.f32 0.0, %v1628
  %v1630 = vpop.f32.mrb[0].mxu0
  %v1631 = vadd.f32 0.0, %v1630
  %1632 = vmatprep.mubr.bf16.mxu0 0
  %1633 = vmatmul.mubr.bf16.gmra.mrb[0].mxu0 %v1104
  %v1634 = vpop.f32.mrb[0].mxu0
  %v1635 = vadd.f32 0.0, %v1634
  %v1636 = vpop.f32.mrb[0].mxu0
  %v1637 = vadd.f32 0.0, %v1636
  %v1638 = vpop.f32.mrb[0].mxu0
  %v1639 = vadd.f32 0.0, %v1638
  %v1640 = vpop.f32.mrb[0].mxu0
  %v1641 = vadd.f32 0.0, %v1640
  %1642 = vmatprep.mubr.bf16.mxu0 0
  %1643 = vmatmul.mubr.bf16.gmra.mrb[0].mxu0 %v1107
  %v1644 = vpop.f32.mrb[0].mxu0
  %v1645 = vadd.f32 0.0, %v1644
  %v1646 = vpop.f32.mrb[0].mxu0
  %v1647 = vadd.f32 0.0, %v1646
  %v1648 = vpop.f32.mrb[0].mxu0
  %v1649 = vadd.f32 0.0, %v1648
  %v1650 = vpop.f32.mrb[0].mxu0
  %v1651 = vadd.f32 0.0, %v1650
  %1652 = vmatprep.mubr.bf16.mxu0 0
  %1653 = vmatmul.mubr.bf16.gmra.mrb[0].mxu0 %v1110
  %v1654 = vpop.f32.mrb[0].mxu0
  %v1655 = vadd.f32 0.0, %v1654
  %v1656 = vpop.f32.mrb[0].mxu0
  %v1657 = vadd.f32 0.0, %v1656
  %v1658 = vpop.f32.mrb[0].mxu0
  %v1659 = vadd.f32 0.0, %v1658
  %v1660 = vpop.f32.mrb[0].mxu0
  %v1661 = vadd.f32 0.0, %v1660
  %1662 = vmatprep.mubr.bf16.mxu0 0
  %1663 = vmatmul.mubr.bf16.gmra.mrb[0].mxu0 %v1113
  %v1664 = vpop.f32.mrb[0].mxu0
  %v1665 = vadd.f32 0.0, %v1664
  %v1666 = vpop.f32.mrb[0].mxu0
  %v1667 = vadd.f32 0.0, %v1666
  %v1668 = vpop.f32.mrb[0].mxu0
  %v1669 = vadd.f32 0.0, %v1668
  %v1670 = vpop.f32.mrb[0].mxu0
  %v1671 = vadd.f32 0.0, %v1670
  %1672 = vmatprep.mubr.bf16.mxu0 0
  %1673 = vmatmul.mubr.bf16.gmra.mrb[0].mxu0 %v1116
  %v1674 = vpop.f32.mrb[0].mxu0
  %v1675 = vadd.f32 0.0, %v1674
  %v1676 = vpop.f32.mrb[0].mxu0
  %v1677 = vadd.f32 0.0, %v1676
  %v1678 = vpop.f32.mrb[0].mxu0
  %v1679 = vadd.f32 0.0, %v1678
  %v1680 = vpop.f32.mrb[0].mxu0
  %v1681 = vadd.f32 0.0, %v1680
  %1682 = vmatprep.mubr.bf16.mxu0 0
  %1683 = vmatmul.mubr.bf16.gmra.mrb[0].mxu0 %v1119
  %v1684 = vpop.f32.mrb[0].mxu0
  %v1685 = vadd.f32 0.0, %v1684
  %v1686 = vpop.f32.mrb[0].mxu0
  %v1687 = vadd.f32 0.0, %v1686
  %v1688 = vpop.f32.mrb[0].mxu0
  %v1689 = vadd.f32 0.0, %v1688
  %v1690 = vpop.f32.mrb[0].mxu0
  %v1691 = vadd.f32 0.0, %v1690
  %1692 = vmatprep.mubr.bf16.mxu0 0
  %1693 = vmatmul.mubr.bf16.gmra.mrb[0].mxu0 %v1122
  %v1694 = vpop.f32.mrb[0].mxu0
  %v1695 = vadd.f32 0.0, %v1694
  %v1696 = vpop.f32.mrb[0].mxu0
  %v1697 = vadd.f32 0.0, %v1696
  %v1698 = vpop.f32.mrb[0].mxu0
  %v1699 = vadd.f32 0.0, %v1698
  %v1700 = vpop.f32.mrb[0].mxu0
  %v1701 = vadd.f32 0.0, %v1700
  %1702 = vmatprep.mubr.bf16.mxu0 0
  %1703 = vmatmul.mubr.bf16.gmra.mrb[0].mxu0 %v1125
  %v1704 = vpop.f32.mrb[0].mxu0
  %v1705 = vadd.f32 0.0, %v1704
  %v1706 = vpop.f32.mrb[0].mxu0
  %v1707 = vadd.f32 0.0, %v1706
  %v1708 = vpop.f32.mrb[0].mxu0
  %v1709 = vadd.f32 0.0, %v1708
  %v1710 = vpop.f32.mrb[0].mxu0
  %v1711 = vadd.f32 0.0, %v1710
  %1712 = vmatprep.mubr.bf16.mxu0 0
  %1713 = vmatmul.mubr.bf16.gmra.mrb[0].mxu0 %v1128
  %v1714 = vpop.f32.mrb[0].mxu0
  %v1715 = vadd.f32 0.0, %v1714
  %v1716 = vpop.f32.mrb[0].mxu0
  %v1717 = vadd.f32 0.0, %v1716
  %v1718 = vpop.f32.mrb[0].mxu0
  %v1719 = vadd.f32 0.0, %v1718
  %v1720 = vpop.f32.mrb[0].mxu0
  %v1721 = vadd.f32 0.0, %v1720
  %1722 = vmatprep.mubr.bf16.mxu0 0
  %1723 = vmatmul.mubr.bf16.gmra.mrb[0].mxu0 %v1131
  %v1724 = vpop.f32.mrb[0].mxu0
  %v1725 = vadd.f32 0.0, %v1724
  %v1726 = vpop.f32.mrb[0].mxu0
  %v1727 = vadd.f32 0.0, %v1726
  %v1728 = vpop.f32.mrb[0].mxu0
  %v1729 = vadd.f32 0.0, %v1728
  %v1730 = vpop.f32.mrb[0].mxu0
  %v1731 = vadd.f32 0.0, %v1730
  %1732 = vmatprep.mubr.bf16.mxu0 0
  %1733 = vmatmul.mubr.bf16.gmra.mrb[0].mxu0 %v1134
  %v1734 = vpop.f32.mrb[0].mxu0
  %v1735 = vadd.f32 0.0, %v1734
  %v1736 = vpop.f32.mrb[0].mxu0
  %v1737 = vadd.f32 0.0, %v1736
  %v1738 = vpop.f32.mrb[0].mxu0
  %v1739 = vadd.f32 0.0, %v1738
  %v1740 = vpop.f32.mrb[0].mxu0
  %v1741 = vadd.f32 0.0, %v1740
  %1742 = vmatprep.mubr.bf16.mxu0 0
  %1743 = vmatmul.mubr.bf16.gmra.mrb[0].mxu0 %v1137
  %v1744 = vpop.f32.mrb[0].mxu0
  %v1745 = vadd.f32 0.0, %v1744
  %v1746 = vpop.f32.mrb[0].mxu0
  %v1747 = vadd.f32 0.0, %v1746
  %v1748 = vpop.f32.mrb[0].mxu0
  %v1749 = vadd.f32 0.0, %v1748
  %v1750 = vpop.f32.mrb[0].mxu0
  %v1751 = vadd.f32 0.0, %v1750
  %1752 = vmatprep.mubr.bf16.mxu0 0
  %1753 = vmatmul.mubr.bf16.gmra.mrb[0].mxu0 %v1140
  %v1754 = vpop.f32.mrb[0].mxu0
  %v1755 = vadd.f32 0.0, %v1754
  %v1756 = vpop.f32.mrb[0].mxu0
  %v1757 = vadd.f32 0.0, %v1756
  %v1758 = vpop.f32.mrb[0].mxu0
  %v1759 = vadd.f32 0.0, %v1758
  %v1760 = vpop.f32.mrb[0].mxu0
  %v1761 = vadd.f32 0.0, %v1760
  %1762 = vmatprep.mubr.bf16.mxu0 0
  %1763 = vmatmul.mubr.bf16.gmra.mrb[0].mxu0 %v1143
  %v1764 = vpop.f32.mrb[0].mxu0
  %v1765 = vadd.f32 0.0, %v1764
  %v1766 = vpop.f32.mrb[0].mxu0
  %v1767 = vadd.f32 0.0, %v1766
  %v1768 = vpop.f32.mrb[0].mxu0
  %v1769 = vadd.f32 0.0, %v1768
  %v1770 = vpop.f32.mrb[0].mxu0
  %v1771 = vadd.f32 0.0, %v1770
  %1772 = vdwg.mxu0
  %1773 = vmatprep.subr.bf16.mxu0 %v898
  %1774 = vmatpush1.bf16.msra.mxu0 %v897
  %1775 = vmatprep.subr.bf16.mxu0 %v905
  %1776 = vmatpush1.bf16.msra.mxu0 %v904
  %1777 = vmatprep.subr.bf16.mxu0 %v912
  %1778 = vmatpush1.bf16.msra.mxu0 %v911
  %1779 = vmatprep.subr.bf16.mxu0 %v919
  %1780 = vmatpush1.bf16.msra.mxu0 %v918
  %1781 = vmatprep.subr.bf16.mxu0 %v1162
  %1782 = vmatpush1.bf16.msra.mxu0 %v1159
  %1783 = vmatprep.subr.bf16.mxu0 0
  %1784 = vmatpush1.bf16.msra.mxu0 0
  %1785 = vmatprep.subr.bf16.mxu0 0
  %1786 = vmatpush1.bf16.msra.mxu0 0
  %1787 = vmatprep.subr.bf16.mxu0 0
  %1788 = vmatpush1.bf16.msra.mxu0 0
  %1789 = vmatprep.subr.bf16.mxu0 0
  %1790 = vmatpush1.bf16.msra.mxu0 0
  %1791 = vmatprep.subr.bf16.mxu0 0
  %1792 = vmatpush1.bf16.msra.mxu0 0
  %1793 = vmatprep.subr.bf16.mxu0 0
  %1794 = vmatpush1.bf16.msra.mxu0 0
  %1795 = vmatprep.subr.bf16.mxu0 0
  %1796 = vmatpush1.bf16.msra.mxu0 0
  %1797 = vmatprep.subr.bf16.mxu0 0
  %1798 = vmatpush1.bf16.msra.mxu0 0
  %1799 = vmatprep.subr.bf16.mxu0 0
  %1800 = vmatpush1.bf16.msra.mxu0 0
  %1801 = vmatprep.subr.bf16.mxu0 0
  %1802 = vmatpush1.bf16.msra.mxu0 0
  %1803 = vmatprep.subr.bf16.mxu0 0
  %1804 = vmatpush1.bf16.msra.mxu0 0
  %1805 = vmatprep.mubr.bf16.mxu0 0
  %1806 = vmatmul.mubr.bf16.gmra.mrb[0].mxu0 %v1065
  %v1807 = vpop.f32.mrb[0].mxu0
  %v1808 = vadd.f32 0.0, %v1807
  %v1809 = vpop.f32.mrb[0].mxu0
  %v1810 = vadd.f32 0.0, %v1809
  %v1811 = vpop.f32.mrb[0].mxu0
  %v1812 = vadd.f32 0.0, %v1811
  %v1813 = vpop.f32.mrb[0].mxu0
  %v1814 = vadd.f32 0.0, %v1813
  %1815 = vmatprep.mubr.bf16.mxu0 0
  %1816 = vmatmul.mubr.bf16.gmra.mrb[0].mxu0 %v1068
  %v1817 = vpop.f32.mrb[0].mxu0
  %v1818 = vadd.f32 0.0, %v1817
  %v1819 = vpop.f32.mrb[0].mxu0
  %v1820 = vadd.f32 0.0, %v1819
  %v1821 = vpop.f32.mrb[0].mxu0
  %v1822 = vadd.f32 0.0, %v1821
  %v1823 = vpop.f32.mrb[0].mxu0
  %v1824 = vadd.f32 0.0, %v1823
  %1825 = vmatprep.mubr.bf16.mxu0 0
  %1826 = vmatmul.mubr.bf16.gmra.mrb[0].mxu0 %v1071
  %v1827 = vpop.f32.mrb[0].mxu0
  %v1828 = vadd.f32 0.0, %v1827
  %v1829 = vpop.f32.mrb[0].mxu0
  %v1830 = vadd.f32 0.0, %v1829
  %v1831 = vpop.f32.mrb[0].mxu0
  %v1832 = vadd.f32 0.0, %v1831
  %v1833 = vpop.f32.mrb[0].mxu0
  %v1834 = vadd.f32 0.0, %v1833
  %1835 = vmatprep.mubr.bf16.mxu0 0
  %1836 = vmatmul.mubr.bf16.gmra.mrb[0].mxu0 %v1074
  %v1837 = vpop.f32.mrb[0].mxu0
  %v1838 = vadd.f32 0.0, %v1837
  %v1839 = vpop.f32.mrb[0].mxu0
  %v1840 = vadd.f32 0.0, %v1839
  %v1841 = vpop.f32.mrb[0].mxu0
  %v1842 = vadd.f32 0.0, %v1841
  %v1843 = vpop.f32.mrb[0].mxu0
  %v1844 = vadd.f32 0.0, %v1843
  %1845 = vmatprep.mubr.bf16.mxu0 0
  %1846 = vmatmul.mubr.bf16.gmra.mrb[0].mxu0 %v1077
  %v1847 = vpop.f32.mrb[0].mxu0
  %v1848 = vadd.f32 0.0, %v1847
  %v1849 = vpop.f32.mrb[0].mxu0
  %v1850 = vadd.f32 0.0, %v1849
  %v1851 = vpop.f32.mrb[0].mxu0
  %v1852 = vadd.f32 0.0, %v1851
  %v1853 = vpop.f32.mrb[0].mxu0
  %v1854 = vadd.f32 0.0, %v1853
  %1855 = vmatprep.mubr.bf16.mxu0 0
  %1856 = vmatmul.mubr.bf16.gmra.mrb[0].mxu0 %v1080
  %v1857 = vpop.f32.mrb[0].mxu0
  %v1858 = vadd.f32 0.0, %v1857
  %v1859 = vpop.f32.mrb[0].mxu0
  %v1860 = vadd.f32 0.0, %v1859
  %v1861 = vpop.f32.mrb[0].mxu0
  %v1862 = vadd.f32 0.0, %v1861
  %v1863 = vpop.f32.mrb[0].mxu0
  %v1864 = vadd.f32 0.0, %v1863
  %1865 = vmatprep.mubr.bf16.mxu0 0
  %1866 = vmatmul.mubr.bf16.gmra.mrb[0].mxu0 %v1083
  %v1867 = vpop.f32.mrb[0].mxu0
  %v1868 = vadd.f32 0.0, %v1867
  %v1869 = vpop.f32.mrb[0].mxu0
  %v1870 = vadd.f32 0.0, %v1869
  %v1871 = vpop.f32.mrb[0].mxu0
  %v1872 = vadd.f32 0.0, %v1871
  %v1873 = vpop.f32.mrb[0].mxu0
  %v1874 = vadd.f32 0.0, %v1873
  %1875 = vmatprep.mubr.bf16.mxu0 0
  %1876 = vmatmul.mubr.bf16.gmra.mrb[0].mxu0 %v1086
  %v1877 = vpop.f32.mrb[0].mxu0
  %v1878 = vadd.f32 0.0, %v1877
  %v1879 = vpop.f32.mrb[0].mxu0
  %v1880 = vadd.f32 0.0, %v1879
  %v1881 = vpop.f32.mrb[0].mxu0
  %v1882 = vadd.f32 0.0, %v1881
  %v1883 = vpop.f32.mrb[0].mxu0
  %v1884 = vadd.f32 0.0, %v1883
  %1885 = vmatprep.mubr.bf16.mxu0 0
  %1886 = vmatmul.mubr.bf16.gmra.mrb[0].mxu0 %v1089
  %v1887 = vpop.f32.mrb[0].mxu0
  %v1888 = vadd.f32 0.0, %v1887
  %v1889 = vpop.f32.mrb[0].mxu0
  %v1890 = vadd.f32 0.0, %v1889
  %v1891 = vpop.f32.mrb[0].mxu0
  %v1892 = vadd.f32 0.0, %v1891
  %v1893 = vpop.f32.mrb[0].mxu0
  %v1894 = vadd.f32 0.0, %v1893
  %1895 = vmatprep.mubr.bf16.mxu0 0
  %1896 = vmatmul.mubr.bf16.gmra.mrb[0].mxu0 %v1092
  %v1897 = vpop.f32.mrb[0].mxu0
  %v1898 = vadd.f32 0.0, %v1897
  %v1899 = vpop.f32.mrb[0].mxu0
  %v1900 = vadd.f32 0.0, %v1899
  %v1901 = vpop.f32.mrb[0].mxu0
  %v1902 = vadd.f32 0.0, %v1901
  %v1903 = vpop.f32.mrb[0].mxu0
  %v1904 = vadd.f32 0.0, %v1903
  %1905 = vmatprep.mubr.bf16.mxu0 0
  %1906 = vmatmul.mubr.bf16.gmra.mrb[0].mxu0 %v1095
  %v1907 = vpop.f32.mrb[0].mxu0
  %v1908 = vadd.f32 0.0, %v1907
  %v1909 = vpop.f32.mrb[0].mxu0
  %v1910 = vadd.f32 0.0, %v1909
  %v1911 = vpop.f32.mrb[0].mxu0
  %v1912 = vadd.f32 0.0, %v1911
  %v1913 = vpop.f32.mrb[0].mxu0
  %v1914 = vadd.f32 0.0, %v1913
  %1915 = vmatprep.mubr.bf16.mxu0 0
  %1916 = vmatmul.mubr.bf16.gmra.mrb[0].mxu0 %v1098
  %v1917 = vpop.f32.mrb[0].mxu0
  %v1918 = vadd.f32 0.0, %v1917
  %v1919 = vpop.f32.mrb[0].mxu0
  %v1920 = vadd.f32 0.0, %v1919
  %v1921 = vpop.f32.mrb[0].mxu0
  %v1922 = vadd.f32 0.0, %v1921
  %v1923 = vpop.f32.mrb[0].mxu0
  %v1924 = vadd.f32 0.0, %v1923
  %1925 = vmatprep.mubr.bf16.mxu0 0
  %1926 = vmatmul.mubr.bf16.gmra.mrb[0].mxu0 %v1101
  %v1927 = vpop.f32.mrb[0].mxu0
  %v1928 = vadd.f32 0.0, %v1927
  %v1929 = vpop.f32.mrb[0].mxu0
  %v1930 = vadd.f32 0.0, %v1929
  %v1931 = vpop.f32.mrb[0].mxu0
  %v1932 = vadd.f32 0.0, %v1931
  %v1933 = vpop.f32.mrb[0].mxu0
  %v1934 = vadd.f32 0.0, %v1933
  %1935 = vmatprep.mubr.bf16.mxu0 0
  %1936 = vmatmul.mubr.bf16.gmra.mrb[0].mxu0 %v1104
  %v1937 = vpop.f32.mrb[0].mxu0
  %v1938 = vadd.f32 0.0, %v1937
  %v1939 = vpop.f32.mrb[0].mxu0
  %v1940 = vadd.f32 0.0, %v1939
  %v1941 = vpop.f32.mrb[0].mxu0
  %v1942 = vadd.f32 0.0, %v1941
  %v1943 = vpop.f32.mrb[0].mxu0
  %v1944 = vadd.f32 0.0, %v1943
  %1945 = vmatprep.mubr.bf16.mxu0 0
  %1946 = vmatmul.mubr.bf16.gmra.mrb[0].mxu0 %v1107
  %v1947 = vpop.f32.mrb[0].mxu0
  %v1948 = vadd.f32 0.0, %v1947
  %v1949 = vpop.f32.mrb[0].mxu0
  %v1950 = vadd.f32 0.0, %v1949
  %v1951 = vpop.f32.mrb[0].mxu0
  %v1952 = vadd.f32 0.0, %v1951
  %v1953 = vpop.f32.mrb[0].mxu0
  %v1954 = vadd.f32 0.0, %v1953
  %1955 = vmatprep.mubr.bf16.mxu0 0
  %1956 = vmatmul.mubr.bf16.gmra.mrb[0].mxu0 %v1110
  %v1957 = vpop.f32.mrb[0].mxu0
  %v1958 = vadd.f32 0.0, %v1957
  %v1959 = vpop.f32.mrb[0].mxu0
  %v1960 = vadd.f32 0.0, %v1959
  %v1961 = vpop.f32.mrb[0].mxu0
  %v1962 = vadd.f32 0.0, %v1961
  %v1963 = vpop.f32.mrb[0].mxu0
  %v1964 = vadd.f32 0.0, %v1963
  %1965 = vmatprep.mubr.bf16.mxu0 0
  %1966 = vmatmul.mubr.bf16.gmra.mrb[0].mxu0 %v1113
  %v1967 = vpop.f32.mrb[0].mxu0
  %v1968 = vadd.f32 0.0, %v1967
  %v1969 = vpop.f32.mrb[0].mxu0
  %v1970 = vadd.f32 0.0, %v1969
  %v1971 = vpop.f32.mrb[0].mxu0
  %v1972 = vadd.f32 0.0, %v1971
  %v1973 = vpop.f32.mrb[0].mxu0
  %v1974 = vadd.f32 0.0, %v1973
  %1975 = vmatprep.mubr.bf16.mxu0 0
  %1976 = vmatmul.mubr.bf16.gmra.mrb[0].mxu0 %v1116
  %v1977 = vpop.f32.mrb[0].mxu0
  %v1978 = vadd.f32 0.0, %v1977
  %v1979 = vpop.f32.mrb[0].mxu0
  %v1980 = vadd.f32 0.0, %v1979
  %v1981 = vpop.f32.mrb[0].mxu0
  %v1982 = vadd.f32 0.0, %v1981
  %v1983 = vpop.f32.mrb[0].mxu0
  %v1984 = vadd.f32 0.0, %v1983
  %1985 = vmatprep.mubr.bf16.mxu0 0
  %1986 = vmatmul.mubr.bf16.gmra.mrb[0].mxu0 %v1119
  %v1987 = vpop.f32.mrb[0].mxu0
  %v1988 = vadd.f32 0.0, %v1987
  %v1989 = vpop.f32.mrb[0].mxu0
  %v1990 = vadd.f32 0.0, %v1989
  %v1991 = vpop.f32.mrb[0].mxu0
  %v1992 = vadd.f32 0.0, %v1991
  %v1993 = vpop.f32.mrb[0].mxu0
  %v1994 = vadd.f32 0.0, %v1993
  %1995 = vmatprep.mubr.bf16.mxu0 0
  %1996 = vmatmul.mubr.bf16.gmra.mrb[0].mxu0 %v1122
  %v1997 = vpop.f32.mrb[0].mxu0
  %v1998 = vadd.f32 0.0, %v1997
  %v1999 = vpop.f32.mrb[0].mxu0
  %v2000 = vadd.f32 0.0, %v1999
  %v2001 = vpop.f32.mrb[0].mxu0
  %v2002 = vadd.f32 0.0, %v2001
  %v2003 = vpop.f32.mrb[0].mxu0
  %v2004 = vadd.f32 0.0, %v2003
  %2005 = vmatprep.mubr.bf16.mxu0 0
  %2006 = vmatmul.mubr.bf16.gmra.mrb[0].mxu0 %v1125
  %v2007 = vpop.f32.mrb[0].mxu0
  %v2008 = vadd.f32 0.0, %v2007
  %v2009 = vpop.f32.mrb[0].mxu0
  %v2010 = vadd.f32 0.0, %v2009
  %v2011 = vpop.f32.mrb[0].mxu0
  %v2012 = vadd.f32 0.0, %v2011
  %v2013 = vpop.f32.mrb[0].mxu0
  %v2014 = vadd.f32 0.0, %v2013
  %2015 = vmatprep.mubr.bf16.mxu0 0
  %2016 = vmatmul.mubr.bf16.gmra.mrb[0].mxu0 %v1128
  %v2017 = vpop.f32.mrb[0].mxu0
  %v2018 = vadd.f32 0.0, %v2017
  %v2019 = vpop.f32.mrb[0].mxu0
  %v2020 = vadd.f32 0.0, %v2019
  %v2021 = vpop.f32.mrb[0].mxu0
  %v2022 = vadd.f32 0.0, %v2021
  %v2023 = vpop.f32.mrb[0].mxu0
  %v2024 = vadd.f32 0.0, %v2023
  %2025 = vmatprep.mubr.bf16.mxu0 0
  %2026 = vmatmul.mubr.bf16.gmra.mrb[0].mxu0 %v1131
  %v2027 = vpop.f32.mrb[0].mxu0
  %v2028 = vadd.f32 0.0, %v2027
  %v2029 = vpop.f32.mrb[0].mxu0
  %v2030 = vadd.f32 0.0, %v2029
  %v2031 = vpop.f32.mrb[0].mxu0
  %v2032 = vadd.f32 0.0, %v2031
  %v2033 = vpop.f32.mrb[0].mxu0
  %v2034 = vadd.f32 0.0, %v2033
  %2035 = vmatprep.mubr.bf16.mxu0 0
  %2036 = vmatmul.mubr.bf16.gmra.mrb[0].mxu0 %v1134
  %v2037 = vpop.f32.mrb[0].mxu0
  %v2038 = vadd.f32 0.0, %v2037
  %v2039 = vpop.f32.mrb[0].mxu0
  %v2040 = vadd.f32 0.0, %v2039
  %v2041 = vpop.f32.mrb[0].mxu0
  %v2042 = vadd.f32 0.0, %v2041
  %v2043 = vpop.f32.mrb[0].mxu0
  %v2044 = vadd.f32 0.0, %v2043
  %2045 = vmatprep.mubr.bf16.mxu0 0
  %2046 = vmatmul.mubr.bf16.gmra.mrb[0].mxu0 %v1137
  %v2047 = vpop.f32.mrb[0].mxu0
  %v2048 = vadd.f32 0.0, %v2047
  %v2049 = vpop.f32.mrb[0].mxu0
  %v2050 = vadd.f32 0.0, %v2049
  %v2051 = vpop.f32.mrb[0].mxu0
  %v2052 = vadd.f32 0.0, %v2051
  %v2053 = vpop.f32.mrb[0].mxu0
  %v2054 = vadd.f32 0.0, %v2053
  %2055 = vmatprep.mubr.bf16.mxu0 0
  %2056 = vmatmul.mubr.bf16.gmra.mrb[0].mxu0 %v1140
  %v2057 = vpop.f32.mrb[0].mxu0
  %v2058 = vadd.f32 0.0, %v2057
  %v2059 = vpop.f32.mrb[0].mxu0
  %v2060 = vadd.f32 0.0, %v2059
  %v2061 = vpop.f32.mrb[0].mxu0
  %v2062 = vadd.f32 0.0, %v2061
  %v2063 = vpop.f32.mrb[0].mxu0
  %v2064 = vadd.f32 0.0, %v2063
  %2065 = vmatprep.mubr.bf16.mxu0 0
  %2066 = vmatmul.mubr.bf16.gmra.mrb[0].mxu0 %v1143
  %v2067 = vpop.f32.mrb[0].mxu0
  %v2068 = vadd.f32 0.0, %v2067
  %v2069 = vpop.f32.mrb[0].mxu0
  %v2070 = vadd.f32 0.0, %v2069
  %v2071 = vpop.f32.mrb[0].mxu0
  %v2072 = vadd.f32 0.0, %v2071
  %v2073 = vpop.f32.mrb[0].mxu0
  %v2074 = vadd.f32 0.0, %v2073
  %2075 = vdwg.mxu0
  %2076 = vmatprep.subr.bf16.mxu0 0
  %2077 = vmatpush1.bf16.msra.mxu0 %v899
  %2078 = vmatprep.subr.bf16.mxu0 0
  %2079 = vmatpush1.bf16.msra.mxu0 %v906
  %2080 = vmatprep.subr.bf16.mxu0 0
  %2081 = vmatpush1.bf16.msra.mxu0 %v913
  %2082 = vmatprep.subr.bf16.mxu0 0
  %2083 = vmatpush1.bf16.msra.mxu0 %v920
  %2084 = vmatprep.subr.bf16.mxu0 0
  %2085 = vmatpush1.bf16.msra.mxu0 %v1165
  %2086 = vmatprep.subr.bf16.mxu0 0
  %2087 = vmatpush1.bf16.msra.mxu0 0
  %2088 = vmatprep.subr.bf16.mxu0 0
  %2089 = vmatpush1.bf16.msra.mxu0 0
  %2090 = vmatprep.subr.bf16.mxu0 0
  %2091 = vmatpush1.bf16.msra.mxu0 0
  %2092 = vmatprep.subr.bf16.mxu0 0
  %2093 = vmatpush1.bf16.msra.mxu0 0
  %2094 = vmatprep.subr.bf16.mxu0 0
  %2095 = vmatpush1.bf16.msra.mxu0 0
  %2096 = vmatprep.subr.bf16.mxu0 0
  %2097 = vmatpush1.bf16.msra.mxu0 0
  %2098 = vmatprep.subr.bf16.mxu0 0
  %2099 = vmatpush1.bf16.msra.mxu0 0
  %2100 = vmatprep.subr.bf16.mxu0 0
  %2101 = vmatpush1.bf16.msra.mxu0 0
  %2102 = vmatprep.subr.bf16.mxu0 0
  %2103 = vmatpush1.bf16.msra.mxu0 0
  %2104 = vmatprep.subr.bf16.mxu0 0
  %2105 = vmatpush1.bf16.msra.mxu0 0
  %2106 = vmatprep.subr.bf16.mxu0 0
  %2107 = vmatpush1.bf16.msra.mxu0 0
  %2108 = vmatprep.mubr.bf16.mxu0 0
  %2109 = vmatmul.mubr.bf16.gmra.mrb[0].mxu0 %v1065
  %v2110 = vpop.f32.mrb[0].mxu0
  %v2111 = vadd.f32 0.0, %v2110
  %v2112 = vpop.f32.mrb[0].mxu0
  %v2113 = vpop.f32.mrb[0].mxu0
  %v2114 = vadd.f32 0.0, %v2113
  %v2115 = vpop.f32.mrb[0].mxu0
  %2116 = vmatprep.mubr.bf16.mxu0 0
  %2117 = vmatmul.mubr.bf16.gmra.mrb[0].mxu0 %v1068
  %v2118 = vpop.f32.mrb[0].mxu0
  %v2119 = vadd.f32 0.0, %v2118
  %v2120 = vpop.f32.mrb[0].mxu0
  %v2121 = vpop.f32.mrb[0].mxu0
  %v2122 = vadd.f32 0.0, %v2121
  %v2123 = vpop.f32.mrb[0].mxu0
  %2124 = vmatprep.mubr.bf16.mxu0 0
  %2125 = vmatmul.mubr.bf16.gmra.mrb[0].mxu0 %v1071
  %v2126 = vpop.f32.mrb[0].mxu0
  %v2127 = vadd.f32 0.0, %v2126
  %v2128 = vpop.f32.mrb[0].mxu0
  %v2129 = vpop.f32.mrb[0].mxu0
  %v2130 = vadd.f32 0.0, %v2129
  %v2131 = vpop.f32.mrb[0].mxu0
  %2132 = vmatprep.mubr.bf16.mxu0 0
  %2133 = vmatmul.mubr.bf16.gmra.mrb[0].mxu0 %v1074
  %v2134 = vpop.f32.mrb[0].mxu0
  %v2135 = vadd.f32 0.0, %v2134
  %v2136 = vpop.f32.mrb[0].mxu0
  %v2137 = vpop.f32.mrb[0].mxu0
  %v2138 = vadd.f32 0.0, %v2137
  %v2139 = vpop.f32.mrb[0].mxu0
  %2140 = vmatprep.mubr.bf16.mxu0 0
  %2141 = vmatmul.mubr.bf16.gmra.mrb[0].mxu0 %v1077
  %v2142 = vpop.f32.mrb[0].mxu0
  %v2143 = vadd.f32 0.0, %v2142
  %v2144 = vpop.f32.mrb[0].mxu0
  %v2145 = vpop.f32.mrb[0].mxu0
  %v2146 = vadd.f32 0.0, %v2145
  %v2147 = vpop.f32.mrb[0].mxu0
  %2148 = vmatprep.mubr.bf16.mxu0 0
  %2149 = vmatmul.mubr.bf16.gmra.mrb[0].mxu0 %v1080
  %v2150 = vpop.f32.mrb[0].mxu0
  %v2151 = vadd.f32 0.0, %v2150
  %v2152 = vpop.f32.mrb[0].mxu0
  %v2153 = vpop.f32.mrb[0].mxu0
  %v2154 = vadd.f32 0.0, %v2153
  %v2155 = vpop.f32.mrb[0].mxu0
  %2156 = vmatprep.mubr.bf16.mxu0 0
  %2157 = vmatmul.mubr.bf16.gmra.mrb[0].mxu0 %v1083
  %v2158 = vpop.f32.mrb[0].mxu0
  %v2159 = vadd.f32 0.0, %v2158
  %v2160 = vpop.f32.mrb[0].mxu0
  %v2161 = vpop.f32.mrb[0].mxu0
  %v2162 = vadd.f32 0.0, %v2161
  %v2163 = vpop.f32.mrb[0].mxu0
  %2164 = vmatprep.mubr.bf16.mxu0 0
  %2165 = vmatmul.mubr.bf16.gmra.mrb[0].mxu0 %v1086
  %v2166 = vpop.f32.mrb[0].mxu0
  %v2167 = vadd.f32 0.0, %v2166
  %v2168 = vpop.f32.mrb[0].mxu0
  %v2169 = vpop.f32.mrb[0].mxu0
  %v2170 = vadd.f32 0.0, %v2169
  %v2171 = vpop.f32.mrb[0].mxu0
  %2172 = vmatprep.mubr.bf16.mxu0 0
  %2173 = vmatmul.mubr.bf16.gmra.mrb[0].mxu0 %v1089
  %v2174 = vpop.f32.mrb[0].mxu0
  %v2175 = vadd.f32 0.0, %v2174
  %v2176 = vpop.f32.mrb[0].mxu0
  %v2177 = vpop.f32.mrb[0].mxu0
  %v2178 = vadd.f32 0.0, %v2177
  %v2179 = vpop.f32.mrb[0].mxu0
  %2180 = vmatprep.mubr.bf16.mxu0 0
  %2181 = vmatmul.mubr.bf16.gmra.mrb[0].mxu0 %v1092
  %v2182 = vpop.f32.mrb[0].mxu0
  %v2183 = vadd.f32 0.0, %v2182
  %v2184 = vpop.f32.mrb[0].mxu0
  %v2185 = vpop.f32.mrb[0].mxu0
  %v2186 = vadd.f32 0.0, %v2185
  %v2187 = vpop.f32.mrb[0].mxu0
  %2188 = vmatprep.mubr.bf16.mxu0 0
  %2189 = vmatmul.mubr.bf16.gmra.mrb[0].mxu0 %v1095
  %v2190 = vpop.f32.mrb[0].mxu0
  %v2191 = vadd.f32 0.0, %v2190
  %v2192 = vpop.f32.mrb[0].mxu0
  %v2193 = vpop.f32.mrb[0].mxu0
  %v2194 = vadd.f32 0.0, %v2193
  %v2195 = vpop.f32.mrb[0].mxu0
  %2196 = vmatprep.mubr.bf16.mxu0 0
  %2197 = vmatmul.mubr.bf16.gmra.mrb[0].mxu0 %v1098
  %v2198 = vpop.f32.mrb[0].mxu0
  %v2199 = vadd.f32 0.0, %v2198
  %v2200 = vpop.f32.mrb[0].mxu0
  %v2201 = vpop.f32.mrb[0].mxu0
  %v2202 = vadd.f32 0.0, %v2201
  %v2203 = vpop.f32.mrb[0].mxu0
  %2204 = vmatprep.mubr.bf16.mxu0 0
  %2205 = vmatmul.mubr.bf16.gmra.mrb[0].mxu0 %v1101
  %v2206 = vpop.f32.mrb[0].mxu0
  %v2207 = vadd.f32 0.0, %v2206
  %v2208 = vpop.f32.mrb[0].mxu0
  %v2209 = vpop.f32.mrb[0].mxu0
  %v2210 = vadd.f32 0.0, %v2209
  %v2211 = vpop.f32.mrb[0].mxu0
  %2212 = vmatprep.mubr.bf16.mxu0 0
  %2213 = vmatmul.mubr.bf16.gmra.mrb[0].mxu0 %v1104
  %v2214 = vpop.f32.mrb[0].mxu0
  %v2215 = vadd.f32 0.0, %v2214
  %v2216 = vpop.f32.mrb[0].mxu0
  %v2217 = vpop.f32.mrb[0].mxu0
  %v2218 = vadd.f32 0.0, %v2217
  %v2219 = vpop.f32.mrb[0].mxu0
  %2220 = vmatprep.mubr.bf16.mxu0 0
  %2221 = vmatmul.mubr.bf16.gmra.mrb[0].mxu0 %v1107
  %v2222 = vpop.f32.mrb[0].mxu0
  %v2223 = vadd.f32 0.0, %v2222
  %v2224 = vpop.f32.mrb[0].mxu0
  %v2225 = vpop.f32.mrb[0].mxu0
  %v2226 = vadd.f32 0.0, %v2225
  %v2227 = vpop.f32.mrb[0].mxu0
  %2228 = vmatprep.mubr.bf16.mxu0 0
  %2229 = vmatmul.mubr.bf16.gmra.mrb[0].mxu0 %v1110
  %v2230 = vpop.f32.mrb[0].mxu0
  %v2231 = vadd.f32 0.0, %v2230
  %v2232 = vpop.f32.mrb[0].mxu0
  %v2233 = vpop.f32.mrb[0].mxu0
  %v2234 = vadd.f32 0.0, %v2233
  %v2235 = vpop.f32.mrb[0].mxu0
  %2236 = vmatprep.mubr.bf16.mxu0 0
  %2237 = vmatmul.mubr.bf16.gmra.mrb[0].mxu0 %v1113
  %v2238 = vpop.f32.mrb[0].mxu0
  %v2239 = vadd.f32 0.0, %v2238
  %v2240 = vpop.f32.mrb[0].mxu0
  %v2241 = vpop.f32.mrb[0].mxu0
  %v2242 = vadd.f32 0.0, %v2241
  %v2243 = vpop.f32.mrb[0].mxu0
  %2244 = vmatprep.mubr.bf16.mxu0 0
  %2245 = vmatmul.mubr.bf16.gmra.mrb[0].mxu0 %v1116
  %v2246 = vpop.f32.mrb[0].mxu0
  %v2247 = vadd.f32 0.0, %v2246
  %v2248 = vpop.f32.mrb[0].mxu0
  %v2249 = vpop.f32.mrb[0].mxu0
  %v2250 = vadd.f32 0.0, %v2249
  %v2251 = vpop.f32.mrb[0].mxu0
  %2252 = vmatprep.mubr.bf16.mxu0 0
  %2253 = vmatmul.mubr.bf16.gmra.mrb[0].mxu0 %v1119
  %v2254 = vpop.f32.mrb[0].mxu0
  %v2255 = vadd.f32 0.0, %v2254
  %v2256 = vpop.f32.mrb[0].mxu0
  %v2257 = vpop.f32.mrb[0].mxu0
  %v2258 = vadd.f32 0.0, %v2257
  %v2259 = vpop.f32.mrb[0].mxu0
  %2260 = vmatprep.mubr.bf16.mxu0 0
  %2261 = vmatmul.mubr.bf16.gmra.mrb[0].mxu0 %v1122
  %v2262 = vpop.f32.mrb[0].mxu0
  %v2263 = vadd.f32 0.0, %v2262
  %v2264 = vpop.f32.mrb[0].mxu0
  %v2265 = vpop.f32.mrb[0].mxu0
  %v2266 = vadd.f32 0.0, %v2265
  %v2267 = vpop.f32.mrb[0].mxu0
  %2268 = vmatprep.mubr.bf16.mxu0 0
  %2269 = vmatmul.mubr.bf16.gmra.mrb[0].mxu0 %v1125
  %v2270 = vpop.f32.mrb[0].mxu0
  %v2271 = vadd.f32 0.0, %v2270
  %v2272 = vpop.f32.mrb[0].mxu0
  %v2273 = vpop.f32.mrb[0].mxu0
  %v2274 = vadd.f32 0.0, %v2273
  %v2275 = vpop.f32.mrb[0].mxu0
  %2276 = vmatprep.mubr.bf16.mxu0 0
  %2277 = vmatmul.mubr.bf16.gmra.mrb[0].mxu0 %v1128
  %v2278 = vpop.f32.mrb[0].mxu0
  %v2279 = vadd.f32 0.0, %v2278
  %v2280 = vpop.f32.mrb[0].mxu0
  %v2281 = vpop.f32.mrb[0].mxu0
  %v2282 = vadd.f32 0.0, %v2281
  %v2283 = vpop.f32.mrb[0].mxu0
  %2284 = vmatprep.mubr.bf16.mxu0 0
  %2285 = vmatmul.mubr.bf16.gmra.mrb[0].mxu0 %v1131
  %v2286 = vpop.f32.mrb[0].mxu0
  %v2287 = vadd.f32 0.0, %v2286
  %v2288 = vpop.f32.mrb[0].mxu0
  %v2289 = vpop.f32.mrb[0].mxu0
  %v2290 = vadd.f32 0.0, %v2289
  %v2291 = vpop.f32.mrb[0].mxu0
  %2292 = vmatprep.mubr.bf16.mxu0 0
  %2293 = vmatmul.mubr.bf16.gmra.mrb[0].mxu0 %v1134
  %v2294 = vpop.f32.mrb[0].mxu0
  %v2295 = vadd.f32 0.0, %v2294
  %v2296 = vpop.f32.mrb[0].mxu0
  %v2297 = vpop.f32.mrb[0].mxu0
  %v2298 = vadd.f32 0.0, %v2297
  %v2299 = vpop.f32.mrb[0].mxu0
  %2300 = vmatprep.mubr.bf16.mxu0 0
  %2301 = vmatmul.mubr.bf16.gmra.mrb[0].mxu0 %v1137
  %v2302 = vpop.f32.mrb[0].mxu0
  %v2303 = vadd.f32 0.0, %v2302
  %v2304 = vpop.f32.mrb[0].mxu0
  %v2305 = vpop.f32.mrb[0].mxu0
  %v2306 = vadd.f32 0.0, %v2305
  %v2307 = vpop.f32.mrb[0].mxu0
  %2308 = vmatprep.mubr.bf16.mxu0 0
  %2309 = vmatmul.mubr.bf16.gmra.mrb[0].mxu0 %v1140
  %v2310 = vpop.f32.mrb[0].mxu0
  %v2311 = vadd.f32 0.0, %v2310
  %v2312 = vpop.f32.mrb[0].mxu0
  %v2313 = vpop.f32.mrb[0].mxu0
  %v2314 = vadd.f32 0.0, %v2313
  %v2315 = vpop.f32.mrb[0].mxu0
  %2316 = vmatprep.mubr.bf16.mxu0 0
  %2317 = vmatmul.mubr.bf16.gmra.mrb[0].mxu0 %v1143
  %v2318 = vpop.f32.mrb[0].mxu0
  %v2319 = vadd.f32 0.0, %v2318
  %v2320 = vpop.f32.mrb[0].mxu0
  %v2321 = vpop.f32.mrb[0].mxu0
  %v2322 = vadd.f32 0.0, %v2321
  %v2323 = vpop.f32.mrb[0].mxu0
  %2324 = vdwg.mxu0
  %v2325 = vadd.f32 %v1202, %v1204
  %v2326 = vadd.f32 %v2325, %v1505
  %v2327 = vadd.f32 %v2326, %v1507
  %v2328 = vadd.f32 %v2327, %v1808
  %v2329 = vadd.f32 %v2328, %v1810
  %v2330 = vadd.f32 %v2329, %v2111
  %2331 = vadd.xlane.f32.xlu0 %v2330
  %v2332 = vpop.xlane.xlu0 %2331
  %v2333 = vadd.f32 %v1206, %v1208
  %v2334 = vadd.f32 %v2333, %v1509
  %v2335 = vadd.f32 %v2334, %v1511
  %v2336 = vadd.f32 %v2335, %v1812
  %v2337 = vadd.f32 %v2336, %v1814
  %v2338 = vadd.f32 %v2337, %v2114
  %2339 = vadd.xlane.f32.xlu0 %v2338
  %v2340 = vpop.xlane.xlu0 %2339
  %v2341 = vadd.f32 %v1212, %v1214
  %v2342 = vadd.f32 %v2341, %v1515
  %v2343 = vadd.f32 %v2342, %v1517
  %v2344 = vadd.f32 %v2343, %v1818
  %v2345 = vadd.f32 %v2344, %v1820
  %v2346 = vadd.f32 %v2345, %v2119
  %2347 = vadd.xlane.f32.xlu0 %v2346
  %v2348 = vpop.xlane.xlu0 %2347
  %v2349 = vadd.f32 %v1216, %v1218
  %v2350 = vadd.f32 %v2349, %v1519
  %v2351 = vadd.f32 %v2350, %v1521
  %v2352 = vadd.f32 %v2351, %v1822
  %v2353 = vadd.f32 %v2352, %v1824
  %v2354 = vadd.f32 %v2353, %v2122
  %2355 = vadd.xlane.f32.xlu0 %v2354
  %v2356 = vpop.xlane.xlu0 %2355
  %v2357 = vadd.f32 %v1222, %v1224
  %v2358 = vadd.f32 %v2357, %v1525
  %v2359 = vadd.f32 %v2358, %v1527
  %v2360 = vadd.f32 %v2359, %v1828
  %v2361 = vadd.f32 %v2360, %v1830
  %v2362 = vadd.f32 %v2361, %v2127
  %2363 = vadd.xlane.f32.xlu0 %v2362
  %v2364 = vpop.xlane.xlu0 %2363
  %v2365 = vadd.f32 %v1226, %v1228
  %v2366 = vadd.f32 %v2365, %v1529
  %v2367 = vadd.f32 %v2366, %v1531
  %v2368 = vadd.f32 %v2367, %v1832
  %v2369 = vadd.f32 %v2368, %v1834
  %v2370 = vadd.f32 %v2369, %v2130
  %2371 = vadd.xlane.f32.xlu0 %v2370
  %v2372 = vpop.xlane.xlu0 %2371
  %v2373 = vadd.f32 %v1232, %v1234
  %v2374 = vadd.f32 %v2373, %v1535
  %v2375 = vadd.f32 %v2374, %v1537
  %v2376 = vadd.f32 %v2375, %v1838
  %v2377 = vadd.f32 %v2376, %v1840
  %v2378 = vadd.f32 %v2377, %v2135
  %2379 = vadd.xlane.f32.xlu0 %v2378
  %v2380 = vpop.xlane.xlu0 %2379
  %v2381 = vadd.f32 %v1236, %v1238
  %v2382 = vadd.f32 %v2381, %v1539
  %v2383 = vadd.f32 %v2382, %v1541
  %v2384 = vadd.f32 %v2383, %v1842
  %v2385 = vadd.f32 %v2384, %v1844
  %v2386 = vadd.f32 %v2385, %v2138
  %2387 = vadd.xlane.f32.xlu0 %v2386
  %v2388 = vpop.xlane.xlu0 %2387
  %v2389 = vadd.f32 %v1242, %v1244
  %v2390 = vadd.f32 %v2389, %v1545
  %v2391 = vadd.f32 %v2390, %v1547
  %v2392 = vadd.f32 %v2391, %v1848
  %v2393 = vadd.f32 %v2392, %v1850
  %v2394 = vadd.f32 %v2393, %v2143
  %2395 = vadd.xlane.f32.xlu0 %v2394
  %v2396 = vpop.xlane.xlu0 %2395
  %v2397 = vadd.f32 %v1246, %v1248
  %v2398 = vadd.f32 %v2397, %v1549
  %v2399 = vadd.f32 %v2398, %v1551
  %v2400 = vadd.f32 %v2399, %v1852
  %v2401 = vadd.f32 %v2400, %v1854
  %v2402 = vadd.f32 %v2401, %v2146
  %2403 = vadd.xlane.f32.xlu0 %v2402
  %v2404 = vpop.xlane.xlu0 %2403
  %v2405 = vadd.f32 %v1252, %v1254
  %v2406 = vadd.f32 %v2405, %v1555
  %v2407 = vadd.f32 %v2406, %v1557
  %v2408 = vadd.f32 %v2407, %v1858
  %v2409 = vadd.f32 %v2408, %v1860
  %v2410 = vadd.f32 %v2409, %v2151
  %2411 = vadd.xlane.f32.xlu0 %v2410
  %v2412 = vpop.xlane.xlu0 %2411
  %v2413 = vadd.f32 %v1256, %v1258
  %v2414 = vadd.f32 %v2413, %v1559
  %v2415 = vadd.f32 %v2414, %v1561
  %v2416 = vadd.f32 %v2415, %v1862
  %v2417 = vadd.f32 %v2416, %v1864
  %v2418 = vadd.f32 %v2417, %v2154
  %2419 = vadd.xlane.f32.xlu0 %v2418
  %v2420 = vpop.xlane.xlu0 %2419
  %v2421 = vadd.f32 %v1262, %v1264
  %v2422 = vadd.f32 %v2421, %v1565
  %v2423 = vadd.f32 %v2422, %v1567
  %v2424 = vadd.f32 %v2423, %v1868
  %v2425 = vadd.f32 %v2424, %v1870
  %v2426 = vadd.f32 %v2425, %v2159
  %2427 = vadd.xlane.f32.xlu0 %v2426
  %v2428 = vpop.xlane.xlu0 %2427
  %v2429 = vadd.f32 %v1266, %v1268
  %v2430 = vadd.f32 %v2429, %v1569
  %v2431 = vadd.f32 %v2430, %v1571
  %v2432 = vadd.f32 %v2431, %v1872
  %v2433 = vadd.f32 %v2432, %v1874
  %v2434 = vadd.f32 %v2433, %v2162
  %2435 = vadd.xlane.f32.xlu0 %v2434
  %v2436 = vpop.xlane.xlu0 %2435
  %v2437 = vadd.f32 %v1272, %v1274
  %v2438 = vadd.f32 %v2437, %v1575
  %v2439 = vadd.f32 %v2438, %v1577
  %v2440 = vadd.f32 %v2439, %v1878
  %v2441 = vadd.f32 %v2440, %v1880
  %v2442 = vadd.f32 %v2441, %v2167
  %2443 = vadd.xlane.f32.xlu0 %v2442
  %v2444 = vpop.xlane.xlu0 %2443
  %v2445 = vadd.f32 %v1276, %v1278
  %v2446 = vadd.f32 %v2445, %v1579
  %v2447 = vadd.f32 %v2446, %v1581
  %v2448 = vadd.f32 %v2447, %v1882
  %v2449 = vadd.f32 %v2448, %v1884
  %v2450 = vadd.f32 %v2449, %v2170
  %2451 = vadd.xlane.f32.xlu0 %v2450
  %v2452 = vpop.xlane.xlu0 %2451
  %v2453 = vadd.f32 %v1282, %v1284
  %v2454 = vadd.f32 %v2453, %v1585
  %v2455 = vadd.f32 %v2454, %v1587
  %v2456 = vadd.f32 %v2455, %v1888
  %v2457 = vadd.f32 %v2456, %v1890
  %v2458 = vadd.f32 %v2457, %v2175
  %2459 = vadd.xlane.f32.xlu0 %v2458
  %v2460 = vpop.xlane.xlu0 %2459
  %v2461 = vadd.f32 %v1286, %v1288
  %v2462 = vadd.f32 %v2461, %v1589
  %v2463 = vadd.f32 %v2462, %v1591
  %v2464 = vadd.f32 %v2463, %v1892
  %v2465 = vadd.f32 %v2464, %v1894
  %v2466 = vadd.f32 %v2465, %v2178
  %2467 = vadd.xlane.f32.xlu0 %v2466
  %v2468 = vpop.xlane.xlu0 %2467
  %v2469 = vadd.f32 %v1292, %v1294
  %v2470 = vadd.f32 %v2469, %v1595
  %v2471 = vadd.f32 %v2470, %v1597
  %v2472 = vadd.f32 %v2471, %v1898
  %v2473 = vadd.f32 %v2472, %v1900
  %v2474 = vadd.f32 %v2473, %v2183
  %2475 = vadd.xlane.f32.xlu0 %v2474
  %v2476 = vpop.xlane.xlu0 %2475
  %v2477 = vadd.f32 %v1296, %v1298
  %v2478 = vadd.f32 %v2477, %v1599
  %v2479 = vadd.f32 %v2478, %v1601
  %v2480 = vadd.f32 %v2479, %v1902
  %v2481 = vadd.f32 %v2480, %v1904
  %v2482 = vadd.f32 %v2481, %v2186
  %2483 = vadd.xlane.f32.xlu0 %v2482
  %v2484 = vpop.xlane.xlu0 %2483
  %v2485 = vadd.f32 %v1302, %v1304
  %v2486 = vadd.f32 %v2485, %v1605
  %v2487 = vadd.f32 %v2486, %v1607
  %v2488 = vadd.f32 %v2487, %v1908
  %v2489 = vadd.f32 %v2488, %v1910
  %v2490 = vadd.f32 %v2489, %v2191
  %2491 = vadd.xlane.f32.xlu0 %v2490
  %v2492 = vpop.xlane.xlu0 %2491
  %v2493 = vadd.f32 %v1306, %v1308
  %v2494 = vadd.f32 %v2493, %v1609
  %v2495 = vadd.f32 %v2494, %v1611
  %v2496 = vadd.f32 %v2495, %v1912
  %v2497 = vadd.f32 %v2496, %v1914
  %v2498 = vadd.f32 %v2497, %v2194
  %2499 = vadd.xlane.f32.xlu0 %v2498
  %v2500 = vpop.xlane.xlu0 %2499
  %v2501 = vadd.f32 %v1312, %v1314
  %v2502 = vadd.f32 %v2501, %v1615
  %v2503 = vadd.f32 %v2502, %v1617
  %v2504 = vadd.f32 %v2503, %v1918
  %v2505 = vadd.f32 %v2504, %v1920
  %v2506 = vadd.f32 %v2505, %v2199
  %2507 = vadd.xlane.f32.xlu0 %v2506
  %v2508 = vpop.xlane.xlu0 %2507
  %v2509 = vadd.f32 %v1316, %v1318
  %v2510 = vadd.f32 %v2509, %v1619
  %v2511 = vadd.f32 %v2510, %v1621
  %v2512 = vadd.f32 %v2511, %v1922
  %v2513 = vadd.f32 %v2512, %v1924
  %v2514 = vadd.f32 %v2513, %v2202
  %2515 = vadd.xlane.f32.xlu0 %v2514
  %v2516 = vpop.xlane.xlu0 %2515
  %v2517 = vadd.f32 %v1322, %v1324
  %v2518 = vadd.f32 %v2517, %v1625
  %v2519 = vadd.f32 %v2518, %v1627
  %v2520 = vadd.f32 %v2519, %v1928
  %v2521 = vadd.f32 %v2520, %v1930
  %v2522 = vadd.f32 %v2521, %v2207
  %2523 = vadd.xlane.f32.xlu0 %v2522
  %v2524 = vpop.xlane.xlu0 %2523
  %v2525 = vadd.f32 %v1326, %v1328
  %v2526 = vadd.f32 %v2525, %v1629
  %v2527 = vadd.f32 %v2526, %v1631
  %v2528 = vadd.f32 %v2527, %v1932
  %v2529 = vadd.f32 %v2528, %v1934
  %v2530 = vadd.f32 %v2529, %v2210
  %2531 = vadd.xlane.f32.xlu0 %v2530
  %v2532 = vpop.xlane.xlu0 %2531
  %v2533 = vadd.f32 %v1332, %v1334
  %v2534 = vadd.f32 %v2533, %v1635
  %v2535 = vadd.f32 %v2534, %v1637
  %v2536 = vadd.f32 %v2535, %v1938
  %v2537 = vadd.f32 %v2536, %v1940
  %v2538 = vadd.f32 %v2537, %v2215
  %2539 = vadd.xlane.f32.xlu0 %v2538
  %v2540 = vpop.xlane.xlu0 %2539
  %v2541 = vadd.f32 %v1336, %v1338
  %v2542 = vadd.f32 %v2541, %v1639
  %v2543 = vadd.f32 %v2542, %v1641
  %v2544 = vadd.f32 %v2543, %v1942
  %v2545 = vadd.f32 %v2544, %v1944
  %v2546 = vadd.f32 %v2545, %v2218
  %2547 = vadd.xlane.f32.xlu0 %v2546
  %v2548 = vpop.xlane.xlu0 %2547
  %v2549 = vadd.f32 %v1342, %v1344
  %v2550 = vadd.f32 %v2549, %v1645
  %v2551 = vadd.f32 %v2550, %v1647
  %v2552 = vadd.f32 %v2551, %v1948
  %v2553 = vadd.f32 %v2552, %v1950
  %v2554 = vadd.f32 %v2553, %v2223
  %2555 = vadd.xlane.f32.xlu0 %v2554
  %v2556 = vpop.xlane.xlu0 %2555
  %v2557 = vadd.f32 %v1346, %v1348
  %v2558 = vadd.f32 %v2557, %v1649
  %v2559 = vadd.f32 %v2558, %v1651
  %v2560 = vadd.f32 %v2559, %v1952
  %v2561 = vadd.f32 %v2560, %v1954
  %v2562 = vadd.f32 %v2561, %v2226
  %2563 = vadd.xlane.f32.xlu0 %v2562
  %v2564 = vpop.xlane.xlu0 %2563
  %v2565 = vadd.f32 %v1352, %v1354
  %v2566 = vadd.f32 %v2565, %v1655
  %v2567 = vadd.f32 %v2566, %v1657
  %v2568 = vadd.f32 %v2567, %v1958
  %v2569 = vadd.f32 %v2568, %v1960
  %v2570 = vadd.f32 %v2569, %v2231
  %2571 = vadd.xlane.f32.xlu0 %v2570
  %v2572 = vpop.xlane.xlu0 %2571
  %v2573 = vadd.f32 %v1356, %v1358
  %v2574 = vadd.f32 %v2573, %v1659
  %v2575 = vadd.f32 %v2574, %v1661
  %v2576 = vadd.f32 %v2575, %v1962
  %v2577 = vadd.f32 %v2576, %v1964
  %v2578 = vadd.f32 %v2577, %v2234
  %2579 = vadd.xlane.f32.xlu0 %v2578
  %v2580 = vpop.xlane.xlu0 %2579
  %v2581 = vadd.f32 %v1362, %v1364
  %v2582 = vadd.f32 %v2581, %v1665
  %v2583 = vadd.f32 %v2582, %v1667
  %v2584 = vadd.f32 %v2583, %v1968
  %v2585 = vadd.f32 %v2584, %v1970
  %v2586 = vadd.f32 %v2585, %v2239
  %2587 = vadd.xlane.f32.xlu0 %v2586
  %v2588 = vpop.xlane.xlu0 %2587
  %v2589 = vadd.f32 %v1366, %v1368
  %v2590 = vadd.f32 %v2589, %v1669
  %v2591 = vadd.f32 %v2590, %v1671
  %v2592 = vadd.f32 %v2591, %v1972
  %v2593 = vadd.f32 %v2592, %v1974
  %v2594 = vadd.f32 %v2593, %v2242
  %2595 = vadd.xlane.f32.xlu0 %v2594
  %v2596 = vpop.xlane.xlu0 %2595
  %v2597 = vadd.f32 %v1372, %v1374
  %v2598 = vadd.f32 %v2597, %v1675
  %v2599 = vadd.f32 %v2598, %v1677
  %v2600 = vadd.f32 %v2599, %v1978
  %v2601 = vadd.f32 %v2600, %v1980
  %v2602 = vadd.f32 %v2601, %v2247
  %2603 = vadd.xlane.f32.xlu0 %v2602
  %v2604 = vpop.xlane.xlu0 %2603
  %v2605 = vadd.f32 %v1376, %v1378
  %v2606 = vadd.f32 %v2605, %v1679
  %v2607 = vadd.f32 %v2606, %v1681
  %v2608 = vadd.f32 %v2607, %v1982
  %v2609 = vadd.f32 %v2608, %v1984
  %v2610 = vadd.f32 %v2609, %v2250
  %2611 = vadd.xlane.f32.xlu0 %v2610
  %v2612 = vpop.xlane.xlu0 %2611
  %v2613 = vadd.f32 %v1382, %v1384
  %v2614 = vadd.f32 %v2613, %v1685
  %v2615 = vadd.f32 %v2614, %v1687
  %v2616 = vadd.f32 %v2615, %v1988
  %v2617 = vadd.f32 %v2616, %v1990
  %v2618 = vadd.f32 %v2617, %v2255
  %2619 = vadd.xlane.f32.xlu0 %v2618
  %v2620 = vpop.xlane.xlu0 %2619
  %v2621 = vadd.f32 %v1386, %v1388
  %v2622 = vadd.f32 %v2621, %v1689
  %v2623 = vadd.f32 %v2622, %v1691
  %v2624 = vadd.f32 %v2623, %v1992
  %v2625 = vadd.f32 %v2624, %v1994
  %v2626 = vadd.f32 %v2625, %v2258
  %2627 = vadd.xlane.f32.xlu0 %v2626
  %v2628 = vpop.xlane.xlu0 %2627
  %v2629 = vadd.f32 %v1392, %v1394
  %v2630 = vadd.f32 %v2629, %v1695
  %v2631 = vadd.f32 %v2630, %v1697
  %v2632 = vadd.f32 %v2631, %v1998
  %v2633 = vadd.f32 %v2632, %v2000
  %v2634 = vadd.f32 %v2633, %v2263
  %2635 = vadd.xlane.f32.xlu0 %v2634
  %v2636 = vpop.xlane.xlu0 %2635
  %v2637 = vadd.f32 %v1396, %v1398
  %v2638 = vadd.f32 %v2637, %v1699
  %v2639 = vadd.f32 %v2638, %v1701
  %v2640 = vadd.f32 %v2639, %v2002
  %v2641 = vadd.f32 %v2640, %v2004
  %v2642 = vadd.f32 %v2641, %v2266
  %2643 = vadd.xlane.f32.xlu0 %v2642
  %v2644 = vpop.xlane.xlu0 %2643
  %v2645 = vadd.f32 %v1402, %v1404
  %v2646 = vadd.f32 %v2645, %v1705
  %v2647 = vadd.f32 %v2646, %v1707
  %v2648 = vadd.f32 %v2647, %v2008
  %v2649 = vadd.f32 %v2648, %v2010
  %v2650 = vadd.f32 %v2649, %v2271
  %2651 = vadd.xlane.f32.xlu0 %v2650
  %v2652 = vpop.xlane.xlu0 %2651
  %v2653 = vadd.f32 %v1406, %v1408
  %v2654 = vadd.f32 %v2653, %v1709
  %v2655 = vadd.f32 %v2654, %v1711
  %v2656 = vadd.f32 %v2655, %v2012
  %v2657 = vadd.f32 %v2656, %v2014
  %v2658 = vadd.f32 %v2657, %v2274
  %2659 = vadd.xlane.f32.xlu0 %v2658
  %v2660 = vpop.xlane.xlu0 %2659
  %v2661 = vadd.f32 %v1412, %v1414
  %v2662 = vadd.f32 %v2661, %v1715
  %v2663 = vadd.f32 %v2662, %v1717
  %v2664 = vadd.f32 %v2663, %v2018
  %v2665 = vadd.f32 %v2664, %v2020
  %v2666 = vadd.f32 %v2665, %v2279
  %2667 = vadd.xlane.f32.xlu0 %v2666
  %v2668 = vpop.xlane.xlu0 %2667
  %v2669 = vadd.f32 %v1416, %v1418
  %v2670 = vadd.f32 %v2669, %v1719
  %v2671 = vadd.f32 %v2670, %v1721
  %v2672 = vadd.f32 %v2671, %v2022
  %v2673 = vadd.f32 %v2672, %v2024
  %v2674 = vadd.f32 %v2673, %v2282
  %2675 = vadd.xlane.f32.xlu0 %v2674
  %v2676 = vpop.xlane.xlu0 %2675
  %v2677 = vadd.f32 %v1422, %v1424
  %v2678 = vadd.f32 %v2677, %v1725
  %v2679 = vadd.f32 %v2678, %v1727
  %v2680 = vadd.f32 %v2679, %v2028
  %v2681 = vadd.f32 %v2680, %v2030
  %v2682 = vadd.f32 %v2681, %v2287
  %2683 = vadd.xlane.f32.xlu0 %v2682
  %v2684 = vpop.xlane.xlu0 %2683
  %v2685 = vadd.f32 %v1426, %v1428
  %v2686 = vadd.f32 %v2685, %v1729
  %v2687 = vadd.f32 %v2686, %v1731
  %v2688 = vadd.f32 %v2687, %v2032
  %v2689 = vadd.f32 %v2688, %v2034
  %v2690 = vadd.f32 %v2689, %v2290
  %2691 = vadd.xlane.f32.xlu0 %v2690
  %v2692 = vpop.xlane.xlu0 %2691
  %v2693 = vadd.f32 %v1432, %v1434
  %v2694 = vadd.f32 %v2693, %v1735
  %v2695 = vadd.f32 %v2694, %v1737
  %v2696 = vadd.f32 %v2695, %v2038
  %v2697 = vadd.f32 %v2696, %v2040
  %v2698 = vadd.f32 %v2697, %v2295
  %2699 = vadd.xlane.f32.xlu0 %v2698
  %v2700 = vpop.xlane.xlu0 %2699
  %v2701 = vadd.f32 %v1436, %v1438
  %v2702 = vadd.f32 %v2701, %v1739
  %v2703 = vadd.f32 %v2702, %v1741
  %v2704 = vadd.f32 %v2703, %v2042
  %v2705 = vadd.f32 %v2704, %v2044
  %v2706 = vadd.f32 %v2705, %v2298
  %2707 = vadd.xlane.f32.xlu0 %v2706
  %v2708 = vpop.xlane.xlu0 %2707
  %v2709 = vadd.f32 %v1442, %v1444
  %v2710 = vadd.f32 %v2709, %v1745
  %v2711 = vadd.f32 %v2710, %v1747
  %v2712 = vadd.f32 %v2711, %v2048
  %v2713 = vadd.f32 %v2712, %v2050
  %v2714 = vadd.f32 %v2713, %v2303
  %2715 = vadd.xlane.f32.xlu0 %v2714
  %v2716 = vpop.xlane.xlu0 %2715
  %v2717 = vadd.f32 %v1446, %v1448
  %v2718 = vadd.f32 %v2717, %v1749
  %v2719 = vadd.f32 %v2718, %v1751
  %v2720 = vadd.f32 %v2719, %v2052
  %v2721 = vadd.f32 %v2720, %v2054
  %v2722 = vadd.f32 %v2721, %v2306
  %2723 = vadd.xlane.f32.xlu0 %v2722
  %v2724 = vpop.xlane.xlu0 %2723
  %v2725 = vadd.f32 %v1452, %v1454
  %v2726 = vadd.f32 %v2725, %v1755
  %v2727 = vadd.f32 %v2726, %v1757
  %v2728 = vadd.f32 %v2727, %v2058
  %v2729 = vadd.f32 %v2728, %v2060
  %v2730 = vadd.f32 %v2729, %v2311
  %2731 = vadd.xlane.f32.xlu0 %v2730
  %v2732 = vpop.xlane.xlu0 %2731
  %v2733 = vadd.f32 %v1456, %v1458
  %v2734 = vadd.f32 %v2733, %v1759
  %v2735 = vadd.f32 %v2734, %v1761
  %v2736 = vadd.f32 %v2735, %v2062
  %v2737 = vadd.f32 %v2736, %v2064
  %v2738 = vadd.f32 %v2737, %v2314
  %2739 = vadd.xlane.f32.xlu0 %v2738
  %v2740 = vpop.xlane.xlu0 %2739
  %v2741 = vadd.f32 %v1462, %v1464
  %v2742 = vadd.f32 %v2741, %v1765
  %v2743 = vadd.f32 %v2742, %v1767
  %v2744 = vadd.f32 %v2743, %v2068
  %v2745 = vadd.f32 %v2744, %v2070
  %v2746 = vadd.f32 %v2745, %v2319
  %2747 = vadd.xlane.f32.xlu0 %v2746
  %v2748 = vpop.xlane.xlu0 %2747
  %v2749 = vadd.f32 %v1466, %v1468
  %v2750 = vadd.f32 %v2749, %v1769
  %v2751 = vadd.f32 %v2750, %v1771
  %v2752 = vadd.f32 %v2751, %v2072
  %v2753 = vadd.f32 %v2752, %v2074
  %v2754 = vadd.f32 %v2753, %v2322
  %2755 = vadd.xlane.f32.xlu0 %v2754
  %v2756 = vpop.xlane.xlu0 %2755
  %v2757 = vmul.f32 %v1202, %v1202
  %v2758 = vmul.f32 %v1204, %v1204
  %v2759 = vmul.f32 %v1505, %v1505
  %v2760 = vmul.f32 %v1507, %v1507
  %v2761 = vmul.f32 %v1808, %v1808
  %v2762 = vmul.f32 %v1810, %v1810
  %v2763 = vmul.f32 %v2111, %v2111
  %v2764 = vmul.f32 %v1206, %v1206
  %v2765 = vmul.f32 %v1208, %v1208
  %v2766 = vmul.f32 %v1509, %v1509
  %v2767 = vmul.f32 %v1511, %v1511
  %v2768 = vmul.f32 %v1812, %v1812
  %v2769 = vmul.f32 %v1814, %v1814
  %v2770 = vmul.f32 %v2114, %v2114
  %v2771 = vmul.f32 %v1212, %v1212
  %v2772 = vmul.f32 %v1214, %v1214
  %v2773 = vmul.f32 %v1515, %v1515
  %v2774 = vmul.f32 %v1517, %v1517
  %v2775 = vmul.f32 %v1818, %v1818
  %v2776 = vmul.f32 %v1820, %v1820
  %v2777 = vmul.f32 %v2119, %v2119
  %v2778 = vmul.f32 %v1216, %v1216
  %v2779 = vmul.f32 %v1218, %v1218
  %v2780 = vmul.f32 %v1519, %v1519
  %v2781 = vmul.f32 %v1521, %v1521
  %v2782 = vmul.f32 %v1822, %v1822
  %v2783 = vmul.f32 %v1824, %v1824
  %v2784 = vmul.f32 %v2122, %v2122
  %v2785 = vmul.f32 %v1222, %v1222
  %v2786 = vmul.f32 %v1224, %v1224
  %v2787 = vmul.f32 %v1525, %v1525
  %v2788 = vmul.f32 %v1527, %v1527
  %v2789 = vmul.f32 %v1828, %v1828
  %v2790 = vmul.f32 %v1830, %v1830
  %v2791 = vmul.f32 %v2127, %v2127
  %v2792 = vmul.f32 %v1226, %v1226
  %v2793 = vmul.f32 %v1228, %v1228
  %v2794 = vmul.f32 %v1529, %v1529
  %v2795 = vmul.f32 %v1531, %v1531
  %v2796 = vmul.f32 %v1832, %v1832
  %v2797 = vmul.f32 %v1834, %v1834
  %v2798 = vmul.f32 %v2130, %v2130
  %v2799 = vmul.f32 %v1232, %v1232
  %v2800 = vmul.f32 %v1234, %v1234
  %v2801 = vmul.f32 %v1535, %v1535
  %v2802 = vmul.f32 %v1537, %v1537
  %v2803 = vmul.f32 %v1838, %v1838
  %v2804 = vmul.f32 %v1840, %v1840
  %v2805 = vmul.f32 %v2135, %v2135
  %v2806 = vmul.f32 %v1236, %v1236
  %v2807 = vmul.f32 %v1238, %v1238
  %v2808 = vmul.f32 %v1539, %v1539
  %v2809 = vmul.f32 %v1541, %v1541
  %v2810 = vmul.f32 %v1842, %v1842
  %v2811 = vmul.f32 %v1844, %v1844
  %v2812 = vmul.f32 %v2138, %v2138
  %v2813 = vmul.f32 %v1242, %v1242
  %v2814 = vmul.f32 %v1244, %v1244
  %v2815 = vmul.f32 %v1545, %v1545
  %v2816 = vmul.f32 %v1547, %v1547
  %v2817 = vmul.f32 %v1848, %v1848
  %v2818 = vmul.f32 %v1850, %v1850
  %v2819 = vmul.f32 %v2143, %v2143
  %v2820 = vmul.f32 %v1246, %v1246
  %v2821 = vmul.f32 %v1248, %v1248
  %v2822 = vmul.f32 %v1549, %v1549
  %v2823 = vmul.f32 %v1551, %v1551
  %v2824 = vmul.f32 %v1852, %v1852
  %v2825 = vmul.f32 %v1854, %v1854
  %v2826 = vmul.f32 %v2146, %v2146
  %v2827 = vmul.f32 %v1252, %v1252
  %v2828 = vmul.f32 %v1254, %v1254
  %v2829 = vmul.f32 %v1555, %v1555
  %v2830 = vmul.f32 %v1557, %v1557
  %v2831 = vmul.f32 %v1858, %v1858
  %v2832 = vmul.f32 %v1860, %v1860
  %v2833 = vmul.f32 %v2151, %v2151
  %v2834 = vmul.f32 %v1256, %v1256
  %v2835 = vmul.f32 %v1258, %v1258
  %v2836 = vmul.f32 %v1559, %v1559
  %v2837 = vmul.f32 %v1561, %v1561
  %v2838 = vmul.f32 %v1862, %v1862
  %v2839 = vmul.f32 %v1864, %v1864
  %v2840 = vmul.f32 %v2154, %v2154
  %v2841 = vmul.f32 %v1262, %v1262
  %v2842 = vmul.f32 %v1264, %v1264
  %v2843 = vmul.f32 %v1565, %v1565
  %v2844 = vmul.f32 %v1567, %v1567
  %v2845 = vmul.f32 %v1868, %v1868
  %v2846 = vmul.f32 %v1870, %v1870
  %v2847 = vmul.f32 %v2159, %v2159
  %v2848 = vmul.f32 %v1266, %v1266
  %v2849 = vmul.f32 %v1268, %v1268
  %v2850 = vmul.f32 %v1569, %v1569
  %v2851 = vmul.f32 %v1571, %v1571
  %v2852 = vmul.f32 %v1872, %v1872
  %v2853 = vmul.f32 %v1874, %v1874
  %v2854 = vmul.f32 %v2162, %v2162
  %v2855 = vmul.f32 %v1272, %v1272
  %v2856 = vmul.f32 %v1274, %v1274
  %v2857 = vmul.f32 %v1575, %v1575
  %v2858 = vmul.f32 %v1577, %v1577
  %v2859 = vmul.f32 %v1878, %v1878
  %v2860 = vmul.f32 %v1880, %v1880
  %v2861 = vmul.f32 %v2167, %v2167
  %v2862 = vmul.f32 %v1276, %v1276
  %v2863 = vmul.f32 %v1278, %v1278
  %v2864 = vmul.f32 %v1579, %v1579
  %v2865 = vmul.f32 %v1581, %v1581
  %v2866 = vmul.f32 %v1882, %v1882
  %v2867 = vmul.f32 %v1884, %v1884
  %v2868 = vmul.f32 %v2170, %v2170
  %v2869 = vmul.f32 %v1282, %v1282
  %v2870 = vmul.f32 %v1284, %v1284
  %v2871 = vmul.f32 %v1585, %v1585
  %v2872 = vmul.f32 %v1587, %v1587
  %v2873 = vmul.f32 %v1888, %v1888
  %v2874 = vmul.f32 %v1890, %v1890
  %v2875 = vmul.f32 %v2175, %v2175
  %v2876 = vmul.f32 %v1286, %v1286
  %v2877 = vmul.f32 %v1288, %v1288
  %v2878 = vmul.f32 %v1589, %v1589
  %v2879 = vmul.f32 %v1591, %v1591
  %v2880 = vmul.f32 %v1892, %v1892
  %v2881 = vmul.f32 %v1894, %v1894
  %v2882 = vmul.f32 %v2178, %v2178
  %v2883 = vmul.f32 %v1292, %v1292
  %v2884 = vmul.f32 %v1294, %v1294
  %v2885 = vmul.f32 %v1595, %v1595
  %v2886 = vmul.f32 %v1597, %v1597
  %v2887 = vmul.f32 %v1898, %v1898
  %v2888 = vmul.f32 %v1900, %v1900
  %v2889 = vmul.f32 %v2183, %v2183
  %v2890 = vmul.f32 %v1296, %v1296
  %v2891 = vmul.f32 %v1298, %v1298
  %v2892 = vmul.f32 %v1599, %v1599
  %v2893 = vmul.f32 %v1601, %v1601
  %v2894 = vmul.f32 %v1902, %v1902
  %v2895 = vmul.f32 %v1904, %v1904
  %v2896 = vmul.f32 %v2186, %v2186
  %v2897 = vmul.f32 %v1302, %v1302
  %v2898 = vmul.f32 %v1304, %v1304
  %v2899 = vmul.f32 %v1605, %v1605
  %v2900 = vmul.f32 %v1607, %v1607
  %v2901 = vmul.f32 %v1908, %v1908
  %v2902 = vmul.f32 %v1910, %v1910
  %v2903 = vmul.f32 %v2191, %v2191
  %v2904 = vmul.f32 %v1306, %v1306
  %v2905 = vmul.f32 %v1308, %v1308
  %v2906 = vmul.f32 %v1609, %v1609
  %v2907 = vmul.f32 %v1611, %v1611
  %v2908 = vmul.f32 %v1912, %v1912
  %v2909 = vmul.f32 %v1914, %v1914
  %v2910 = vmul.f32 %v2194, %v2194
  %v2911 = vmul.f32 %v1312, %v1312
  %v2912 = vmul.f32 %v1314, %v1314
  %v2913 = vmul.f32 %v1615, %v1615
  %v2914 = vmul.f32 %v1617, %v1617
  %v2915 = vmul.f32 %v1918, %v1918
  %v2916 = vmul.f32 %v1920, %v1920
  %v2917 = vmul.f32 %v2199, %v2199
  %v2918 = vmul.f32 %v1316, %v1316
  %v2919 = vmul.f32 %v1318, %v1318
  %v2920 = vmul.f32 %v1619, %v1619
  %v2921 = vmul.f32 %v1621, %v1621
  %v2922 = vmul.f32 %v1922, %v1922
  %v2923 = vmul.f32 %v1924, %v1924
  %v2924 = vmul.f32 %v2202, %v2202
  %v2925 = vmul.f32 %v1322, %v1322
  %v2926 = vmul.f32 %v1324, %v1324
  %v2927 = vmul.f32 %v1625, %v1625
  %v2928 = vmul.f32 %v1627, %v1627
  %v2929 = vmul.f32 %v1928, %v1928
  %v2930 = vmul.f32 %v1930, %v1930
  %v2931 = vmul.f32 %v2207, %v2207
  %v2932 = vmul.f32 %v1326, %v1326
  %v2933 = vmul.f32 %v1328, %v1328
  %v2934 = vmul.f32 %v1629, %v1629
  %v2935 = vmul.f32 %v1631, %v1631
  %v2936 = vmul.f32 %v1932, %v1932
  %v2937 = vmul.f32 %v1934, %v1934
  %v2938 = vmul.f32 %v2210, %v2210
  %v2939 = vmul.f32 %v1332, %v1332
  %v2940 = vmul.f32 %v1334, %v1334
  %v2941 = vmul.f32 %v1635, %v1635
  %v2942 = vmul.f32 %v1637, %v1637
  %v2943 = vmul.f32 %v1938, %v1938
  %v2944 = vmul.f32 %v1940, %v1940
  %v2945 = vmul.f32 %v2215, %v2215
  %v2946 = vmul.f32 %v1336, %v1336
  %v2947 = vmul.f32 %v1338, %v1338
  %v2948 = vmul.f32 %v1639, %v1639
  %v2949 = vmul.f32 %v1641, %v1641
  %v2950 = vmul.f32 %v1942, %v1942
  %v2951 = vmul.f32 %v1944, %v1944
  %v2952 = vmul.f32 %v2218, %v2218
  %v2953 = vmul.f32 %v1342, %v1342
  %v2954 = vmul.f32 %v1344, %v1344
  %v2955 = vmul.f32 %v1645, %v1645
  %v2956 = vmul.f32 %v1647, %v1647
  %v2957 = vmul.f32 %v1948, %v1948
  %v2958 = vmul.f32 %v1950, %v1950
  %v2959 = vmul.f32 %v2223, %v2223
  %v2960 = vmul.f32 %v1346, %v1346
  %v2961 = vmul.f32 %v1348, %v1348
  %v2962 = vmul.f32 %v1649, %v1649
  %v2963 = vmul.f32 %v1651, %v1651
  %v2964 = vmul.f32 %v1952, %v1952
  %v2965 = vmul.f32 %v1954, %v1954
  %v2966 = vmul.f32 %v2226, %v2226
  %v2967 = vmul.f32 %v1352, %v1352
  %v2968 = vmul.f32 %v1354, %v1354
  %v2969 = vmul.f32 %v1655, %v1655
  %v2970 = vmul.f32 %v1657, %v1657
  %v2971 = vmul.f32 %v1958, %v1958
  %v2972 = vmul.f32 %v1960, %v1960
  %v2973 = vmul.f32 %v2231, %v2231
  %v2974 = vmul.f32 %v1356, %v1356
  %v2975 = vmul.f32 %v1358, %v1358
  %v2976 = vmul.f32 %v1659, %v1659
  %v2977 = vmul.f32 %v1661, %v1661
  %v2978 = vmul.f32 %v1962, %v1962
  %v2979 = vmul.f32 %v1964, %v1964
  %v2980 = vmul.f32 %v2234, %v2234
  %v2981 = vmul.f32 %v1362, %v1362
  %v2982 = vmul.f32 %v1364, %v1364
  %v2983 = vmul.f32 %v1665, %v1665
  %v2984 = vmul.f32 %v1667, %v1667
  %v2985 = vmul.f32 %v1968, %v1968
  %v2986 = vmul.f32 %v1970, %v1970
  %v2987 = vmul.f32 %v2239, %v2239
  %v2988 = vmul.f32 %v1366, %v1366
  %v2989 = vmul.f32 %v1368, %v1368
  %v2990 = vmul.f32 %v1669, %v1669
  %v2991 = vmul.f32 %v1671, %v1671
  %v2992 = vmul.f32 %v1972, %v1972
  %v2993 = vmul.f32 %v1974, %v1974
  %v2994 = vmul.f32 %v2242, %v2242
  %v2995 = vmul.f32 %v1372, %v1372
  %v2996 = vmul.f32 %v1374, %v1374
  %v2997 = vmul.f32 %v1675, %v1675
  %v2998 = vmul.f32 %v1677, %v1677
  %v2999 = vmul.f32 %v1978, %v1978
  %v3000 = vmul.f32 %v1980, %v1980
  %v3001 = vmul.f32 %v2247, %v2247
  %v3002 = vmul.f32 %v1376, %v1376
  %v3003 = vmul.f32 %v1378, %v1378
  %v3004 = vmul.f32 %v1679, %v1679
  %v3005 = vmul.f32 %v1681, %v1681
  %v3006 = vmul.f32 %v1982, %v1982
  %v3007 = vmul.f32 %v1984, %v1984
  %v3008 = vmul.f32 %v2250, %v2250
  %v3009 = vmul.f32 %v1382, %v1382
  %v3010 = vmul.f32 %v1384, %v1384
  %v3011 = vmul.f32 %v1685, %v1685
  %v3012 = vmul.f32 %v1687, %v1687
  %v3013 = vmul.f32 %v1988, %v1988
  %v3014 = vmul.f32 %v1990, %v1990
  %v3015 = vmul.f32 %v2255, %v2255
  %v3016 = vmul.f32 %v1386, %v1386
  %v3017 = vmul.f32 %v1388, %v1388
  %v3018 = vmul.f32 %v1689, %v1689
  %v3019 = vmul.f32 %v1691, %v1691
  %v3020 = vmul.f32 %v1992, %v1992
  %v3021 = vmul.f32 %v1994, %v1994
  %v3022 = vmul.f32 %v2258, %v2258
  %v3023 = vmul.f32 %v1392, %v1392
  %v3024 = vmul.f32 %v1394, %v1394
  %v3025 = vmul.f32 %v1695, %v1695
  %v3026 = vmul.f32 %v1697, %v1697
  %v3027 = vmul.f32 %v1998, %v1998
  %v3028 = vmul.f32 %v2000, %v2000
  %v3029 = vmul.f32 %v2263, %v2263
  %v3030 = vmul.f32 %v1396, %v1396
  %v3031 = vmul.f32 %v1398, %v1398
  %v3032 = vmul.f32 %v1699, %v1699
  %v3033 = vmul.f32 %v1701, %v1701
  %v3034 = vmul.f32 %v2002, %v2002
  %v3035 = vmul.f32 %v2004, %v2004
  %v3036 = vmul.f32 %v2266, %v2266
  %v3037 = vmul.f32 %v1402, %v1402
  %v3038 = vmul.f32 %v1404, %v1404
  %v3039 = vmul.f32 %v1705, %v1705
  %v3040 = vmul.f32 %v1707, %v1707
  %v3041 = vmul.f32 %v2008, %v2008
  %v3042 = vmul.f32 %v2010, %v2010
  %v3043 = vmul.f32 %v2271, %v2271
  %v3044 = vmul.f32 %v1406, %v1406
  %v3045 = vmul.f32 %v1408, %v1408
  %v3046 = vmul.f32 %v1709, %v1709
  %v3047 = vmul.f32 %v1711, %v1711
  %v3048 = vmul.f32 %v2012, %v2012
  %v3049 = vmul.f32 %v2014, %v2014
  %v3050 = vmul.f32 %v2274, %v2274
  %v3051 = vmul.f32 %v1412, %v1412
  %v3052 = vmul.f32 %v1414, %v1414
  %v3053 = vmul.f32 %v1715, %v1715
  %v3054 = vmul.f32 %v1717, %v1717
  %v3055 = vmul.f32 %v2018, %v2018
  %v3056 = vmul.f32 %v2020, %v2020
  %v3057 = vmul.f32 %v2279, %v2279
  %v3058 = vmul.f32 %v1416, %v1416
  %v3059 = vmul.f32 %v1418, %v1418
  %v3060 = vmul.f32 %v1719, %v1719
  %v3061 = vmul.f32 %v1721, %v1721
  %v3062 = vmul.f32 %v2022, %v2022
  %v3063 = vmul.f32 %v2024, %v2024
  %v3064 = vmul.f32 %v2282, %v2282
  %v3065 = vmul.f32 %v1422, %v1422
  %v3066 = vmul.f32 %v1424, %v1424
  %v3067 = vmul.f32 %v1725, %v1725
  %v3068 = vmul.f32 %v1727, %v1727
  %v3069 = vmul.f32 %v2028, %v2028
  %v3070 = vmul.f32 %v2030, %v2030
  %v3071 = vmul.f32 %v2287, %v2287
  %v3072 = vmul.f32 %v1426, %v1426
  %v3073 = vmul.f32 %v1428, %v1428
  %v3074 = vmul.f32 %v1729, %v1729
  %v3075 = vmul.f32 %v1731, %v1731
  %v3076 = vmul.f32 %v2032, %v2032
  %v3077 = vmul.f32 %v2034, %v2034
  %v3078 = vmul.f32 %v2290, %v2290
  %v3079 = vmul.f32 %v1432, %v1432
  %v3080 = vmul.f32 %v1434, %v1434
  %v3081 = vmul.f32 %v1735, %v1735
  %v3082 = vmul.f32 %v1737, %v1737
  %v3083 = vmul.f32 %v2038, %v2038
  %v3084 = vmul.f32 %v2040, %v2040
  %v3085 = vmul.f32 %v2295, %v2295
  %v3086 = vmul.f32 %v1436, %v1436
  %v3087 = vmul.f32 %v1438, %v1438
  %v3088 = vmul.f32 %v1739, %v1739
  %v3089 = vmul.f32 %v1741, %v1741
  %v3090 = vmul.f32 %v2042, %v2042
  %v3091 = vmul.f32 %v2044, %v2044
  %v3092 = vmul.f32 %v2298, %v2298
  %v3093 = vmul.f32 %v1442, %v1442
  %v3094 = vmul.f32 %v1444, %v1444
  %v3095 = vmul.f32 %v1745, %v1745
  %v3096 = vmul.f32 %v1747, %v1747
  %v3097 = vmul.f32 %v2048, %v2048
  %v3098 = vmul.f32 %v2050, %v2050
  %v3099 = vmul.f32 %v2303, %v2303
  %v3100 = vmul.f32 %v1446, %v1446
  %v3101 = vmul.f32 %v1448, %v1448
  %v3102 = vmul.f32 %v1749, %v1749
  %v3103 = vmul.f32 %v1751, %v1751
  %v3104 = vmul.f32 %v2052, %v2052
  %v3105 = vmul.f32 %v2054, %v2054
  %v3106 = vmul.f32 %v2306, %v2306
  %v3107 = vmul.f32 %v1452, %v1452
  %v3108 = vmul.f32 %v1454, %v1454
  %v3109 = vmul.f32 %v1755, %v1755
  %v3110 = vmul.f32 %v1757, %v1757
  %v3111 = vmul.f32 %v2058, %v2058
  %v3112 = vmul.f32 %v2060, %v2060
  %v3113 = vmul.f32 %v2311, %v2311
  %v3114 = vmul.f32 %v1456, %v1456
  %v3115 = vmul.f32 %v1458, %v1458
  %v3116 = vmul.f32 %v1759, %v1759
  %v3117 = vmul.f32 %v1761, %v1761
  %v3118 = vmul.f32 %v2062, %v2062
  %v3119 = vmul.f32 %v2064, %v2064
  %v3120 = vmul.f32 %v2314, %v2314
  %v3121 = vmul.f32 %v1462, %v1462
  %v3122 = vmul.f32 %v1464, %v1464
  %v3123 = vmul.f32 %v1765, %v1765
  %v3124 = vmul.f32 %v1767, %v1767
  %v3125 = vmul.f32 %v2068, %v2068
  %v3126 = vmul.f32 %v2070, %v2070
  %v3127 = vmul.f32 %v2319, %v2319
  %v3128 = vmul.f32 %v1466, %v1466
  %v3129 = vmul.f32 %v1468, %v1468
  %v3130 = vmul.f32 %v1769, %v1769
  %v3131 = vmul.f32 %v1771, %v1771
  %v3132 = vmul.f32 %v2072, %v2072
  %v3133 = vmul.f32 %v2074, %v2074
  %v3134 = vmul.f32 %v2322, %v2322
  %v3135 = vadd.f32 %v2757, %v2758
  %v3136 = vadd.f32 %v3135, %v2759
  %v3137 = vadd.f32 %v3136, %v2760
  %v3138 = vadd.f32 %v3137, %v2761
  %v3139 = vadd.f32 %v3138, %v2762
  %v3140 = vadd.f32 %v3139, %v2763
  %3141 = vadd.xlane.f32.xlu0 %v3140
  %v3142 = vpop.xlane.xlu0 %3141
  %v3143 = vadd.f32 %v2764, %v2765
  %v3144 = vadd.f32 %v3143, %v2766
  %v3145 = vadd.f32 %v3144, %v2767
  %v3146 = vadd.f32 %v3145, %v2768
  %v3147 = vadd.f32 %v3146, %v2769
  %v3148 = vadd.f32 %v3147, %v2770
  %3149 = vadd.xlane.f32.xlu0 %v3148
  %v3150 = vpop.xlane.xlu0 %3149
  %v3151 = vadd.f32 %v2771, %v2772
  %v3152 = vadd.f32 %v3151, %v2773
  %v3153 = vadd.f32 %v3152, %v2774
  %v3154 = vadd.f32 %v3153, %v2775
  %v3155 = vadd.f32 %v3154, %v2776
  %v3156 = vadd.f32 %v3155, %v2777
  %3157 = vadd.xlane.f32.xlu0 %v3156
  %v3158 = vpop.xlane.xlu0 %3157
  %v3159 = vadd.f32 %v2778, %v2779
  %v3160 = vadd.f32 %v3159, %v2780
  %v3161 = vadd.f32 %v3160, %v2781
  %v3162 = vadd.f32 %v3161, %v2782
  %v3163 = vadd.f32 %v3162, %v2783
  %v3164 = vadd.f32 %v3163, %v2784
  %3165 = vadd.xlane.f32.xlu0 %v3164
  %v3166 = vpop.xlane.xlu0 %3165
  %v3167 = vadd.f32 %v2785, %v2786
  %v3168 = vadd.f32 %v3167, %v2787
  %v3169 = vadd.f32 %v3168, %v2788
  %v3170 = vadd.f32 %v3169, %v2789
  %v3171 = vadd.f32 %v3170, %v2790
  %v3172 = vadd.f32 %v3171, %v2791
  %3173 = vadd.xlane.f32.xlu0 %v3172
  %v3174 = vpop.xlane.xlu0 %3173
  %v3175 = vadd.f32 %v2792, %v2793
  %v3176 = vadd.f32 %v3175, %v2794
  %v3177 = vadd.f32 %v3176, %v2795
  %v3178 = vadd.f32 %v3177, %v2796
  %v3179 = vadd.f32 %v3178, %v2797
  %v3180 = vadd.f32 %v3179, %v2798
  %3181 = vadd.xlane.f32.xlu0 %v3180
  %v3182 = vpop.xlane.xlu0 %3181
  %v3183 = vadd.f32 %v2799, %v2800
  %v3184 = vadd.f32 %v3183, %v2801
  %v3185 = vadd.f32 %v3184, %v2802
  %v3186 = vadd.f32 %v3185, %v2803
  %v3187 = vadd.f32 %v3186, %v2804
  %v3188 = vadd.f32 %v3187, %v2805
  %3189 = vadd.xlane.f32.xlu0 %v3188
  %v3190 = vpop.xlane.xlu0 %3189
  %v3191 = vadd.f32 %v2806, %v2807
  %v3192 = vadd.f32 %v3191, %v2808
  %v3193 = vadd.f32 %v3192, %v2809
  %v3194 = vadd.f32 %v3193, %v2810
  %v3195 = vadd.f32 %v3194, %v2811
  %v3196 = vadd.f32 %v3195, %v2812
  %3197 = vadd.xlane.f32.xlu0 %v3196
  %v3198 = vpop.xlane.xlu0 %3197
  %v3199 = vadd.f32 %v2813, %v2814
  %v3200 = vadd.f32 %v3199, %v2815
  %v3201 = vadd.f32 %v3200, %v2816
  %v3202 = vadd.f32 %v3201, %v2817
  %v3203 = vadd.f32 %v3202, %v2818
  %v3204 = vadd.f32 %v3203, %v2819
  %3205 = vadd.xlane.f32.xlu0 %v3204
  %v3206 = vpop.xlane.xlu0 %3205
  %v3207 = vadd.f32 %v2820, %v2821
  %v3208 = vadd.f32 %v3207, %v2822
  %v3209 = vadd.f32 %v3208, %v2823
  %v3210 = vadd.f32 %v3209, %v2824
  %v3211 = vadd.f32 %v3210, %v2825
  %v3212 = vadd.f32 %v3211, %v2826
  %3213 = vadd.xlane.f32.xlu0 %v3212
  %v3214 = vpop.xlane.xlu0 %3213
  %v3215 = vadd.f32 %v2827, %v2828
  %v3216 = vadd.f32 %v3215, %v2829
  %v3217 = vadd.f32 %v3216, %v2830
  %v3218 = vadd.f32 %v3217, %v2831
  %v3219 = vadd.f32 %v3218, %v2832
  %v3220 = vadd.f32 %v3219, %v2833
  %3221 = vadd.xlane.f32.xlu0 %v3220
  %v3222 = vpop.xlane.xlu0 %3221
  %v3223 = vadd.f32 %v2834, %v2835
  %v3224 = vadd.f32 %v3223, %v2836
  %v3225 = vadd.f32 %v3224, %v2837
  %v3226 = vadd.f32 %v3225, %v2838
  %v3227 = vadd.f32 %v3226, %v2839
  %v3228 = vadd.f32 %v3227, %v2840
  %3229 = vadd.xlane.f32.xlu0 %v3228
  %v3230 = vpop.xlane.xlu0 %3229
  %v3231 = vadd.f32 %v2841, %v2842
  %v3232 = vadd.f32 %v3231, %v2843
  %v3233 = vadd.f32 %v3232, %v2844
  %v3234 = vadd.f32 %v3233, %v2845
  %v3235 = vadd.f32 %v3234, %v2846
  %v3236 = vadd.f32 %v3235, %v2847
  %3237 = vadd.xlane.f32.xlu0 %v3236
  %v3238 = vpop.xlane.xlu0 %3237
  %v3239 = vadd.f32 %v2848, %v2849
  %v3240 = vadd.f32 %v3239, %v2850
  %v3241 = vadd.f32 %v3240, %v2851
  %v3242 = vadd.f32 %v3241, %v2852
  %v3243 = vadd.f32 %v3242, %v2853
  %v3244 = vadd.f32 %v3243, %v2854
  %3245 = vadd.xlane.f32.xlu0 %v3244
  %v3246 = vpop.xlane.xlu0 %3245
  %v3247 = vadd.f32 %v2855, %v2856
  %v3248 = vadd.f32 %v3247, %v2857
  %v3249 = vadd.f32 %v3248, %v2858
  %v3250 = vadd.f32 %v3249, %v2859
  %v3251 = vadd.f32 %v3250, %v2860
  %v3252 = vadd.f32 %v3251, %v2861
  %3253 = vadd.xlane.f32.xlu0 %v3252
  %v3254 = vpop.xlane.xlu0 %3253
  %v3255 = vadd.f32 %v2862, %v2863
  %v3256 = vadd.f32 %v3255, %v2864
  %v3257 = vadd.f32 %v3256, %v2865
  %v3258 = vadd.f32 %v3257, %v2866
  %v3259 = vadd.f32 %v3258, %v2867
  %v3260 = vadd.f32 %v3259, %v2868
  %3261 = vadd.xlane.f32.xlu0 %v3260
  %v3262 = vpop.xlane.xlu0 %3261
  %v3263 = vadd.f32 %v2869, %v2870
  %v3264 = vadd.f32 %v3263, %v2871
  %v3265 = vadd.f32 %v3264, %v2872
  %v3266 = vadd.f32 %v3265, %v2873
  %v3267 = vadd.f32 %v3266, %v2874
  %v3268 = vadd.f32 %v3267, %v2875
  %3269 = vadd.xlane.f32.xlu0 %v3268
  %v3270 = vpop.xlane.xlu0 %3269
  %v3271 = vadd.f32 %v2876, %v2877
  %v3272 = vadd.f32 %v3271, %v2878
  %v3273 = vadd.f32 %v3272, %v2879
  %v3274 = vadd.f32 %v3273, %v2880
  %v3275 = vadd.f32 %v3274, %v2881
  %v3276 = vadd.f32 %v3275, %v2882
  %3277 = vadd.xlane.f32.xlu0 %v3276
  %v3278 = vpop.xlane.xlu0 %3277
  %v3279 = vadd.f32 %v2883, %v2884
  %v3280 = vadd.f32 %v3279, %v2885
  %v3281 = vadd.f32 %v3280, %v2886
  %v3282 = vadd.f32 %v3281, %v2887
  %v3283 = vadd.f32 %v3282, %v2888
  %v3284 = vadd.f32 %v3283, %v2889
  %3285 = vadd.xlane.f32.xlu0 %v3284
  %v3286 = vpop.xlane.xlu0 %3285
  %v3287 = vadd.f32 %v2890, %v2891
  %v3288 = vadd.f32 %v3287, %v2892
  %v3289 = vadd.f32 %v3288, %v2893
  %v3290 = vadd.f32 %v3289, %v2894
  %v3291 = vadd.f32 %v3290, %v2895
  %v3292 = vadd.f32 %v3291, %v2896
  %3293 = vadd.xlane.f32.xlu0 %v3292
  %v3294 = vpop.xlane.xlu0 %3293
  %v3295 = vadd.f32 %v2897, %v2898
  %v3296 = vadd.f32 %v3295, %v2899
  %v3297 = vadd.f32 %v3296, %v2900
  %v3298 = vadd.f32 %v3297, %v2901
  %v3299 = vadd.f32 %v3298, %v2902
  %v3300 = vadd.f32 %v3299, %v2903
  %3301 = vadd.xlane.f32.xlu0 %v3300
  %v3302 = vpop.xlane.xlu0 %3301
  %v3303 = vadd.f32 %v2904, %v2905
  %v3304 = vadd.f32 %v3303, %v2906
  %v3305 = vadd.f32 %v3304, %v2907
  %v3306 = vadd.f32 %v3305, %v2908
  %v3307 = vadd.f32 %v3306, %v2909
  %v3308 = vadd.f32 %v3307, %v2910
  %3309 = vadd.xlane.f32.xlu0 %v3308
  %v3310 = vpop.xlane.xlu0 %3309
  %v3311 = vadd.f32 %v2911, %v2912
  %v3312 = vadd.f32 %v3311, %v2913
  %v3313 = vadd.f32 %v3312, %v2914
  %v3314 = vadd.f32 %v3313, %v2915
  %v3315 = vadd.f32 %v3314, %v2916
  %v3316 = vadd.f32 %v3315, %v2917
  %3317 = vadd.xlane.f32.xlu0 %v3316
  %v3318 = vpop.xlane.xlu0 %3317
  %v3319 = vadd.f32 %v2918, %v2919
  %v3320 = vadd.f32 %v3319, %v2920
  %v3321 = vadd.f32 %v3320, %v2921
  %v3322 = vadd.f32 %v3321, %v2922
  %v3323 = vadd.f32 %v3322, %v2923
  %v3324 = vadd.f32 %v3323, %v2924
  %3325 = vadd.xlane.f32.xlu0 %v3324
  %v3326 = vpop.xlane.xlu0 %3325
  %v3327 = vadd.f32 %v2925, %v2926
  %v3328 = vadd.f32 %v3327, %v2927
  %v3329 = vadd.f32 %v3328, %v2928
  %v3330 = vadd.f32 %v3329, %v2929
  %v3331 = vadd.f32 %v3330, %v2930
  %v3332 = vadd.f32 %v3331, %v2931
  %3333 = vadd.xlane.f32.xlu0 %v3332
  %v3334 = vpop.xlane.xlu0 %3333
  %v3335 = vadd.f32 %v2932, %v2933
  %v3336 = vadd.f32 %v3335, %v2934
  %v3337 = vadd.f32 %v3336, %v2935
  %v3338 = vadd.f32 %v3337, %v2936
  %v3339 = vadd.f32 %v3338, %v2937
  %v3340 = vadd.f32 %v3339, %v2938
  %3341 = vadd.xlane.f32.xlu0 %v3340
  %v3342 = vpop.xlane.xlu0 %3341
  %v3343 = vadd.f32 %v2939, %v2940
  %v3344 = vadd.f32 %v3343, %v2941
  %v3345 = vadd.f32 %v3344, %v2942
  %v3346 = vadd.f32 %v3345, %v2943
  %v3347 = vadd.f32 %v3346, %v2944
  %v3348 = vadd.f32 %v3347, %v2945
  %3349 = vadd.xlane.f32.xlu0 %v3348
  %v3350 = vpop.xlane.xlu0 %3349
  %v3351 = vadd.f32 %v2946, %v2947
  %v3352 = vadd.f32 %v3351, %v2948
  %v3353 = vadd.f32 %v3352, %v2949
  %v3354 = vadd.f32 %v3353, %v2950
  %v3355 = vadd.f32 %v3354, %v2951
  %v3356 = vadd.f32 %v3355, %v2952
  %3357 = vadd.xlane.f32.xlu0 %v3356
  %v3358 = vpop.xlane.xlu0 %3357
  %v3359 = vadd.f32 %v2953, %v2954
  %v3360 = vadd.f32 %v3359, %v2955
  %v3361 = vadd.f32 %v3360, %v2956
  %v3362 = vadd.f32 %v3361, %v2957
  %v3363 = vadd.f32 %v3362, %v2958
  %v3364 = vadd.f32 %v3363, %v2959
  %3365 = vadd.xlane.f32.xlu0 %v3364
  %v3366 = vpop.xlane.xlu0 %3365
  %v3367 = vadd.f32 %v2960, %v2961
  %v3368 = vadd.f32 %v3367, %v2962
  %v3369 = vadd.f32 %v3368, %v2963
  %v3370 = vadd.f32 %v3369, %v2964
  %v3371 = vadd.f32 %v3370, %v2965
  %v3372 = vadd.f32 %v3371, %v2966
  %3373 = vadd.xlane.f32.xlu0 %v3372
  %v3374 = vpop.xlane.xlu0 %3373
  %v3375 = vadd.f32 %v2967, %v2968
  %v3376 = vadd.f32 %v3375, %v2969
  %v3377 = vadd.f32 %v3376, %v2970
  %v3378 = vadd.f32 %v3377, %v2971
  %v3379 = vadd.f32 %v3378, %v2972
  %v3380 = vadd.f32 %v3379, %v2973
  %3381 = vadd.xlane.f32.xlu0 %v3380
  %v3382 = vpop.xlane.xlu0 %3381
  %v3383 = vadd.f32 %v2974, %v2975
  %v3384 = vadd.f32 %v3383, %v2976
  %v3385 = vadd.f32 %v3384, %v2977
  %v3386 = vadd.f32 %v3385, %v2978
  %v3387 = vadd.f32 %v3386, %v2979
  %v3388 = vadd.f32 %v3387, %v2980
  %3389 = vadd.xlane.f32.xlu0 %v3388
  %v3390 = vpop.xlane.xlu0 %3389
  %v3391 = vadd.f32 %v2981, %v2982
  %v3392 = vadd.f32 %v3391, %v2983
  %v3393 = vadd.f32 %v3392, %v2984
  %v3394 = vadd.f32 %v3393, %v2985
  %v3395 = vadd.f32 %v3394, %v2986
  %v3396 = vadd.f32 %v3395, %v2987
  %3397 = vadd.xlane.f32.xlu0 %v3396
  %v3398 = vpop.xlane.xlu0 %3397
  %v3399 = vadd.f32 %v2988, %v2989
  %v3400 = vadd.f32 %v3399, %v2990
  %v3401 = vadd.f32 %v3400, %v2991
  %v3402 = vadd.f32 %v3401, %v2992
  %v3403 = vadd.f32 %v3402, %v2993
  %v3404 = vadd.f32 %v3403, %v2994
  %3405 = vadd.xlane.f32.xlu0 %v3404
  %v3406 = vpop.xlane.xlu0 %3405
  %v3407 = vadd.f32 %v2995, %v2996
  %v3408 = vadd.f32 %v3407, %v2997
  %v3409 = vadd.f32 %v3408, %v2998
  %v3410 = vadd.f32 %v3409, %v2999
  %v3411 = vadd.f32 %v3410, %v3000
  %v3412 = vadd.f32 %v3411, %v3001
  %3413 = vadd.xlane.f32.xlu0 %v3412
  %v3414 = vpop.xlane.xlu0 %3413
  %v3415 = vadd.f32 %v3002, %v3003
  %v3416 = vadd.f32 %v3415, %v3004
  %v3417 = vadd.f32 %v3416, %v3005
  %v3418 = vadd.f32 %v3417, %v3006
  %v3419 = vadd.f32 %v3418, %v3007
  %v3420 = vadd.f32 %v3419, %v3008
  %3421 = vadd.xlane.f32.xlu0 %v3420
  %v3422 = vpop.xlane.xlu0 %3421
  %v3423 = vadd.f32 %v3009, %v3010
  %v3424 = vadd.f32 %v3423, %v3011
  %v3425 = vadd.f32 %v3424, %v3012
  %v3426 = vadd.f32 %v3425, %v3013
  %v3427 = vadd.f32 %v3426, %v3014
  %v3428 = vadd.f32 %v3427, %v3015
  %3429 = vadd.xlane.f32.xlu0 %v3428
  %v3430 = vpop.xlane.xlu0 %3429
  %v3431 = vadd.f32 %v3016, %v3017
  %v3432 = vadd.f32 %v3431, %v3018
  %v3433 = vadd.f32 %v3432, %v3019
  %v3434 = vadd.f32 %v3433, %v3020
  %v3435 = vadd.f32 %v3434, %v3021
  %v3436 = vadd.f32 %v3435, %v3022
  %3437 = vadd.xlane.f32.xlu0 %v3436
  %v3438 = vpop.xlane.xlu0 %3437
  %v3439 = vadd.f32 %v3023, %v3024
  %v3440 = vadd.f32 %v3439, %v3025
  %v3441 = vadd.f32 %v3440, %v3026
  %v3442 = vadd.f32 %v3441, %v3027
  %v3443 = vadd.f32 %v3442, %v3028
  %v3444 = vadd.f32 %v3443, %v3029
  %3445 = vadd.xlane.f32.xlu0 %v3444
  %v3446 = vpop.xlane.xlu0 %3445
  %v3447 = vadd.f32 %v3030, %v3031
  %v3448 = vadd.f32 %v3447, %v3032
  %v3449 = vadd.f32 %v3448, %v3033
  %v3450 = vadd.f32 %v3449, %v3034
  %v3451 = vadd.f32 %v3450, %v3035
  %v3452 = vadd.f32 %v3451, %v3036
  %3453 = vadd.xlane.f32.xlu0 %v3452
  %v3454 = vpop.xlane.xlu0 %3453
  %v3455 = vadd.f32 %v3037, %v3038
  %v3456 = vadd.f32 %v3455, %v3039
  %v3457 = vadd.f32 %v3456, %v3040
  %v3458 = vadd.f32 %v3457, %v3041
  %v3459 = vadd.f32 %v3458, %v3042
  %v3460 = vadd.f32 %v3459, %v3043
  %3461 = vadd.xlane.f32.xlu0 %v3460
  %v3462 = vpop.xlane.xlu0 %3461
  %v3463 = vadd.f32 %v3044, %v3045
  %v3464 = vadd.f32 %v3463, %v3046
  %v3465 = vadd.f32 %v3464, %v3047
  %v3466 = vadd.f32 %v3465, %v3048
  %v3467 = vadd.f32 %v3466, %v3049
  %v3468 = vadd.f32 %v3467, %v3050
  %3469 = vadd.xlane.f32.xlu0 %v3468
  %v3470 = vpop.xlane.xlu0 %3469
  %v3471 = vadd.f32 %v3051, %v3052
  %v3472 = vadd.f32 %v3471, %v3053
  %v3473 = vadd.f32 %v3472, %v3054
  %v3474 = vadd.f32 %v3473, %v3055
  %v3475 = vadd.f32 %v3474, %v3056
  %v3476 = vadd.f32 %v3475, %v3057
  %3477 = vadd.xlane.f32.xlu0 %v3476
  %v3478 = vpop.xlane.xlu0 %3477
  %v3479 = vadd.f32 %v3058, %v3059
  %v3480 = vadd.f32 %v3479, %v3060
  %v3481 = vadd.f32 %v3480, %v3061
  %v3482 = vadd.f32 %v3481, %v3062
  %v3483 = vadd.f32 %v3482, %v3063
  %v3484 = vadd.f32 %v3483, %v3064
  %3485 = vadd.xlane.f32.xlu0 %v3484
  %v3486 = vpop.xlane.xlu0 %3485
  %v3487 = vadd.f32 %v3065, %v3066
  %v3488 = vadd.f32 %v3487, %v3067
  %v3489 = vadd.f32 %v3488, %v3068
  %v3490 = vadd.f32 %v3489, %v3069
  %v3491 = vadd.f32 %v3490, %v3070
  %v3492 = vadd.f32 %v3491, %v3071
  %3493 = vadd.xlane.f32.xlu0 %v3492
  %v3494 = vpop.xlane.xlu0 %3493
  %v3495 = vadd.f32 %v3072, %v3073
  %v3496 = vadd.f32 %v3495, %v3074
  %v3497 = vadd.f32 %v3496, %v3075
  %v3498 = vadd.f32 %v3497, %v3076
  %v3499 = vadd.f32 %v3498, %v3077
  %v3500 = vadd.f32 %v3499, %v3078
  %3501 = vadd.xlane.f32.xlu0 %v3500
  %v3502 = vpop.xlane.xlu0 %3501
  %v3503 = vadd.f32 %v3079, %v3080
  %v3504 = vadd.f32 %v3503, %v3081
  %v3505 = vadd.f32 %v3504, %v3082
  %v3506 = vadd.f32 %v3505, %v3083
  %v3507 = vadd.f32 %v3506, %v3084
  %v3508 = vadd.f32 %v3507, %v3085
  %3509 = vadd.xlane.f32.xlu0 %v3508
  %v3510 = vpop.xlane.xlu0 %3509
  %v3511 = vadd.f32 %v3086, %v3087
  %v3512 = vadd.f32 %v3511, %v3088
  %v3513 = vadd.f32 %v3512, %v3089
  %v3514 = vadd.f32 %v3513, %v3090
  %v3515 = vadd.f32 %v3514, %v3091
  %v3516 = vadd.f32 %v3515, %v3092
  %3517 = vadd.xlane.f32.xlu0 %v3516
  %v3518 = vpop.xlane.xlu0 %3517
  %v3519 = vadd.f32 %v3093, %v3094
  %v3520 = vadd.f32 %v3519, %v3095
  %v3521 = vadd.f32 %v3520, %v3096
  %v3522 = vadd.f32 %v3521, %v3097
  %v3523 = vadd.f32 %v3522, %v3098
  %v3524 = vadd.f32 %v3523, %v3099
  %3525 = vadd.xlane.f32.xlu0 %v3524
  %v3526 = vpop.xlane.xlu0 %3525
  %v3527 = vadd.f32 %v3100, %v3101
  %v3528 = vadd.f32 %v3527, %v3102
  %v3529 = vadd.f32 %v3528, %v3103
  %v3530 = vadd.f32 %v3529, %v3104
  %v3531 = vadd.f32 %v3530, %v3105
  %v3532 = vadd.f32 %v3531, %v3106
  %3533 = vadd.xlane.f32.xlu0 %v3532
  %v3534 = vpop.xlane.xlu0 %3533
  %v3535 = vadd.f32 %v3107, %v3108
  %v3536 = vadd.f32 %v3535, %v3109
  %v3537 = vadd.f32 %v3536, %v3110
  %v3538 = vadd.f32 %v3537, %v3111
  %v3539 = vadd.f32 %v3538, %v3112
  %v3540 = vadd.f32 %v3539, %v3113
  %3541 = vadd.xlane.f32.xlu0 %v3540
  %v3542 = vpop.xlane.xlu0 %3541
  %v3543 = vadd.f32 %v3114, %v3115
  %v3544 = vadd.f32 %v3543, %v3116
  %v3545 = vadd.f32 %v3544, %v3117
  %v3546 = vadd.f32 %v3545, %v3118
  %v3547 = vadd.f32 %v3546, %v3119
  %v3548 = vadd.f32 %v3547, %v3120
  %3549 = vadd.xlane.f32.xlu0 %v3548
  %v3550 = vpop.xlane.xlu0 %3549
  %v3551 = vadd.f32 %v3121, %v3122
  %v3552 = vadd.f32 %v3551, %v3123
  %v3553 = vadd.f32 %v3552, %v3124
  %v3554 = vadd.f32 %v3553, %v3125
  %v3555 = vadd.f32 %v3554, %v3126
  %v3556 = vadd.f32 %v3555, %v3127
  %3557 = vadd.xlane.f32.xlu0 %v3556
  %v3558 = vpop.xlane.xlu0 %3557
  %v3559 = vadd.f32 %v3128, %v3129
  %v3560 = vadd.f32 %v3559, %v3130
  %v3561 = vadd.f32 %v3560, %v3131
  %v3562 = vadd.f32 %v3561, %v3132
  %v3563 = vadd.f32 %v3562, %v3133
  %v3564 = vadd.f32 %v3563, %v3134
  %3565 = vadd.xlane.f32.xlu0 %v3564
  %v3566 = vpop.xlane.xlu0 %3565
  %v3567 = vmul.f32 %v2332, 0.0012755102
  %v3568 = vmul.f32 %v2340, 0.0012755102
  %v3569 = vmul.f32 %v2348, 0.0012755102
  %v3570 = vmul.f32 %v2356, 0.0012755102
  %v3571 = vmul.f32 %v2364, 0.0012755102
  %v3572 = vmul.f32 %v2372, 0.0012755102
  %v3573 = vmul.f32 %v2380, 0.0012755102
  %v3574 = vmul.f32 %v2388, 0.0012755102
  %v3575 = vmul.f32 %v2396, 0.0012755102
  %v3576 = vmul.f32 %v2404, 0.0012755102
  %v3577 = vmul.f32 %v2412, 0.0012755102
  %v3578 = vmul.f32 %v2420, 0.0012755102
  %v3579 = vmul.f32 %v2428, 0.0012755102
  %v3580 = vmul.f32 %v2436, 0.0012755102
  %v3581 = vmul.f32 %v2444, 0.0012755102
  %v3582 = vmul.f32 %v2452, 0.0012755102
  %v3583 = vmul.f32 %v2460, 0.0012755102
  %v3584 = vmul.f32 %v2468, 0.0012755102
  %v3585 = vmul.f32 %v2476, 0.0012755102
  %v3586 = vmul.f32 %v2484, 0.0012755102
  %v3587 = vmul.f32 %v2492, 0.0012755102
  %v3588 = vmul.f32 %v2500, 0.0012755102
  %v3589 = vmul.f32 %v2508, 0.0012755102
  %v3590 = vmul.f32 %v2516, 0.0012755102
  %v3591 = vmul.f32 %v2524, 0.0012755102
  %v3592 = vmul.f32 %v2532, 0.0012755102
  %v3593 = vmul.f32 %v2540, 0.0012755102
  %v3594 = vmul.f32 %v2548, 0.0012755102
  %v3595 = vmul.f32 %v2556, 0.0012755102
  %v3596 = vmul.f32 %v2564, 0.0012755102
  %v3597 = vmul.f32 %v2572, 0.0012755102
  %v3598 = vmul.f32 %v2580, 0.0012755102
  %v3599 = vmul.f32 %v2588, 0.0012755102
  %v3600 = vmul.f32 %v2596, 0.0012755102
  %v3601 = vmul.f32 %v2604, 0.0012755102
  %v3602 = vmul.f32 %v2612, 0.0012755102
  %v3603 = vmul.f32 %v2620, 0.0012755102
  %v3604 = vmul.f32 %v2628, 0.0012755102
  %v3605 = vmul.f32 %v2636, 0.0012755102
  %v3606 = vmul.f32 %v2644, 0.0012755102
  %v3607 = vmul.f32 %v2652, 0.0012755102
  %v3608 = vmul.f32 %v2660, 0.0012755102
  %v3609 = vmul.f32 %v2668, 0.0012755102
  %v3610 = vmul.f32 %v2676, 0.0012755102
  %v3611 = vmul.f32 %v2684, 0.0012755102
  %v3612 = vmul.f32 %v2692, 0.0012755102
  %v3613 = vmul.f32 %v2700, 0.0012755102
  %v3614 = vmul.f32 %v2708, 0.0012755102
  %v3615 = vmul.f32 %v2716, 0.0012755102
  %v3616 = vmul.f32 %v2724, 0.0012755102
  %v3617 = vmul.f32 %v2732, 0.0012755102
  %v3618 = vmul.f32 %v2740, 0.0012755102
  %v3619 = vmul.f32 %v2748, 0.0012755102
  %v3620 = vmul.f32 %v2756, 0.0012755102
  %v3621 = vmul.f32 %v3142, 0.0012755102
  %v3622 = vmul.f32 %v3150, 0.0012755102
  %v3623 = vmul.f32 %v3158, 0.0012755102
  %v3624 = vmul.f32 %v3166, 0.0012755102
  %v3625 = vmul.f32 %v3174, 0.0012755102
  %v3626 = vmul.f32 %v3182, 0.0012755102
  %v3627 = vmul.f32 %v3190, 0.0012755102
  %v3628 = vmul.f32 %v3198, 0.0012755102
  %v3629 = vmul.f32 %v3206, 0.0012755102
  %v3630 = vmul.f32 %v3214, 0.0012755102
  %v3631 = vmul.f32 %v3222, 0.0012755102
  %v3632 = vmul.f32 %v3230, 0.0012755102
  %v3633 = vmul.f32 %v3238, 0.0012755102
  %v3634 = vmul.f32 %v3246, 0.0012755102
  %v3635 = vmul.f32 %v3254, 0.0012755102
  %v3636 = vmul.f32 %v3262, 0.0012755102
  %v3637 = vmul.f32 %v3270, 0.0012755102
  %v3638 = vmul.f32 %v3278, 0.0012755102
  %v3639 = vmul.f32 %v3286, 0.0012755102
  %v3640 = vmul.f32 %v3294, 0.0012755102
  %v3641 = vmul.f32 %v3302, 0.0012755102
  %v3642 = vmul.f32 %v3310, 0.0012755102
  %v3643 = vmul.f32 %v3318, 0.0012755102
  %v3644 = vmul.f32 %v3326, 0.0012755102
  %v3645 = vmul.f32 %v3334, 0.0012755102
  %v3646 = vmul.f32 %v3342, 0.0012755102
  %v3647 = vmul.f32 %v3350, 0.0012755102
  %v3648 = vmul.f32 %v3358, 0.0012755102
  %v3649 = vmul.f32 %v3366, 0.0012755102
  %v3650 = vmul.f32 %v3374, 0.0012755102
  %v3651 = vmul.f32 %v3382, 0.0012755102
  %v3652 = vmul.f32 %v3390, 0.0012755102
  %v3653 = vmul.f32 %v3398, 0.0012755102
  %v3654 = vmul.f32 %v3406, 0.0012755102
  %v3655 = vmul.f32 %v3414, 0.0012755102
  %v3656 = vmul.f32 %v3422, 0.0012755102
  %v3657 = vmul.f32 %v3430, 0.0012755102
  %v3658 = vmul.f32 %v3438, 0.0012755102
  %v3659 = vmul.f32 %v3446, 0.0012755102
  %v3660 = vmul.f32 %v3454, 0.0012755102
  %v3661 = vmul.f32 %v3462, 0.0012755102
  %v3662 = vmul.f32 %v3470, 0.0012755102
  %v3663 = vmul.f32 %v3478, 0.0012755102
  %v3664 = vmul.f32 %v3486, 0.0012755102
  %v3665 = vmul.f32 %v3494, 0.0012755102
  %v3666 = vmul.f32 %v3502, 0.0012755102
  %v3667 = vmul.f32 %v3510, 0.0012755102
  %v3668 = vmul.f32 %v3518, 0.0012755102
  %v3669 = vmul.f32 %v3526, 0.0012755102
  %v3670 = vmul.f32 %v3534, 0.0012755102
  %v3671 = vmul.f32 %v3542, 0.0012755102
  %v3672 = vmul.f32 %v3550, 0.0012755102
  %v3673 = vmul.f32 %v3558, 0.0012755102
  %v3674 = vmul.f32 %v3566, 0.0012755102
  %v3675 = vmul.f32 %v3567, %v3567
  %v3676 = vmul.f32 %v3568, %v3568
  %v3677 = vmul.f32 %v3569, %v3569
  %v3678 = vmul.f32 %v3570, %v3570
  %v3679 = vmul.f32 %v3571, %v3571
  %v3680 = vmul.f32 %v3572, %v3572
  %v3681 = vmul.f32 %v3573, %v3573
  %v3682 = vmul.f32 %v3574, %v3574
  %v3683 = vmul.f32 %v3575, %v3575
  %v3684 = vmul.f32 %v3576, %v3576
  %v3685 = vmul.f32 %v3577, %v3577
  %v3686 = vmul.f32 %v3578, %v3578
  %v3687 = vmul.f32 %v3579, %v3579
  %v3688 = vmul.f32 %v3580, %v3580
  %v3689 = vmul.f32 %v3581, %v3581
  %v3690 = vmul.f32 %v3582, %v3582
  %v3691 = vmul.f32 %v3583, %v3583
  %v3692 = vmul.f32 %v3584, %v3584
  %v3693 = vmul.f32 %v3585, %v3585
  %v3694 = vmul.f32 %v3586, %v3586
  %v3695 = vmul.f32 %v3587, %v3587
  %v3696 = vmul.f32 %v3588, %v3588
  %v3697 = vmul.f32 %v3589, %v3589
  %v3698 = vmul.f32 %v3590, %v3590
  %v3699 = vmul.f32 %v3591, %v3591
  %v3700 = vmul.f32 %v3592, %v3592
  %v3701 = vmul.f32 %v3593, %v3593
  %v3702 = vmul.f32 %v3594, %v3594
  %v3703 = vmul.f32 %v3595, %v3595
  %v3704 = vmul.f32 %v3596, %v3596
  %v3705 = vmul.f32 %v3597, %v3597
  %v3706 = vmul.f32 %v3598, %v3598
  %v3707 = vmul.f32 %v3599, %v3599
  %v3708 = vmul.f32 %v3600, %v3600
  %v3709 = vmul.f32 %v3601, %v3601
  %v3710 = vmul.f32 %v3602, %v3602
  %v3711 = vmul.f32 %v3603, %v3603
  %v3712 = vmul.f32 %v3604, %v3604
  %v3713 = vmul.f32 %v3605, %v3605
  %v3714 = vmul.f32 %v3606, %v3606
  %v3715 = vmul.f32 %v3607, %v3607
  %v3716 = vmul.f32 %v3608, %v3608
  %v3717 = vmul.f32 %v3609, %v3609
  %v3718 = vmul.f32 %v3610, %v3610
  %v3719 = vmul.f32 %v3611, %v3611
  %v3720 = vmul.f32 %v3612, %v3612
  %v3721 = vmul.f32 %v3613, %v3613
  %v3722 = vmul.f32 %v3614, %v3614
  %v3723 = vmul.f32 %v3615, %v3615
  %v3724 = vmul.f32 %v3616, %v3616
  %v3725 = vmul.f32 %v3617, %v3617
  %v3726 = vmul.f32 %v3618, %v3618
  %v3727 = vmul.f32 %v3619, %v3619
  %v3728 = vmul.f32 %v3620, %v3620
  %v3729 = vsub.f32 %v3621, %v3675
  %v3730 = vsub.f32 %v3622, %v3676
  %v3731 = vsub.f32 %v3623, %v3677
  %v3732 = vsub.f32 %v3624, %v3678
  %v3733 = vsub.f32 %v3625, %v3679
  %v3734 = vsub.f32 %v3626, %v3680
  %v3735 = vsub.f32 %v3627, %v3681
  %v3736 = vsub.f32 %v3628, %v3682
  %v3737 = vsub.f32 %v3629, %v3683
  %v3738 = vsub.f32 %v3630, %v3684
  %v3739 = vsub.f32 %v3631, %v3685
  %v3740 = vsub.f32 %v3632, %v3686
  %v3741 = vsub.f32 %v3633, %v3687
  %v3742 = vsub.f32 %v3634, %v3688
  %v3743 = vsub.f32 %v3635, %v3689
  %v3744 = vsub.f32 %v3636, %v3690
  %v3745 = vsub.f32 %v3637, %v3691
  %v3746 = vsub.f32 %v3638, %v3692
  %v3747 = vsub.f32 %v3639, %v3693
  %v3748 = vsub.f32 %v3640, %v3694
  %v3749 = vsub.f32 %v3641, %v3695
  %v3750 = vsub.f32 %v3642, %v3696
  %v3751 = vsub.f32 %v3643, %v3697
  %v3752 = vsub.f32 %v3644, %v3698
  %v3753 = vsub.f32 %v3645, %v3699
  %v3754 = vsub.f32 %v3646, %v3700
  %v3755 = vsub.f32 %v3647, %v3701
  %v3756 = vsub.f32 %v3648, %v3702
  %v3757 = vsub.f32 %v3649, %v3703
  %v3758 = vsub.f32 %v3650, %v3704
  %v3759 = vsub.f32 %v3651, %v3705
  %v3760 = vsub.f32 %v3652, %v3706
  %v3761 = vsub.f32 %v3653, %v3707
  %v3762 = vsub.f32 %v3654, %v3708
  %v3763 = vsub.f32 %v3655, %v3709
  %v3764 = vsub.f32 %v3656, %v3710
  %v3765 = vsub.f32 %v3657, %v3711
  %v3766 = vsub.f32 %v3658, %v3712
  %v3767 = vsub.f32 %v3659, %v3713
  %v3768 = vsub.f32 %v3660, %v3714
  %v3769 = vsub.f32 %v3661, %v3715
  %v3770 = vsub.f32 %v3662, %v3716
  %v3771 = vsub.f32 %v3663, %v3717
  %v3772 = vsub.f32 %v3664, %v3718
  %v3773 = vsub.f32 %v3665, %v3719
  %v3774 = vsub.f32 %v3666, %v3720
  %v3775 = vsub.f32 %v3667, %v3721
  %v3776 = vsub.f32 %v3668, %v3722
  %v3777 = vsub.f32 %v3669, %v3723
  %v3778 = vsub.f32 %v3670, %v3724
  %v3779 = vsub.f32 %v3671, %v3725
  %v3780 = vsub.f32 %v3672, %v3726
  %v3781 = vsub.f32 %v3673, %v3727
  %v3782 = vsub.f32 %v3674, %v3728
  %v3783 = vmax.f32 %v3729, 0.0
  %v3784 = vmax.f32 %v3730, 0.0
  %v3785 = vmax.f32 %v3731, 0.0
  %v3786 = vmax.f32 %v3732, 0.0
  %v3787 = vmax.f32 %v3733, 0.0
  %v3788 = vmax.f32 %v3734, 0.0
  %v3789 = vmax.f32 %v3735, 0.0
  %v3790 = vmax.f32 %v3736, 0.0
  %v3791 = vmax.f32 %v3737, 0.0
  %v3792 = vmax.f32 %v3738, 0.0
  %v3793 = vmax.f32 %v3739, 0.0
  %v3794 = vmax.f32 %v3740, 0.0
  %v3795 = vmax.f32 %v3741, 0.0
  %v3796 = vmax.f32 %v3742, 0.0
  %v3797 = vmax.f32 %v3743, 0.0
  %v3798 = vmax.f32 %v3744, 0.0
  %v3799 = vmax.f32 %v3745, 0.0
  %v3800 = vmax.f32 %v3746, 0.0
  %v3801 = vmax.f32 %v3747, 0.0
  %v3802 = vmax.f32 %v3748, 0.0
  %v3803 = vmax.f32 %v3749, 0.0
  %v3804 = vmax.f32 %v3750, 0.0
  %v3805 = vmax.f32 %v3751, 0.0
  %v3806 = vmax.f32 %v3752, 0.0
  %v3807 = vmax.f32 %v3753, 0.0
  %v3808 = vmax.f32 %v3754, 0.0
  %v3809 = vmax.f32 %v3755, 0.0
  %v3810 = vmax.f32 %v3756, 0.0
  %v3811 = vmax.f32 %v3757, 0.0
  %v3812 = vmax.f32 %v3758, 0.0
  %v3813 = vmax.f32 %v3759, 0.0
  %v3814 = vmax.f32 %v3760, 0.0
  %v3815 = vmax.f32 %v3761, 0.0
  %v3816 = vmax.f32 %v3762, 0.0
  %v3817 = vmax.f32 %v3763, 0.0
  %v3818 = vmax.f32 %v3764, 0.0
  %v3819 = vmax.f32 %v3765, 0.0
  %v3820 = vmax.f32 %v3766, 0.0
  %v3821 = vmax.f32 %v3767, 0.0
  %v3822 = vmax.f32 %v3768, 0.0
  %v3823 = vmax.f32 %v3769, 0.0
  %v3824 = vmax.f32 %v3770, 0.0
  %v3825 = vmax.f32 %v3771, 0.0
  %v3826 = vmax.f32 %v3772, 0.0
  %v3827 = vmax.f32 %v3773, 0.0
  %v3828 = vmax.f32 %v3774, 0.0
  %v3829 = vmax.f32 %v3775, 0.0
  %v3830 = vmax.f32 %v3776, 0.0
  %v3831 = vmax.f32 %v3777, 0.0
  %v3832 = vmax.f32 %v3778, 0.0
  %v3833 = vmax.f32 %v3779, 0.0
  %v3834 = vmax.f32 %v3780, 0.0
  %v3835 = vmax.f32 %v3781, 0.0
  %v3836 = vmax.f32 %v3782, 0.0
  %v3837 = vld [vmem:[%s5] sm:$0xff]
  %v3838 = vld [vmem:[%s5 + $0x8] sm:$0xff]
  %v3839 = vld [vmem:[%s5 + $0x10] sm:$0xff]
  %v3840 = vld [vmem:[%s5 + $0x18] sm:$0xff]
  %v3841 = vld [vmem:[%s5 + $0x20] sm:$0xff]
  %v3842 = vld [vmem:[%s5 + $0x28] sm:$0xff]
  %v3843 = vld [vmem:[%s5 + $0x30] sm:$0xff]
  %v3844 = vld [vmem:[%s5 + $0x38] sm:$0xff]
  %v3845 = vld [vmem:[%s5 + $0x40] sm:$0xff]
  %v3846 = vld [vmem:[%s5 + $0x48] sm:$0xff]
  %v3847 = vld [vmem:[%s5 + $0x50] sm:$0xff]
  %v3848 = vld [vmem:[%s5 + $0x58] sm:$0xff]
  %v3849 = vld [vmem:[%s5 + $0x60] sm:$0xff]
  %v3850 = vld [vmem:[%s5 + $0x68] sm:$0xff]
  %v3851 = vld [vmem:[%s5 + $0x70] sm:$0xff]
  %v3852 = vld [vmem:[%s5 + $0x78] sm:$0xff]
  %v3853 = vld [vmem:[%s5 + $0x80] sm:$0xff]
  %v3854 = vld [vmem:[%s5 + $0x88] sm:$0xff]
  %v3855 = vld [vmem:[%s5 + $0x90] sm:$0xff]
  %v3856 = vld [vmem:[%s5 + $0x98] sm:$0xff]
  %v3857 = vld [vmem:[%s5 + $0xa0] sm:$0xff]
  %v3858 = vld [vmem:[%s5 + $0xa8] sm:$0xff]
  %v3859 = vld [vmem:[%s5 + $0xb0] sm:$0xff]
  %v3860 = vld [vmem:[%s5 + $0xb8] sm:$0xff]
  %v3861 = vld [vmem:[%s5 + $0xc0] sm:$0xff]
  %v3862 = vld [vmem:[%s5 + $0xc8] sm:$0xff]
  %v3863 = vld [vmem:[%s5 + $0xd0] sm:$0xff]
  %v3864 = vld [vmem:[%s5 + $0xd8] sm:$0xff]
  %v3865 = vld [vmem:[%s5 + $0xe0] sm:$0xff]
  %v3866 = vld [vmem:[%s5 + $0xe8] sm:$0xff]
  %v3867 = vld [vmem:[%s5 + $0xf0] sm:$0xff]
  %v3868 = vld [vmem:[%s5 + $0xf8] sm:$0xff]
  %v3869 = vld [vmem:[%s5 + $0x100] sm:$0xff]
  %v3870 = vld [vmem:[%s5 + $0x108] sm:$0xff]
  %v3871 = vld [vmem:[%s5 + $0x110] sm:$0xff]
  %v3872 = vld [vmem:[%s5 + $0x118] sm:$0xff]
  %v3873 = vld [vmem:[%s5 + $0x120] sm:$0xff]
  %v3874 = vld [vmem:[%s5 + $0x128] sm:$0xff]
  %v3875 = vld [vmem:[%s5 + $0x130] sm:$0xff]
  %v3876 = vld [vmem:[%s5 + $0x138] sm:$0xff]
  %v3877 = vld [vmem:[%s5 + $0x140] sm:$0xff]
  %v3878 = vld [vmem:[%s5 + $0x148] sm:$0xff]
  %v3879 = vld [vmem:[%s5 + $0x150] sm:$0xff]
  %v3880 = vld [vmem:[%s5 + $0x158] sm:$0xff]
  %v3881 = vld [vmem:[%s5 + $0x160] sm:$0xff]
  %v3882 = vld [vmem:[%s5 + $0x168] sm:$0xff]
  %v3883 = vld [vmem:[%s5 + $0x170] sm:$0xff]
  %v3884 = vld [vmem:[%s5 + $0x178] sm:$0xff]
  %v3885 = vld [vmem:[%s5 + $0x180] sm:$0xff]
  %v3886 = vld [vmem:[%s5 + $0x188] sm:$0xff]
  %v3887 = vld [vmem:[%s5 + $0x190] sm:$0xff]
  %v3888 = vld [vmem:[%s5 + $0x198] sm:$0xff]
  %v3889 = vld [vmem:[%s5 + $0x1a0] sm:$0xff]
  %v3890 = vld [vmem:[%s5 + $0x1a8] sm:$0xff]
  %v3891 = vadd.f32 %v3783, 1e-05
  %v3892 = vadd.f32 %v3784, 1e-05
  %v3893 = vadd.f32 %v3785, 1e-05
  %v3894 = vadd.f32 %v3786, 1e-05
  %v3895 = vadd.f32 %v3787, 1e-05
  %v3896 = vadd.f32 %v3788, 1e-05
  %v3897 = vadd.f32 %v3789, 1e-05
  %v3898 = vadd.f32 %v3790, 1e-05
  %v3899 = vadd.f32 %v3791, 1e-05
  %v3900 = vadd.f32 %v3792, 1e-05
  %v3901 = vadd.f32 %v3793, 1e-05
  %v3902 = vadd.f32 %v3794, 1e-05
  %v3903 = vadd.f32 %v3795, 1e-05
  %v3904 = vadd.f32 %v3796, 1e-05
  %v3905 = vadd.f32 %v3797, 1e-05
  %v3906 = vadd.f32 %v3798, 1e-05
  %v3907 = vadd.f32 %v3799, 1e-05
  %v3908 = vadd.f32 %v3800, 1e-05
  %v3909 = vadd.f32 %v3801, 1e-05
  %v3910 = vadd.f32 %v3802, 1e-05
  %v3911 = vadd.f32 %v3803, 1e-05
  %v3912 = vadd.f32 %v3804, 1e-05
  %v3913 = vadd.f32 %v3805, 1e-05
  %v3914 = vadd.f32 %v3806, 1e-05
  %v3915 = vadd.f32 %v3807, 1e-05
  %v3916 = vadd.f32 %v3808, 1e-05
  %v3917 = vadd.f32 %v3809, 1e-05
  %v3918 = vadd.f32 %v3810, 1e-05
  %v3919 = vadd.f32 %v3811, 1e-05
  %v3920 = vadd.f32 %v3812, 1e-05
  %v3921 = vadd.f32 %v3813, 1e-05
  %v3922 = vadd.f32 %v3814, 1e-05
  %v3923 = vadd.f32 %v3815, 1e-05
  %v3924 = vadd.f32 %v3816, 1e-05
  %v3925 = vadd.f32 %v3817, 1e-05
  %v3926 = vadd.f32 %v3818, 1e-05
  %v3927 = vadd.f32 %v3819, 1e-05
  %v3928 = vadd.f32 %v3820, 1e-05
  %v3929 = vadd.f32 %v3821, 1e-05
  %v3930 = vadd.f32 %v3822, 1e-05
  %v3931 = vadd.f32 %v3823, 1e-05
  %v3932 = vadd.f32 %v3824, 1e-05
  %v3933 = vadd.f32 %v3825, 1e-05
  %v3934 = vadd.f32 %v3826, 1e-05
  %v3935 = vadd.f32 %v3827, 1e-05
  %v3936 = vadd.f32 %v3828, 1e-05
  %v3937 = vadd.f32 %v3829, 1e-05
  %v3938 = vadd.f32 %v3830, 1e-05
  %v3939 = vadd.f32 %v3831, 1e-05
  %v3940 = vadd.f32 %v3832, 1e-05
  %v3941 = vadd.f32 %v3833, 1e-05
  %v3942 = vadd.f32 %v3834, 1e-05
  %v3943 = vadd.f32 %v3835, 1e-05
  %v3944 = vadd.f32 %v3836, 1e-05
  %v3945 = vrsqrt.pop %v3891
  %v3946 = vrsqrt.pop %v3892
  %v3947 = vrsqrt.pop %v3893
  %v3948 = vrsqrt.pop %v3894
  %v3949 = vrsqrt.pop %v3895
  %v3950 = vrsqrt.pop %v3896
  %v3951 = vrsqrt.pop %v3897
  %v3952 = vrsqrt.pop %v3898
  %v3953 = vrsqrt.pop %v3899
  %v3954 = vrsqrt.pop %v3900
  %v3955 = vrsqrt.pop %v3901
  %v3956 = vrsqrt.pop %v3902
  %v3957 = vrsqrt.pop %v3903
  %v3958 = vrsqrt.pop %v3904
  %v3959 = vrsqrt.pop %v3905
  %v3960 = vrsqrt.pop %v3906
  %v3961 = vrsqrt.pop %v3907
  %v3962 = vrsqrt.pop %v3908
  %v3963 = vrsqrt.pop %v3909
  %v3964 = vrsqrt.pop %v3910
  %v3965 = vrsqrt.pop %v3911
  %v3966 = vrsqrt.pop %v3912
  %v3967 = vrsqrt.pop %v3913
  %v3968 = vrsqrt.pop %v3914
  %v3969 = vrsqrt.pop %v3915
  %v3970 = vrsqrt.pop %v3916
  %v3971 = vrsqrt.pop %v3917
  %v3972 = vrsqrt.pop %v3918
  %v3973 = vrsqrt.pop %v3919
  %v3974 = vrsqrt.pop %v3920
  %v3975 = vrsqrt.pop %v3921
  %v3976 = vrsqrt.pop %v3922
  %v3977 = vrsqrt.pop %v3923
  %v3978 = vrsqrt.pop %v3924
  %v3979 = vrsqrt.pop %v3925
  %v3980 = vrsqrt.pop %v3926
  %v3981 = vrsqrt.pop %v3927
  %v3982 = vrsqrt.pop %v3928
  %v3983 = vrsqrt.pop %v3929
  %v3984 = vrsqrt.pop %v3930
  %v3985 = vrsqrt.pop %v3931
  %v3986 = vrsqrt.pop %v3932
  %v3987 = vrsqrt.pop %v3933
  %v3988 = vrsqrt.pop %v3934
  %v3989 = vrsqrt.pop %v3935
  %v3990 = vrsqrt.pop %v3936
  %v3991 = vrsqrt.pop %v3937
  %v3992 = vrsqrt.pop %v3938
  %v3993 = vrsqrt.pop %v3939
  %v3994 = vrsqrt.pop %v3940
  %v3995 = vrsqrt.pop %v3941
  %v3996 = vrsqrt.pop %v3942
  %v3997 = vrsqrt.pop %v3943
  %v3998 = vrsqrt.pop %v3944
  %v3999 = vmul.f32 %v3837, %v3945
  %v4000 = vmul.f32 %v3838, %v3946
  %v4001 = vmul.f32 %v3839, %v3947
  %v4002 = vmul.f32 %v3840, %v3948
  %v4003 = vmul.f32 %v3841, %v3949
  %v4004 = vmul.f32 %v3842, %v3950
  %v4005 = vmul.f32 %v3843, %v3951
  %v4006 = vmul.f32 %v3844, %v3952
  %v4007 = vmul.f32 %v3845, %v3953
  %v4008 = vmul.f32 %v3846, %v3954
  %v4009 = vmul.f32 %v3847, %v3955
  %v4010 = vmul.f32 %v3848, %v3956
  %v4011 = vmul.f32 %v3849, %v3957
  %v4012 = vmul.f32 %v3850, %v3958
  %v4013 = vmul.f32 %v3851, %v3959
  %v4014 = vmul.f32 %v3852, %v3960
  %v4015 = vmul.f32 %v3853, %v3961
  %v4016 = vmul.f32 %v3854, %v3962
  %v4017 = vmul.f32 %v3855, %v3963
  %v4018 = vmul.f32 %v3856, %v3964
  %v4019 = vmul.f32 %v3857, %v3965
  %v4020 = vmul.f32 %v3858, %v3966
  %v4021 = vmul.f32 %v3859, %v3967
  %v4022 = vmul.f32 %v3860, %v3968
  %v4023 = vmul.f32 %v3861, %v3969
  %v4024 = vmul.f32 %v3862, %v3970
  %v4025 = vmul.f32 %v3863, %v3971
  %v4026 = vmul.f32 %v3864, %v3972
  %v4027 = vmul.f32 %v3865, %v3973
  %v4028 = vmul.f32 %v3866, %v3974
  %v4029 = vmul.f32 %v3867, %v3975
  %v4030 = vmul.f32 %v3868, %v3976
  %v4031 = vmul.f32 %v3869, %v3977
  %v4032 = vmul.f32 %v3870, %v3978
  %v4033 = vmul.f32 %v3871, %v3979
  %v4034 = vmul.f32 %v3872, %v3980
  %v4035 = vmul.f32 %v3873, %v3981
  %v4036 = vmul.f32 %v3874, %v3982
  %v4037 = vmul.f32 %v3875, %v3983
  %v4038 = vmul.f32 %v3876, %v3984
  %v4039 = vmul.f32 %v3877, %v3985
  %v4040 = vmul.f32 %v3878, %v3986
  %v4041 = vmul.f32 %v3879, %v3987
  %v4042 = vmul.f32 %v3880, %v3988
  %v4043 = vmul.f32 %v3881, %v3989
  %v4044 = vmul.f32 %v3882, %v3990
  %v4045 = vmul.f32 %v3883, %v3991
  %v4046 = vmul.f32 %v3884, %v3992
  %v4047 = vmul.f32 %v3885, %v3993
  %v4048 = vmul.f32 %v3886, %v3994
  %v4049 = vmul.f32 %v3887, %v3995
  %v4050 = vmul.f32 %v3888, %v3996
  %v4051 = vmul.f32 %v3889, %v3997
  %v4052 = vmul.f32 %v3890, %v3998
  %v4053 = vld [vmem:[%s6] sm:$0xff]
  %v4054 = vld [vmem:[%s6 + $0x8] sm:$0xff]
  %v4055 = vld [vmem:[%s6 + $0x10] sm:$0xff]
  %v4056 = vld [vmem:[%s6 + $0x18] sm:$0xff]
  %v4057 = vld [vmem:[%s6 + $0x20] sm:$0xff]
  %v4058 = vld [vmem:[%s6 + $0x28] sm:$0xff]
  %v4059 = vld [vmem:[%s6 + $0x30] sm:$0xff]
  %v4060 = vld [vmem:[%s6 + $0x38] sm:$0xff]
  %v4061 = vld [vmem:[%s6 + $0x40] sm:$0xff]
  %v4062 = vld [vmem:[%s6 + $0x48] sm:$0xff]
  %v4063 = vld [vmem:[%s6 + $0x50] sm:$0xff]
  %v4064 = vld [vmem:[%s6 + $0x58] sm:$0xff]
  %v4065 = vld [vmem:[%s6 + $0x60] sm:$0xff]
  %v4066 = vld [vmem:[%s6 + $0x68] sm:$0xff]
  %v4067 = vld [vmem:[%s6 + $0x70] sm:$0xff]
  %v4068 = vld [vmem:[%s6 + $0x78] sm:$0xff]
  %v4069 = vld [vmem:[%s6 + $0x80] sm:$0xff]
  %v4070 = vld [vmem:[%s6 + $0x88] sm:$0xff]
  %v4071 = vld [vmem:[%s6 + $0x90] sm:$0xff]
  %v4072 = vld [vmem:[%s6 + $0x98] sm:$0xff]
  %v4073 = vld [vmem:[%s6 + $0xa0] sm:$0xff]
  %v4074 = vld [vmem:[%s6 + $0xa8] sm:$0xff]
  %v4075 = vld [vmem:[%s6 + $0xb0] sm:$0xff]
  %v4076 = vld [vmem:[%s6 + $0xb8] sm:$0xff]
  %v4077 = vld [vmem:[%s6 + $0xc0] sm:$0xff]
  %v4078 = vld [vmem:[%s6 + $0xc8] sm:$0xff]
  %v4079 = vld [vmem:[%s6 + $0xd0] sm:$0xff]
  %v4080 = vld [vmem:[%s6 + $0xd8] sm:$0xff]
  %v4081 = vld [vmem:[%s6 + $0xe0] sm:$0xff]
  %v4082 = vld [vmem:[%s6 + $0xe8] sm:$0xff]
  %v4083 = vld [vmem:[%s6 + $0xf0] sm:$0xff]
  %v4084 = vld [vmem:[%s6 + $0xf8] sm:$0xff]
  %v4085 = vld [vmem:[%s6 + $0x100] sm:$0xff]
  %v4086 = vld [vmem:[%s6 + $0x108] sm:$0xff]
  %v4087 = vld [vmem:[%s6 + $0x110] sm:$0xff]
  %v4088 = vld [vmem:[%s6 + $0x118] sm:$0xff]
  %v4089 = vld [vmem:[%s6 + $0x120] sm:$0xff]
  %v4090 = vld [vmem:[%s6 + $0x128] sm:$0xff]
  %v4091 = vld [vmem:[%s6 + $0x130] sm:$0xff]
  %v4092 = vld [vmem:[%s6 + $0x138] sm:$0xff]
  %v4093 = vld [vmem:[%s6 + $0x140] sm:$0xff]
  %v4094 = vld [vmem:[%s6 + $0x148] sm:$0xff]
  %v4095 = vld [vmem:[%s6 + $0x150] sm:$0xff]
  %v4096 = vld [vmem:[%s6 + $0x158] sm:$0xff]
  %v4097 = vld [vmem:[%s6 + $0x160] sm:$0xff]
  %v4098 = vld [vmem:[%s6 + $0x168] sm:$0xff]
  %v4099 = vld [vmem:[%s6 + $0x170] sm:$0xff]
  %v4100 = vld [vmem:[%s6 + $0x178] sm:$0xff]
  %v4101 = vld [vmem:[%s6 + $0x180] sm:$0xff]
  %v4102 = vld [vmem:[%s6 + $0x188] sm:$0xff]
  %v4103 = vld [vmem:[%s6 + $0x190] sm:$0xff]
  %v4104 = vld [vmem:[%s6 + $0x198] sm:$0xff]
  %v4105 = vld [vmem:[%s6 + $0x1a0] sm:$0xff]
  %v4106 = vld [vmem:[%s6 + $0x1a8] sm:$0xff]
  %v4107 = vmul.f32 %v3567, %v3999
  %v4108 = vmul.f32 %v3568, %v4000
  %v4109 = vmul.f32 %v3569, %v4001
  %v4110 = vmul.f32 %v3570, %v4002
  %v4111 = vmul.f32 %v3571, %v4003
  %v4112 = vmul.f32 %v3572, %v4004
  %v4113 = vmul.f32 %v3573, %v4005
  %v4114 = vmul.f32 %v3574, %v4006
  %v4115 = vmul.f32 %v3575, %v4007
  %v4116 = vmul.f32 %v3576, %v4008
  %v4117 = vmul.f32 %v3577, %v4009
  %v4118 = vmul.f32 %v3578, %v4010
  %v4119 = vmul.f32 %v3579, %v4011
  %v4120 = vmul.f32 %v3580, %v4012
  %v4121 = vmul.f32 %v3581, %v4013
  %v4122 = vmul.f32 %v3582, %v4014
  %v4123 = vmul.f32 %v3583, %v4015
  %v4124 = vmul.f32 %v3584, %v4016
  %v4125 = vmul.f32 %v3585, %v4017
  %v4126 = vmul.f32 %v3586, %v4018
  %v4127 = vmul.f32 %v3587, %v4019
  %v4128 = vmul.f32 %v3588, %v4020
  %v4129 = vmul.f32 %v3589, %v4021
  %v4130 = vmul.f32 %v3590, %v4022
  %v4131 = vmul.f32 %v3591, %v4023
  %v4132 = vmul.f32 %v3592, %v4024
  %v4133 = vmul.f32 %v3593, %v4025
  %v4134 = vmul.f32 %v3594, %v4026
  %v4135 = vmul.f32 %v3595, %v4027
  %v4136 = vmul.f32 %v3596, %v4028
  %v4137 = vmul.f32 %v3597, %v4029
  %v4138 = vmul.f32 %v3598, %v4030
  %v4139 = vmul.f32 %v3599, %v4031
  %v4140 = vmul.f32 %v3600, %v4032
  %v4141 = vmul.f32 %v3601, %v4033
  %v4142 = vmul.f32 %v3602, %v4034
  %v4143 = vmul.f32 %v3603, %v4035
  %v4144 = vmul.f32 %v3604, %v4036
  %v4145 = vmul.f32 %v3605, %v4037
  %v4146 = vmul.f32 %v3606, %v4038
  %v4147 = vmul.f32 %v3607, %v4039
  %v4148 = vmul.f32 %v3608, %v4040
  %v4149 = vmul.f32 %v3609, %v4041
  %v4150 = vmul.f32 %v3610, %v4042
  %v4151 = vmul.f32 %v3611, %v4043
  %v4152 = vmul.f32 %v3612, %v4044
  %v4153 = vmul.f32 %v3613, %v4045
  %v4154 = vmul.f32 %v3614, %v4046
  %v4155 = vmul.f32 %v3615, %v4047
  %v4156 = vmul.f32 %v3616, %v4048
  %v4157 = vmul.f32 %v3617, %v4049
  %v4158 = vmul.f32 %v3618, %v4050
  %v4159 = vmul.f32 %v3619, %v4051
  %v4160 = vmul.f32 %v3620, %v4052
  %v4161 = vsub.f32 %v4053, %v4107
  %v4162 = vsub.f32 %v4054, %v4108
  %v4163 = vsub.f32 %v4055, %v4109
  %v4164 = vsub.f32 %v4056, %v4110
  %v4165 = vsub.f32 %v4057, %v4111
  %v4166 = vsub.f32 %v4058, %v4112
  %v4167 = vsub.f32 %v4059, %v4113
  %v4168 = vsub.f32 %v4060, %v4114
  %v4169 = vsub.f32 %v4061, %v4115
  %v4170 = vsub.f32 %v4062, %v4116
  %v4171 = vsub.f32 %v4063, %v4117
  %v4172 = vsub.f32 %v4064, %v4118
  %v4173 = vsub.f32 %v4065, %v4119
  %v4174 = vsub.f32 %v4066, %v4120
  %v4175 = vsub.f32 %v4067, %v4121
  %v4176 = vsub.f32 %v4068, %v4122
  %v4177 = vsub.f32 %v4069, %v4123
  %v4178 = vsub.f32 %v4070, %v4124
  %v4179 = vsub.f32 %v4071, %v4125
  %v4180 = vsub.f32 %v4072, %v4126
  %v4181 = vsub.f32 %v4073, %v4127
  %v4182 = vsub.f32 %v4074, %v4128
  %v4183 = vsub.f32 %v4075, %v4129
  %v4184 = vsub.f32 %v4076, %v4130
  %v4185 = vsub.f32 %v4077, %v4131
  %v4186 = vsub.f32 %v4078, %v4132
  %v4187 = vsub.f32 %v4079, %v4133
  %v4188 = vsub.f32 %v4080, %v4134
  %v4189 = vsub.f32 %v4081, %v4135
  %v4190 = vsub.f32 %v4082, %v4136
  %v4191 = vsub.f32 %v4083, %v4137
  %v4192 = vsub.f32 %v4084, %v4138
  %v4193 = vsub.f32 %v4085, %v4139
  %v4194 = vsub.f32 %v4086, %v4140
  %v4195 = vsub.f32 %v4087, %v4141
  %v4196 = vsub.f32 %v4088, %v4142
  %v4197 = vsub.f32 %v4089, %v4143
  %v4198 = vsub.f32 %v4090, %v4144
  %v4199 = vsub.f32 %v4091, %v4145
  %v4200 = vsub.f32 %v4092, %v4146
  %v4201 = vsub.f32 %v4093, %v4147
  %v4202 = vsub.f32 %v4094, %v4148
  %v4203 = vsub.f32 %v4095, %v4149
  %v4204 = vsub.f32 %v4096, %v4150
  %v4205 = vsub.f32 %v4097, %v4151
  %v4206 = vsub.f32 %v4098, %v4152
  %v4207 = vsub.f32 %v4099, %v4153
  %v4208 = vsub.f32 %v4100, %v4154
  %v4209 = vsub.f32 %v4101, %v4155
  %v4210 = vsub.f32 %v4102, %v4156
  %v4211 = vsub.f32 %v4103, %v4157
  %v4212 = vsub.f32 %v4104, %v4158
  %v4213 = vsub.f32 %v4105, %v4159
  %v4214 = vsub.f32 %v4106, %v4160
  %4216 = vset.pattern.permute.xlu0 0
  %4217 = vperm.xlu0 %4216, %v3999
  %v4218 = vpop.permute.xlu0 %4217
  %4221 = vset.pattern.permute.xlu0 0
  %4222 = vperm.xlu0 %4221, %v4000
  %v4223 = vpop.permute.xlu0 %4222
  %4226 = vset.pattern.permute.xlu0 0
  %4227 = vperm.xlu0 %4226, %v4001
  %v4228 = vpop.permute.xlu0 %4227
  %4231 = vset.pattern.permute.xlu0 0
  %4232 = vperm.xlu0 %4231, %v4002
  %v4233 = vpop.permute.xlu0 %4232
  %4236 = vset.pattern.permute.xlu0 0
  %4237 = vperm.xlu0 %4236, %v4003
  %v4238 = vpop.permute.xlu0 %4237
  %4241 = vset.pattern.permute.xlu0 0
  %4242 = vperm.xlu0 %4241, %v4004
  %v4243 = vpop.permute.xlu0 %4242
  %4246 = vset.pattern.permute.xlu0 0
  %4247 = vperm.xlu0 %4246, %v4005
  %v4248 = vpop.permute.xlu0 %4247
  %4251 = vset.pattern.permute.xlu0 0
  %4252 = vperm.xlu0 %4251, %v4006
  %v4253 = vpop.permute.xlu0 %4252
  %4256 = vset.pattern.permute.xlu0 0
  %4257 = vperm.xlu0 %4256, %v4007
  %v4258 = vpop.permute.xlu0 %4257
  %4261 = vset.pattern.permute.xlu0 0
  %4262 = vperm.xlu0 %4261, %v4008
  %v4263 = vpop.permute.xlu0 %4262
  %4266 = vset.pattern.permute.xlu0 0
  %4267 = vperm.xlu0 %4266, %v4009
  %v4268 = vpop.permute.xlu0 %4267
  %4271 = vset.pattern.permute.xlu0 0
  %4272 = vperm.xlu0 %4271, %v4010
  %v4273 = vpop.permute.xlu0 %4272
  %4276 = vset.pattern.permute.xlu0 0
  %4277 = vperm.xlu0 %4276, %v4011
  %v4278 = vpop.permute.xlu0 %4277
  %4281 = vset.pattern.permute.xlu0 0
  %4282 = vperm.xlu0 %4281, %v4012
  %v4283 = vpop.permute.xlu0 %4282
  %4286 = vset.pattern.permute.xlu0 0
  %4287 = vperm.xlu0 %4286, %v4013
  %v4288 = vpop.permute.xlu0 %4287
  %4291 = vset.pattern.permute.xlu0 0
  %4292 = vperm.xlu0 %4291, %v4014
  %v4293 = vpop.permute.xlu0 %4292
  %4296 = vset.pattern.permute.xlu0 0
  %4297 = vperm.xlu0 %4296, %v4015
  %v4298 = vpop.permute.xlu0 %4297
  %4301 = vset.pattern.permute.xlu0 0
  %4302 = vperm.xlu0 %4301, %v4016
  %v4303 = vpop.permute.xlu0 %4302
  %4306 = vset.pattern.permute.xlu0 0
  %4307 = vperm.xlu0 %4306, %v4017
  %v4308 = vpop.permute.xlu0 %4307
  %4311 = vset.pattern.permute.xlu0 0
  %4312 = vperm.xlu0 %4311, %v4018
  %v4313 = vpop.permute.xlu0 %4312
  %4316 = vset.pattern.permute.xlu0 0
  %4317 = vperm.xlu0 %4316, %v4019
  %v4318 = vpop.permute.xlu0 %4317
  %4321 = vset.pattern.permute.xlu0 0
  %4322 = vperm.xlu0 %4321, %v4020
  %v4323 = vpop.permute.xlu0 %4322
  %4326 = vset.pattern.permute.xlu0 0
  %4327 = vperm.xlu0 %4326, %v4021
  %v4328 = vpop.permute.xlu0 %4327
  %4331 = vset.pattern.permute.xlu0 0
  %4332 = vperm.xlu0 %4331, %v4022
  %v4333 = vpop.permute.xlu0 %4332
  %4336 = vset.pattern.permute.xlu0 0
  %4337 = vperm.xlu0 %4336, %v4023
  %v4338 = vpop.permute.xlu0 %4337
  %4341 = vset.pattern.permute.xlu0 0
  %4342 = vperm.xlu0 %4341, %v4024
  %v4343 = vpop.permute.xlu0 %4342
  %4346 = vset.pattern.permute.xlu0 0
  %4347 = vperm.xlu0 %4346, %v4025
  %v4348 = vpop.permute.xlu0 %4347
  %4351 = vset.pattern.permute.xlu0 0
  %4352 = vperm.xlu0 %4351, %v4026
  %v4353 = vpop.permute.xlu0 %4352
  %4356 = vset.pattern.permute.xlu0 0
  %4357 = vperm.xlu0 %4356, %v4027
  %v4358 = vpop.permute.xlu0 %4357
  %4361 = vset.pattern.permute.xlu0 0
  %4362 = vperm.xlu0 %4361, %v4028
  %v4363 = vpop.permute.xlu0 %4362
  %4366 = vset.pattern.permute.xlu0 0
  %4367 = vperm.xlu0 %4366, %v4029
  %v4368 = vpop.permute.xlu0 %4367
  %4371 = vset.pattern.permute.xlu0 0
  %4372 = vperm.xlu0 %4371, %v4030
  %v4373 = vpop.permute.xlu0 %4372
  %4376 = vset.pattern.permute.xlu0 0
  %4377 = vperm.xlu0 %4376, %v4031
  %v4378 = vpop.permute.xlu0 %4377
  %4381 = vset.pattern.permute.xlu0 0
  %4382 = vperm.xlu0 %4381, %v4032
  %v4383 = vpop.permute.xlu0 %4382
  %4386 = vset.pattern.permute.xlu0 0
  %4387 = vperm.xlu0 %4386, %v4033
  %v4388 = vpop.permute.xlu0 %4387
  %4391 = vset.pattern.permute.xlu0 0
  %4392 = vperm.xlu0 %4391, %v4034
  %v4393 = vpop.permute.xlu0 %4392
  %4396 = vset.pattern.permute.xlu0 0
  %4397 = vperm.xlu0 %4396, %v4035
  %v4398 = vpop.permute.xlu0 %4397
  %4401 = vset.pattern.permute.xlu0 0
  %4402 = vperm.xlu0 %4401, %v4036
  %v4403 = vpop.permute.xlu0 %4402
  %4406 = vset.pattern.permute.xlu0 0
  %4407 = vperm.xlu0 %4406, %v4037
  %v4408 = vpop.permute.xlu0 %4407
  %4411 = vset.pattern.permute.xlu0 0
  %4412 = vperm.xlu0 %4411, %v4038
  %v4413 = vpop.permute.xlu0 %4412
  %4416 = vset.pattern.permute.xlu0 0
  %4417 = vperm.xlu0 %4416, %v4039
  %v4418 = vpop.permute.xlu0 %4417
  %4421 = vset.pattern.permute.xlu0 0
  %4422 = vperm.xlu0 %4421, %v4040
  %v4423 = vpop.permute.xlu0 %4422
  %4426 = vset.pattern.permute.xlu0 0
  %4427 = vperm.xlu0 %4426, %v4041
  %v4428 = vpop.permute.xlu0 %4427
  %4431 = vset.pattern.permute.xlu0 0
  %4432 = vperm.xlu0 %4431, %v4042
  %v4433 = vpop.permute.xlu0 %4432
  %4436 = vset.pattern.permute.xlu0 0
  %4437 = vperm.xlu0 %4436, %v4043
  %v4438 = vpop.permute.xlu0 %4437
  %4441 = vset.pattern.permute.xlu0 0
  %4442 = vperm.xlu0 %4441, %v4044
  %v4443 = vpop.permute.xlu0 %4442
  %4446 = vset.pattern.permute.xlu0 0
  %4447 = vperm.xlu0 %4446, %v4045
  %v4448 = vpop.permute.xlu0 %4447
  %4451 = vset.pattern.permute.xlu0 0
  %4452 = vperm.xlu0 %4451, %v4046
  %v4453 = vpop.permute.xlu0 %4452
  %4456 = vset.pattern.permute.xlu0 0
  %4457 = vperm.xlu0 %4456, %v4047
  %v4458 = vpop.permute.xlu0 %4457
  %4461 = vset.pattern.permute.xlu0 0
  %4462 = vperm.xlu0 %4461, %v4048
  %v4463 = vpop.permute.xlu0 %4462
  %4466 = vset.pattern.permute.xlu0 0
  %4467 = vperm.xlu0 %4466, %v4049
  %v4468 = vpop.permute.xlu0 %4467
  %4471 = vset.pattern.permute.xlu0 0
  %4472 = vperm.xlu0 %4471, %v4050
  %v4473 = vpop.permute.xlu0 %4472
  %4476 = vset.pattern.permute.xlu0 0
  %4477 = vperm.xlu0 %4476, %v4051
  %v4478 = vpop.permute.xlu0 %4477
  %4481 = vset.pattern.permute.xlu0 0
  %4482 = vperm.xlu0 %4481, %v4052
  %v4483 = vpop.permute.xlu0 %4482
  %v4485 = vmul.f32 %v1202, %v4218
  %v4486 = vmul.f32 %v1204, %v4218
  %v4487 = vmul.f32 %v1505, %v4218
  %v4488 = vmul.f32 %v1507, %v4218
  %v4489 = vmul.f32 %v1808, %v4218
  %v4490 = vmul.f32 %v1810, %v4218
  %v4491 = vmul.f32 %v2111, %v4218
  %v4492 = vmul.f32 %v1206, %v4223
  %v4493 = vmul.f32 %v1208, %v4223
  %v4494 = vmul.f32 %v1509, %v4223
  %v4495 = vmul.f32 %v1511, %v4223
  %v4496 = vmul.f32 %v1812, %v4223
  %v4497 = vmul.f32 %v1814, %v4223
  %v4498 = vmul.f32 %v2114, %v4223
  %v4499 = vmul.f32 %v1212, %v4228
  %v4500 = vmul.f32 %v1214, %v4228
  %v4501 = vmul.f32 %v1515, %v4228
  %v4502 = vmul.f32 %v1517, %v4228
  %v4503 = vmul.f32 %v1818, %v4228
  %v4504 = vmul.f32 %v1820, %v4228
  %v4505 = vmul.f32 %v2119, %v4228
  %v4506 = vmul.f32 %v1216, %v4233
  %v4507 = vmul.f32 %v1218, %v4233
  %v4508 = vmul.f32 %v1519, %v4233
  %v4509 = vmul.f32 %v1521, %v4233
  %v4510 = vmul.f32 %v1822, %v4233
  %v4511 = vmul.f32 %v1824, %v4233
  %v4512 = vmul.f32 %v2122, %v4233
  %v4513 = vmul.f32 %v1222, %v4238
  %v4514 = vmul.f32 %v1224, %v4238
  %v4515 = vmul.f32 %v1525, %v4238
  %v4516 = vmul.f32 %v1527, %v4238
  %v4517 = vmul.f32 %v1828, %v4238
  %v4518 = vmul.f32 %v1830, %v4238
  %v4519 = vmul.f32 %v2127, %v4238
  %v4520 = vmul.f32 %v1226, %v4243
  %v4521 = vmul.f32 %v1228, %v4243
  %v4522 = vmul.f32 %v1529, %v4243
  %v4523 = vmul.f32 %v1531, %v4243
  %v4524 = vmul.f32 %v1832, %v4243
  %v4525 = vmul.f32 %v1834, %v4243
  %v4526 = vmul.f32 %v2130, %v4243
  %v4527 = vmul.f32 %v1232, %v4248
  %v4528 = vmul.f32 %v1234, %v4248
  %v4529 = vmul.f32 %v1535, %v4248
  %v4530 = vmul.f32 %v1537, %v4248
  %v4531 = vmul.f32 %v1838, %v4248
  %v4532 = vmul.f32 %v1840, %v4248
  %v4533 = vmul.f32 %v2135, %v4248
  %v4534 = vmul.f32 %v1236, %v4253
  %v4535 = vmul.f32 %v1238, %v4253
  %v4536 = vmul.f32 %v1539, %v4253
  %v4537 = vmul.f32 %v1541, %v4253
  %v4538 = vmul.f32 %v1842, %v4253
  %v4539 = vmul.f32 %v1844, %v4253
  %v4540 = vmul.f32 %v2138, %v4253
  %v4541 = vmul.f32 %v1242, %v4258
  %v4542 = vmul.f32 %v1244, %v4258
  %v4543 = vmul.f32 %v1545, %v4258
  %v4544 = vmul.f32 %v1547, %v4258
  %v4545 = vmul.f32 %v1848, %v4258
  %v4546 = vmul.f32 %v1850, %v4258
  %v4547 = vmul.f32 %v2143, %v4258
  %v4548 = vmul.f32 %v1246, %v4263
  %v4549 = vmul.f32 %v1248, %v4263
  %v4550 = vmul.f32 %v1549, %v4263
  %v4551 = vmul.f32 %v1551, %v4263
  %v4552 = vmul.f32 %v1852, %v4263
  %v4553 = vmul.f32 %v1854, %v4263
  %v4554 = vmul.f32 %v2146, %v4263
  %v4555 = vmul.f32 %v1252, %v4268
  %v4556 = vmul.f32 %v1254, %v4268
  %v4557 = vmul.f32 %v1555, %v4268
  %v4558 = vmul.f32 %v1557, %v4268
  %v4559 = vmul.f32 %v1858, %v4268
  %v4560 = vmul.f32 %v1860, %v4268
  %v4561 = vmul.f32 %v2151, %v4268
  %v4562 = vmul.f32 %v1256, %v4273
  %v4563 = vmul.f32 %v1258, %v4273
  %v4564 = vmul.f32 %v1559, %v4273
  %v4565 = vmul.f32 %v1561, %v4273
  %v4566 = vmul.f32 %v1862, %v4273
  %v4567 = vmul.f32 %v1864, %v4273
  %v4568 = vmul.f32 %v2154, %v4273
  %v4569 = vmul.f32 %v1262, %v4278
  %v4570 = vmul.f32 %v1264, %v4278
  %v4571 = vmul.f32 %v1565, %v4278
  %v4572 = vmul.f32 %v1567, %v4278
  %v4573 = vmul.f32 %v1868, %v4278
  %v4574 = vmul.f32 %v1870, %v4278
  %v4575 = vmul.f32 %v2159, %v4278
  %v4576 = vmul.f32 %v1266, %v4283
  %v4577 = vmul.f32 %v1268, %v4283
  %v4578 = vmul.f32 %v1569, %v4283
  %v4579 = vmul.f32 %v1571, %v4283
  %v4580 = vmul.f32 %v1872, %v4283
  %v4581 = vmul.f32 %v1874, %v4283
  %v4582 = vmul.f32 %v2162, %v4283
  %v4583 = vmul.f32 %v1272, %v4288
  %v4584 = vmul.f32 %v1274, %v4288
  %v4585 = vmul.f32 %v1575, %v4288
  %v4586 = vmul.f32 %v1577, %v4288
  %v4587 = vmul.f32 %v1878, %v4288
  %v4588 = vmul.f32 %v1880, %v4288
  %v4589 = vmul.f32 %v2167, %v4288
  %v4590 = vmul.f32 %v1276, %v4293
  %v4591 = vmul.f32 %v1278, %v4293
  %v4592 = vmul.f32 %v1579, %v4293
  %v4593 = vmul.f32 %v1581, %v4293
  %v4594 = vmul.f32 %v1882, %v4293
  %v4595 = vmul.f32 %v1884, %v4293
  %v4596 = vmul.f32 %v2170, %v4293
  %v4597 = vmul.f32 %v1282, %v4298
  %v4598 = vmul.f32 %v1284, %v4298
  %v4599 = vmul.f32 %v1585, %v4298
  %v4600 = vmul.f32 %v1587, %v4298
  %v4601 = vmul.f32 %v1888, %v4298
  %v4602 = vmul.f32 %v1890, %v4298
  %v4603 = vmul.f32 %v2175, %v4298
  %v4604 = vmul.f32 %v1286, %v4303
  %v4605 = vmul.f32 %v1288, %v4303
  %v4606 = vmul.f32 %v1589, %v4303
  %v4607 = vmul.f32 %v1591, %v4303
  %v4608 = vmul.f32 %v1892, %v4303
  %v4609 = vmul.f32 %v1894, %v4303
  %v4610 = vmul.f32 %v2178, %v4303
  %v4611 = vmul.f32 %v1292, %v4308
  %v4612 = vmul.f32 %v1294, %v4308
  %v4613 = vmul.f32 %v1595, %v4308
  %v4614 = vmul.f32 %v1597, %v4308
  %v4615 = vmul.f32 %v1898, %v4308
  %v4616 = vmul.f32 %v1900, %v4308
  %v4617 = vmul.f32 %v2183, %v4308
  %v4618 = vmul.f32 %v1296, %v4313
  %v4619 = vmul.f32 %v1298, %v4313
  %v4620 = vmul.f32 %v1599, %v4313
  %v4621 = vmul.f32 %v1601, %v4313
  %v4622 = vmul.f32 %v1902, %v4313
  %v4623 = vmul.f32 %v1904, %v4313
  %v4624 = vmul.f32 %v2186, %v4313
  %v4625 = vmul.f32 %v1302, %v4318
  %v4626 = vmul.f32 %v1304, %v4318
  %v4627 = vmul.f32 %v1605, %v4318
  %v4628 = vmul.f32 %v1607, %v4318
  %v4629 = vmul.f32 %v1908, %v4318
  %v4630 = vmul.f32 %v1910, %v4318
  %v4631 = vmul.f32 %v2191, %v4318
  %v4632 = vmul.f32 %v1306, %v4323
  %v4633 = vmul.f32 %v1308, %v4323
  %v4634 = vmul.f32 %v1609, %v4323
  %v4635 = vmul.f32 %v1611, %v4323
  %v4636 = vmul.f32 %v1912, %v4323
  %v4637 = vmul.f32 %v1914, %v4323
  %v4638 = vmul.f32 %v2194, %v4323
  %v4639 = vmul.f32 %v1312, %v4328
  %v4640 = vmul.f32 %v1314, %v4328
  %v4641 = vmul.f32 %v1615, %v4328
  %v4642 = vmul.f32 %v1617, %v4328
  %v4643 = vmul.f32 %v1918, %v4328
  %v4644 = vmul.f32 %v1920, %v4328
  %v4645 = vmul.f32 %v2199, %v4328
  %v4646 = vmul.f32 %v1316, %v4333
  %v4647 = vmul.f32 %v1318, %v4333
  %v4648 = vmul.f32 %v1619, %v4333
  %v4649 = vmul.f32 %v1621, %v4333
  %v4650 = vmul.f32 %v1922, %v4333
  %v4651 = vmul.f32 %v1924, %v4333
  %v4652 = vmul.f32 %v2202, %v4333
  %v4653 = vmul.f32 %v1322, %v4338
  %v4654 = vmul.f32 %v1324, %v4338
  %v4655 = vmul.f32 %v1625, %v4338
  %v4656 = vmul.f32 %v1627, %v4338
  %v4657 = vmul.f32 %v1928, %v4338
  %v4658 = vmul.f32 %v1930, %v4338
  %v4659 = vmul.f32 %v2207, %v4338
  %v4660 = vmul.f32 %v1326, %v4343
  %v4661 = vmul.f32 %v1328, %v4343
  %v4662 = vmul.f32 %v1629, %v4343
  %v4663 = vmul.f32 %v1631, %v4343
  %v4664 = vmul.f32 %v1932, %v4343
  %v4665 = vmul.f32 %v1934, %v4343
  %v4666 = vmul.f32 %v2210, %v4343
  %v4667 = vmul.f32 %v1332, %v4348
  %v4668 = vmul.f32 %v1334, %v4348
  %v4669 = vmul.f32 %v1635, %v4348
  %v4670 = vmul.f32 %v1637, %v4348
  %v4671 = vmul.f32 %v1938, %v4348
  %v4672 = vmul.f32 %v1940, %v4348
  %v4673 = vmul.f32 %v2215, %v4348
  %v4674 = vmul.f32 %v1336, %v4353
  %v4675 = vmul.f32 %v1338, %v4353
  %v4676 = vmul.f32 %v1639, %v4353
  %v4677 = vmul.f32 %v1641, %v4353
  %v4678 = vmul.f32 %v1942, %v4353
  %v4679 = vmul.f32 %v1944, %v4353
  %v4680 = vmul.f32 %v2218, %v4353
  %v4681 = vmul.f32 %v1342, %v4358
  %v4682 = vmul.f32 %v1344, %v4358
  %v4683 = vmul.f32 %v1645, %v4358
  %v4684 = vmul.f32 %v1647, %v4358
  %v4685 = vmul.f32 %v1948, %v4358
  %v4686 = vmul.f32 %v1950, %v4358
  %v4687 = vmul.f32 %v2223, %v4358
  %v4688 = vmul.f32 %v1346, %v4363
  %v4689 = vmul.f32 %v1348, %v4363
  %v4690 = vmul.f32 %v1649, %v4363
  %v4691 = vmul.f32 %v1651, %v4363
  %v4692 = vmul.f32 %v1952, %v4363
  %v4693 = vmul.f32 %v1954, %v4363
  %v4694 = vmul.f32 %v2226, %v4363
  %v4695 = vmul.f32 %v1352, %v4368
  %v4696 = vmul.f32 %v1354, %v4368
  %v4697 = vmul.f32 %v1655, %v4368
  %v4698 = vmul.f32 %v1657, %v4368
  %v4699 = vmul.f32 %v1958, %v4368
  %v4700 = vmul.f32 %v1960, %v4368
  %v4701 = vmul.f32 %v2231, %v4368
  %v4702 = vmul.f32 %v1356, %v4373
  %v4703 = vmul.f32 %v1358, %v4373
  %v4704 = vmul.f32 %v1659, %v4373
  %v4705 = vmul.f32 %v1661, %v4373
  %v4706 = vmul.f32 %v1962, %v4373
  %v4707 = vmul.f32 %v1964, %v4373
  %v4708 = vmul.f32 %v2234, %v4373
  %v4709 = vmul.f32 %v1362, %v4378
  %v4710 = vmul.f32 %v1364, %v4378
  %v4711 = vmul.f32 %v1665, %v4378
  %v4712 = vmul.f32 %v1667, %v4378
  %v4713 = vmul.f32 %v1968, %v4378
  %v4714 = vmul.f32 %v1970, %v4378
  %v4715 = vmul.f32 %v2239, %v4378
  %v4716 = vmul.f32 %v1366, %v4383
  %v4717 = vmul.f32 %v1368, %v4383
  %v4718 = vmul.f32 %v1669, %v4383
  %v4719 = vmul.f32 %v1671, %v4383
  %v4720 = vmul.f32 %v1972, %v4383
  %v4721 = vmul.f32 %v1974, %v4383
  %v4722 = vmul.f32 %v2242, %v4383
  %v4723 = vmul.f32 %v1372, %v4388
  %v4724 = vmul.f32 %v1374, %v4388
  %v4725 = vmul.f32 %v1675, %v4388
  %v4726 = vmul.f32 %v1677, %v4388
  %v4727 = vmul.f32 %v1978, %v4388
  %v4728 = vmul.f32 %v1980, %v4388
  %v4729 = vmul.f32 %v2247, %v4388
  %v4730 = vmul.f32 %v1376, %v4393
  %v4731 = vmul.f32 %v1378, %v4393
  %v4732 = vmul.f32 %v1679, %v4393
  %v4733 = vmul.f32 %v1681, %v4393
  %v4734 = vmul.f32 %v1982, %v4393
  %v4735 = vmul.f32 %v1984, %v4393
  %v4736 = vmul.f32 %v2250, %v4393
  %v4737 = vmul.f32 %v1382, %v4398
  %v4738 = vmul.f32 %v1384, %v4398
  %v4739 = vmul.f32 %v1685, %v4398
  %v4740 = vmul.f32 %v1687, %v4398
  %v4741 = vmul.f32 %v1988, %v4398
  %v4742 = vmul.f32 %v1990, %v4398
  %v4743 = vmul.f32 %v2255, %v4398
  %v4744 = vmul.f32 %v1386, %v4403
  %v4745 = vmul.f32 %v1388, %v4403
  %v4746 = vmul.f32 %v1689, %v4403
  %v4747 = vmul.f32 %v1691, %v4403
  %v4748 = vmul.f32 %v1992, %v4403
  %v4749 = vmul.f32 %v1994, %v4403
  %v4750 = vmul.f32 %v2258, %v4403
  %v4751 = vmul.f32 %v1392, %v4408
  %v4752 = vmul.f32 %v1394, %v4408
  %v4753 = vmul.f32 %v1695, %v4408
  %v4754 = vmul.f32 %v1697, %v4408
  %v4755 = vmul.f32 %v1998, %v4408
  %v4756 = vmul.f32 %v2000, %v4408
  %v4757 = vmul.f32 %v2263, %v4408
  %v4758 = vmul.f32 %v1396, %v4413
  %v4759 = vmul.f32 %v1398, %v4413
  %v4760 = vmul.f32 %v1699, %v4413
  %v4761 = vmul.f32 %v1701, %v4413
  %v4762 = vmul.f32 %v2002, %v4413
  %v4763 = vmul.f32 %v2004, %v4413
  %v4764 = vmul.f32 %v2266, %v4413
  %v4765 = vmul.f32 %v1402, %v4418
  %v4766 = vmul.f32 %v1404, %v4418
  %v4767 = vmul.f32 %v1705, %v4418
  %v4768 = vmul.f32 %v1707, %v4418
  %v4769 = vmul.f32 %v2008, %v4418
  %v4770 = vmul.f32 %v2010, %v4418
  %v4771 = vmul.f32 %v2271, %v4418
  %v4772 = vmul.f32 %v1406, %v4423
  %v4773 = vmul.f32 %v1408, %v4423
  %v4774 = vmul.f32 %v1709, %v4423
  %v4775 = vmul.f32 %v1711, %v4423
  %v4776 = vmul.f32 %v2012, %v4423
  %v4777 = vmul.f32 %v2014, %v4423
  %v4778 = vmul.f32 %v2274, %v4423
  %v4779 = vmul.f32 %v1412, %v4428
  %v4780 = vmul.f32 %v1414, %v4428
  %v4781 = vmul.f32 %v1715, %v4428
  %v4782 = vmul.f32 %v1717, %v4428
  %v4783 = vmul.f32 %v2018, %v4428
  %v4784 = vmul.f32 %v2020, %v4428
  %v4785 = vmul.f32 %v2279, %v4428
  %v4786 = vmul.f32 %v1416, %v4433
  %v4787 = vmul.f32 %v1418, %v4433
  %v4788 = vmul.f32 %v1719, %v4433
  %v4789 = vmul.f32 %v1721, %v4433
  %v4790 = vmul.f32 %v2022, %v4433
  %v4791 = vmul.f32 %v2024, %v4433
  %v4792 = vmul.f32 %v2282, %v4433
  %v4793 = vmul.f32 %v1422, %v4438
  %v4794 = vmul.f32 %v1424, %v4438
  %v4795 = vmul.f32 %v1725, %v4438
  %v4796 = vmul.f32 %v1727, %v4438
  %v4797 = vmul.f32 %v2028, %v4438
  %v4798 = vmul.f32 %v2030, %v4438
  %v4799 = vmul.f32 %v2287, %v4438
  %v4800 = vmul.f32 %v1426, %v4443
  %v4801 = vmul.f32 %v1428, %v4443
  %v4802 = vmul.f32 %v1729, %v4443
  %v4803 = vmul.f32 %v1731, %v4443
  %v4804 = vmul.f32 %v2032, %v4443
  %v4805 = vmul.f32 %v2034, %v4443
  %v4806 = vmul.f32 %v2290, %v4443
  %v4807 = vmul.f32 %v1432, %v4448
  %v4808 = vmul.f32 %v1434, %v4448
  %v4809 = vmul.f32 %v1735, %v4448
  %v4810 = vmul.f32 %v1737, %v4448
  %v4811 = vmul.f32 %v2038, %v4448
  %v4812 = vmul.f32 %v2040, %v4448
  %v4813 = vmul.f32 %v2295, %v4448
  %v4814 = vmul.f32 %v1436, %v4453
  %v4815 = vmul.f32 %v1438, %v4453
  %v4816 = vmul.f32 %v1739, %v4453
  %v4817 = vmul.f32 %v1741, %v4453
  %v4818 = vmul.f32 %v2042, %v4453
  %v4819 = vmul.f32 %v2044, %v4453
  %v4820 = vmul.f32 %v2298, %v4453
  %v4821 = vmul.f32 %v1442, %v4458
  %v4822 = vmul.f32 %v1444, %v4458
  %v4823 = vmul.f32 %v1745, %v4458
  %v4824 = vmul.f32 %v1747, %v4458
  %v4825 = vmul.f32 %v2048, %v4458
  %v4826 = vmul.f32 %v2050, %v4458
  %v4827 = vmul.f32 %v2303, %v4458
  %v4828 = vmul.f32 %v1446, %v4463
  %v4829 = vmul.f32 %v1448, %v4463
  %v4830 = vmul.f32 %v1749, %v4463
  %v4831 = vmul.f32 %v1751, %v4463
  %v4832 = vmul.f32 %v2052, %v4463
  %v4833 = vmul.f32 %v2054, %v4463
  %v4834 = vmul.f32 %v2306, %v4463
  %v4835 = vmul.f32 %v1452, %v4468
  %v4836 = vmul.f32 %v1454, %v4468
  %v4837 = vmul.f32 %v1755, %v4468
  %v4838 = vmul.f32 %v1757, %v4468
  %v4839 = vmul.f32 %v2058, %v4468
  %v4840 = vmul.f32 %v2060, %v4468
  %v4841 = vmul.f32 %v2311, %v4468
  %v4842 = vmul.f32 %v1456, %v4473
  %v4843 = vmul.f32 %v1458, %v4473
  %v4844 = vmul.f32 %v1759, %v4473
  %v4845 = vmul.f32 %v1761, %v4473
  %v4846 = vmul.f32 %v2062, %v4473
  %v4847 = vmul.f32 %v2064, %v4473
  %v4848 = vmul.f32 %v2314, %v4473
  %v4849 = vmul.f32 %v1462, %v4478
  %v4850 = vmul.f32 %v1464, %v4478
  %v4851 = vmul.f32 %v1765, %v4478
  %v4852 = vmul.f32 %v1767, %v4478
  %v4853 = vmul.f32 %v2068, %v4478
  %v4854 = vmul.f32 %v2070, %v4478
  %v4855 = vmul.f32 %v2319, %v4478
  %v4856 = vmul.f32 %v1466, %v4483
  %v4857 = vmul.f32 %v1468, %v4483
  %v4858 = vmul.f32 %v1769, %v4483
  %v4859 = vmul.f32 %v1771, %v4483
  %v4860 = vmul.f32 %v2072, %v4483
  %v4861 = vmul.f32 %v2074, %v4483
  %v4862 = vmul.f32 %v2322, %v4483
  %4864 = vset.pattern.permute.xlu0 0
  %4865 = vperm.xlu0 %4864, %v4161
  %v4866 = vpop.permute.xlu0 %4865
  %4869 = vset.pattern.permute.xlu0 0
  %4870 = vperm.xlu0 %4869, %v4162
  %v4871 = vpop.permute.xlu0 %4870
  %4874 = vset.pattern.permute.xlu0 0
  %4875 = vperm.xlu0 %4874, %v4163
  %v4876 = vpop.permute.xlu0 %4875
  %4879 = vset.pattern.permute.xlu0 0
  %4880 = vperm.xlu0 %4879, %v4164
  %v4881 = vpop.permute.xlu0 %4880
  %4884 = vset.pattern.permute.xlu0 0
  %4885 = vperm.xlu0 %4884, %v4165
  %v4886 = vpop.permute.xlu0 %4885
  %4889 = vset.pattern.permute.xlu0 0
  %4890 = vperm.xlu0 %4889, %v4166
  %v4891 = vpop.permute.xlu0 %4890
  %4894 = vset.pattern.permute.xlu0 0
  %4895 = vperm.xlu0 %4894, %v4167
  %v4896 = vpop.permute.xlu0 %4895
  %4899 = vset.pattern.permute.xlu0 0
  %4900 = vperm.xlu0 %4899, %v4168
  %v4901 = vpop.permute.xlu0 %4900
  %4904 = vset.pattern.permute.xlu0 0
  %4905 = vperm.xlu0 %4904, %v4169
  %v4906 = vpop.permute.xlu0 %4905
  %4909 = vset.pattern.permute.xlu0 0
  %4910 = vperm.xlu0 %4909, %v4170
  %v4911 = vpop.permute.xlu0 %4910
  %4914 = vset.pattern.permute.xlu0 0
  %4915 = vperm.xlu0 %4914, %v4171
  %v4916 = vpop.permute.xlu0 %4915
  %4919 = vset.pattern.permute.xlu0 0
  %4920 = vperm.xlu0 %4919, %v4172
  %v4921 = vpop.permute.xlu0 %4920
  %4924 = vset.pattern.permute.xlu0 0
  %4925 = vperm.xlu0 %4924, %v4173
  %v4926 = vpop.permute.xlu0 %4925
  %4929 = vset.pattern.permute.xlu0 0
  %4930 = vperm.xlu0 %4929, %v4174
  %v4931 = vpop.permute.xlu0 %4930
  %4934 = vset.pattern.permute.xlu0 0
  %4935 = vperm.xlu0 %4934, %v4175
  %v4936 = vpop.permute.xlu0 %4935
  %4939 = vset.pattern.permute.xlu0 0
  %4940 = vperm.xlu0 %4939, %v4176
  %v4941 = vpop.permute.xlu0 %4940
  %4944 = vset.pattern.permute.xlu0 0
  %4945 = vperm.xlu0 %4944, %v4177
  %v4946 = vpop.permute.xlu0 %4945
  %4949 = vset.pattern.permute.xlu0 0
  %4950 = vperm.xlu0 %4949, %v4178
  %v4951 = vpop.permute.xlu0 %4950
  %4954 = vset.pattern.permute.xlu0 0
  %4955 = vperm.xlu0 %4954, %v4179
  %v4956 = vpop.permute.xlu0 %4955
  %4959 = vset.pattern.permute.xlu0 0
  %4960 = vperm.xlu0 %4959, %v4180
  %v4961 = vpop.permute.xlu0 %4960
  %4964 = vset.pattern.permute.xlu0 0
  %4965 = vperm.xlu0 %4964, %v4181
  %v4966 = vpop.permute.xlu0 %4965
  %4969 = vset.pattern.permute.xlu0 0
  %4970 = vperm.xlu0 %4969, %v4182
  %v4971 = vpop.permute.xlu0 %4970
  %4974 = vset.pattern.permute.xlu0 0
  %4975 = vperm.xlu0 %4974, %v4183
  %v4976 = vpop.permute.xlu0 %4975
  %4979 = vset.pattern.permute.xlu0 0
  %4980 = vperm.xlu0 %4979, %v4184
  %v4981 = vpop.permute.xlu0 %4980
  %4984 = vset.pattern.permute.xlu0 0
  %4985 = vperm.xlu0 %4984, %v4185
  %v4986 = vpop.permute.xlu0 %4985
  %4989 = vset.pattern.permute.xlu0 0
  %4990 = vperm.xlu0 %4989, %v4186
  %v4991 = vpop.permute.xlu0 %4990
  %4994 = vset.pattern.permute.xlu0 0
  %4995 = vperm.xlu0 %4994, %v4187
  %v4996 = vpop.permute.xlu0 %4995
  %4999 = vset.pattern.permute.xlu0 0
  %5000 = vperm.xlu0 %4999, %v4188
  %v5001 = vpop.permute.xlu0 %5000
  %5004 = vset.pattern.permute.xlu0 0
  %5005 = vperm.xlu0 %5004, %v4189
  %v5006 = vpop.permute.xlu0 %5005
  %5009 = vset.pattern.permute.xlu0 0
  %5010 = vperm.xlu0 %5009, %v4190
  %v5011 = vpop.permute.xlu0 %5010
  %5014 = vset.pattern.permute.xlu0 0
  %5015 = vperm.xlu0 %5014, %v4191
  %v5016 = vpop.permute.xlu0 %5015
  %5019 = vset.pattern.permute.xlu0 0
  %5020 = vperm.xlu0 %5019, %v4192
  %v5021 = vpop.permute.xlu0 %5020
  %5024 = vset.pattern.permute.xlu0 0
  %5025 = vperm.xlu0 %5024, %v4193
  %v5026 = vpop.permute.xlu0 %5025
  %5029 = vset.pattern.permute.xlu0 0
  %5030 = vperm.xlu0 %5029, %v4194
  %v5031 = vpop.permute.xlu0 %5030
  %5034 = vset.pattern.permute.xlu0 0
  %5035 = vperm.xlu0 %5034, %v4195
  %v5036 = vpop.permute.xlu0 %5035
  %5039 = vset.pattern.permute.xlu0 0
  %5040 = vperm.xlu0 %5039, %v4196
  %v5041 = vpop.permute.xlu0 %5040
  %5044 = vset.pattern.permute.xlu0 0
  %5045 = vperm.xlu0 %5044, %v4197
  %v5046 = vpop.permute.xlu0 %5045
  %5049 = vset.pattern.permute.xlu0 0
  %5050 = vperm.xlu0 %5049, %v4198
  %v5051 = vpop.permute.xlu0 %5050
  %5054 = vset.pattern.permute.xlu0 0
  %5055 = vperm.xlu0 %5054, %v4199
  %v5056 = vpop.permute.xlu0 %5055
  %5059 = vset.pattern.permute.xlu0 0
  %5060 = vperm.xlu0 %5059, %v4200
  %v5061 = vpop.permute.xlu0 %5060
  %5064 = vset.pattern.permute.xlu0 0
  %5065 = vperm.xlu0 %5064, %v4201
  %v5066 = vpop.permute.xlu0 %5065
  %5069 = vset.pattern.permute.xlu0 0
  %5070 = vperm.xlu0 %5069, %v4202
  %v5071 = vpop.permute.xlu0 %5070
  %5074 = vset.pattern.permute.xlu0 0
  %5075 = vperm.xlu0 %5074, %v4203
  %v5076 = vpop.permute.xlu0 %5075
  %5079 = vset.pattern.permute.xlu0 0
  %5080 = vperm.xlu0 %5079, %v4204
  %v5081 = vpop.permute.xlu0 %5080
  %5084 = vset.pattern.permute.xlu0 0
  %5085 = vperm.xlu0 %5084, %v4205
  %v5086 = vpop.permute.xlu0 %5085
  %5089 = vset.pattern.permute.xlu0 0
  %5090 = vperm.xlu0 %5089, %v4206
  %v5091 = vpop.permute.xlu0 %5090
  %5094 = vset.pattern.permute.xlu0 0
  %5095 = vperm.xlu0 %5094, %v4207
  %v5096 = vpop.permute.xlu0 %5095
  %5099 = vset.pattern.permute.xlu0 0
  %5100 = vperm.xlu0 %5099, %v4208
  %v5101 = vpop.permute.xlu0 %5100
  %5104 = vset.pattern.permute.xlu0 0
  %5105 = vperm.xlu0 %5104, %v4209
  %v5106 = vpop.permute.xlu0 %5105
  %5109 = vset.pattern.permute.xlu0 0
  %5110 = vperm.xlu0 %5109, %v4210
  %v5111 = vpop.permute.xlu0 %5110
  %5114 = vset.pattern.permute.xlu0 0
  %5115 = vperm.xlu0 %5114, %v4211
  %v5116 = vpop.permute.xlu0 %5115
  %5119 = vset.pattern.permute.xlu0 0
  %5120 = vperm.xlu0 %5119, %v4212
  %v5121 = vpop.permute.xlu0 %5120
  %5124 = vset.pattern.permute.xlu0 0
  %5125 = vperm.xlu0 %5124, %v4213
  %v5126 = vpop.permute.xlu0 %5125
  %5129 = vset.pattern.permute.xlu0 0
  %5130 = vperm.xlu0 %5129, %v4214
  %v5131 = vpop.permute.xlu0 %5130
  %v5133 = vadd.f32 %v4485, %v4866
  %v5134 = vadd.f32 %v4486, %v4866
  %v5135 = vadd.f32 %v4487, %v4866
  %v5136 = vadd.f32 %v4488, %v4866
  %v5137 = vadd.f32 %v4489, %v4866
  %v5138 = vadd.f32 %v4490, %v4866
  %v5139 = vadd.f32 %v4491, %v4866
  %v5140 = vadd.f32 %v4492, %v4871
  %v5141 = vadd.f32 %v4493, %v4871
  %v5142 = vadd.f32 %v4494, %v4871
  %v5143 = vadd.f32 %v4495, %v4871
  %v5144 = vadd.f32 %v4496, %v4871
  %v5145 = vadd.f32 %v4497, %v4871
  %v5146 = vadd.f32 %v4498, %v4871
  %v5147 = vadd.f32 %v4499, %v4876
  %v5148 = vadd.f32 %v4500, %v4876
  %v5149 = vadd.f32 %v4501, %v4876
  %v5150 = vadd.f32 %v4502, %v4876
  %v5151 = vadd.f32 %v4503, %v4876
  %v5152 = vadd.f32 %v4504, %v4876
  %v5153 = vadd.f32 %v4505, %v4876
  %v5154 = vadd.f32 %v4506, %v4881
  %v5155 = vadd.f32 %v4507, %v4881
  %v5156 = vadd.f32 %v4508, %v4881
  %v5157 = vadd.f32 %v4509, %v4881
  %v5158 = vadd.f32 %v4510, %v4881
  %v5159 = vadd.f32 %v4511, %v4881
  %v5160 = vadd.f32 %v4512, %v4881
  %v5161 = vadd.f32 %v4513, %v4886
  %v5162 = vadd.f32 %v4514, %v4886
  %v5163 = vadd.f32 %v4515, %v4886
  %v5164 = vadd.f32 %v4516, %v4886
  %v5165 = vadd.f32 %v4517, %v4886
  %v5166 = vadd.f32 %v4518, %v4886
  %v5167 = vadd.f32 %v4519, %v4886
  %v5168 = vadd.f32 %v4520, %v4891
  %v5169 = vadd.f32 %v4521, %v4891
  %v5170 = vadd.f32 %v4522, %v4891
  %v5171 = vadd.f32 %v4523, %v4891
  %v5172 = vadd.f32 %v4524, %v4891
  %v5173 = vadd.f32 %v4525, %v4891
  %v5174 = vadd.f32 %v4526, %v4891
  %v5175 = vadd.f32 %v4527, %v4896
  %v5176 = vadd.f32 %v4528, %v4896
  %v5177 = vadd.f32 %v4529, %v4896
  %v5178 = vadd.f32 %v4530, %v4896
  %v5179 = vadd.f32 %v4531, %v4896
  %v5180 = vadd.f32 %v4532, %v4896
  %v5181 = vadd.f32 %v4533, %v4896
  %v5182 = vadd.f32 %v4534, %v4901
  %v5183 = vadd.f32 %v4535, %v4901
  %v5184 = vadd.f32 %v4536, %v4901
  %v5185 = vadd.f32 %v4537, %v4901
  %v5186 = vadd.f32 %v4538, %v4901
  %v5187 = vadd.f32 %v4539, %v4901
  %v5188 = vadd.f32 %v4540, %v4901
  %v5189 = vadd.f32 %v4541, %v4906
  %v5190 = vadd.f32 %v4542, %v4906
  %v5191 = vadd.f32 %v4543, %v4906
  %v5192 = vadd.f32 %v4544, %v4906
  %v5193 = vadd.f32 %v4545, %v4906
  %v5194 = vadd.f32 %v4546, %v4906
  %v5195 = vadd.f32 %v4547, %v4906
  %v5196 = vadd.f32 %v4548, %v4911
  %v5197 = vadd.f32 %v4549, %v4911
  %v5198 = vadd.f32 %v4550, %v4911
  %v5199 = vadd.f32 %v4551, %v4911
  %v5200 = vadd.f32 %v4552, %v4911
  %v5201 = vadd.f32 %v4553, %v4911
  %v5202 = vadd.f32 %v4554, %v4911
  %v5203 = vadd.f32 %v4555, %v4916
  %v5204 = vadd.f32 %v4556, %v4916
  %v5205 = vadd.f32 %v4557, %v4916
  %v5206 = vadd.f32 %v4558, %v4916
  %v5207 = vadd.f32 %v4559, %v4916
  %v5208 = vadd.f32 %v4560, %v4916
  %v5209 = vadd.f32 %v4561, %v4916
  %v5210 = vadd.f32 %v4562, %v4921
  %v5211 = vadd.f32 %v4563, %v4921
  %v5212 = vadd.f32 %v4564, %v4921
  %v5213 = vadd.f32 %v4565, %v4921
  %v5214 = vadd.f32 %v4566, %v4921
  %v5215 = vadd.f32 %v4567, %v4921
  %v5216 = vadd.f32 %v4568, %v4921
  %v5217 = vadd.f32 %v4569, %v4926
  %v5218 = vadd.f32 %v4570, %v4926
  %v5219 = vadd.f32 %v4571, %v4926
  %v5220 = vadd.f32 %v4572, %v4926
  %v5221 = vadd.f32 %v4573, %v4926
  %v5222 = vadd.f32 %v4574, %v4926
  %v5223 = vadd.f32 %v4575, %v4926
  %v5224 = vadd.f32 %v4576, %v4931
  %v5225 = vadd.f32 %v4577, %v4931
  %v5226 = vadd.f32 %v4578, %v4931
  %v5227 = vadd.f32 %v4579, %v4931
  %v5228 = vadd.f32 %v4580, %v4931
  %v5229 = vadd.f32 %v4581, %v4931
  %v5230 = vadd.f32 %v4582, %v4931
  %v5231 = vadd.f32 %v4583, %v4936
  %v5232 = vadd.f32 %v4584, %v4936
  %v5233 = vadd.f32 %v4585, %v4936
  %v5234 = vadd.f32 %v4586, %v4936
  %v5235 = vadd.f32 %v4587, %v4936
  %v5236 = vadd.f32 %v4588, %v4936
  %v5237 = vadd.f32 %v4589, %v4936
  %v5238 = vadd.f32 %v4590, %v4941
  %v5239 = vadd.f32 %v4591, %v4941
  %v5240 = vadd.f32 %v4592, %v4941
  %v5241 = vadd.f32 %v4593, %v4941
  %v5242 = vadd.f32 %v4594, %v4941
  %v5243 = vadd.f32 %v4595, %v4941
  %v5244 = vadd.f32 %v4596, %v4941
  %v5245 = vadd.f32 %v4597, %v4946
  %v5246 = vadd.f32 %v4598, %v4946
  %v5247 = vadd.f32 %v4599, %v4946
  %v5248 = vadd.f32 %v4600, %v4946
  %v5249 = vadd.f32 %v4601, %v4946
  %v5250 = vadd.f32 %v4602, %v4946
  %v5251 = vadd.f32 %v4603, %v4946
  %v5252 = vadd.f32 %v4604, %v4951
  %v5253 = vadd.f32 %v4605, %v4951
  %v5254 = vadd.f32 %v4606, %v4951
  %v5255 = vadd.f32 %v4607, %v4951
  %v5256 = vadd.f32 %v4608, %v4951
  %v5257 = vadd.f32 %v4609, %v4951
  %v5258 = vadd.f32 %v4610, %v4951
  %v5259 = vadd.f32 %v4611, %v4956
  %v5260 = vadd.f32 %v4612, %v4956
  %v5261 = vadd.f32 %v4613, %v4956
  %v5262 = vadd.f32 %v4614, %v4956
  %v5263 = vadd.f32 %v4615, %v4956
  %v5264 = vadd.f32 %v4616, %v4956
  %v5265 = vadd.f32 %v4617, %v4956
  %v5266 = vadd.f32 %v4618, %v4961
  %v5267 = vadd.f32 %v4619, %v4961
  %v5268 = vadd.f32 %v4620, %v4961
  %v5269 = vadd.f32 %v4621, %v4961
  %v5270 = vadd.f32 %v4622, %v4961
  %v5271 = vadd.f32 %v4623, %v4961
  %v5272 = vadd.f32 %v4624, %v4961
  %v5273 = vadd.f32 %v4625, %v4966
  %v5274 = vadd.f32 %v4626, %v4966
  %v5275 = vadd.f32 %v4627, %v4966
  %v5276 = vadd.f32 %v4628, %v4966
  %v5277 = vadd.f32 %v4629, %v4966
  %v5278 = vadd.f32 %v4630, %v4966
  %v5279 = vadd.f32 %v4631, %v4966
  %v5280 = vadd.f32 %v4632, %v4971
  %v5281 = vadd.f32 %v4633, %v4971
  %v5282 = vadd.f32 %v4634, %v4971
  %v5283 = vadd.f32 %v4635, %v4971
  %v5284 = vadd.f32 %v4636, %v4971
  %v5285 = vadd.f32 %v4637, %v4971
  %v5286 = vadd.f32 %v4638, %v4971
  %v5287 = vadd.f32 %v4639, %v4976
  %v5288 = vadd.f32 %v4640, %v4976
  %v5289 = vadd.f32 %v4641, %v4976
  %v5290 = vadd.f32 %v4642, %v4976
  %v5291 = vadd.f32 %v4643, %v4976
  %v5292 = vadd.f32 %v4644, %v4976
  %v5293 = vadd.f32 %v4645, %v4976
  %v5294 = vadd.f32 %v4646, %v4981
  %v5295 = vadd.f32 %v4647, %v4981
  %v5296 = vadd.f32 %v4648, %v4981
  %v5297 = vadd.f32 %v4649, %v4981
  %v5298 = vadd.f32 %v4650, %v4981
  %v5299 = vadd.f32 %v4651, %v4981
  %v5300 = vadd.f32 %v4652, %v4981
  %v5301 = vadd.f32 %v4653, %v4986
  %v5302 = vadd.f32 %v4654, %v4986
  %v5303 = vadd.f32 %v4655, %v4986
  %v5304 = vadd.f32 %v4656, %v4986
  %v5305 = vadd.f32 %v4657, %v4986
  %v5306 = vadd.f32 %v4658, %v4986
  %v5307 = vadd.f32 %v4659, %v4986
  %v5308 = vadd.f32 %v4660, %v4991
  %v5309 = vadd.f32 %v4661, %v4991
  %v5310 = vadd.f32 %v4662, %v4991
  %v5311 = vadd.f32 %v4663, %v4991
  %v5312 = vadd.f32 %v4664, %v4991
  %v5313 = vadd.f32 %v4665, %v4991
  %v5314 = vadd.f32 %v4666, %v4991
  %v5315 = vadd.f32 %v4667, %v4996
  %v5316 = vadd.f32 %v4668, %v4996
  %v5317 = vadd.f32 %v4669, %v4996
  %v5318 = vadd.f32 %v4670, %v4996
  %v5319 = vadd.f32 %v4671, %v4996
  %v5320 = vadd.f32 %v4672, %v4996
  %v5321 = vadd.f32 %v4673, %v4996
  %v5322 = vadd.f32 %v4674, %v5001
  %v5323 = vadd.f32 %v4675, %v5001
  %v5324 = vadd.f32 %v4676, %v5001
  %v5325 = vadd.f32 %v4677, %v5001
  %v5326 = vadd.f32 %v4678, %v5001
  %v5327 = vadd.f32 %v4679, %v5001
  %v5328 = vadd.f32 %v4680, %v5001
  %v5329 = vadd.f32 %v4681, %v5006
  %v5330 = vadd.f32 %v4682, %v5006
  %v5331 = vadd.f32 %v4683, %v5006
  %v5332 = vadd.f32 %v4684, %v5006
  %v5333 = vadd.f32 %v4685, %v5006
  %v5334 = vadd.f32 %v4686, %v5006
  %v5335 = vadd.f32 %v4687, %v5006
  %v5336 = vadd.f32 %v4688, %v5011
  %v5337 = vadd.f32 %v4689, %v5011
  %v5338 = vadd.f32 %v4690, %v5011
  %v5339 = vadd.f32 %v4691, %v5011
  %v5340 = vadd.f32 %v4692, %v5011
  %v5341 = vadd.f32 %v4693, %v5011
  %v5342 = vadd.f32 %v4694, %v5011
  %v5343 = vadd.f32 %v4695, %v5016
  %v5344 = vadd.f32 %v4696, %v5016
  %v5345 = vadd.f32 %v4697, %v5016
  %v5346 = vadd.f32 %v4698, %v5016
  %v5347 = vadd.f32 %v4699, %v5016
  %v5348 = vadd.f32 %v4700, %v5016
  %v5349 = vadd.f32 %v4701, %v5016
  %v5350 = vadd.f32 %v4702, %v5021
  %v5351 = vadd.f32 %v4703, %v5021
  %v5352 = vadd.f32 %v4704, %v5021
  %v5353 = vadd.f32 %v4705, %v5021
  %v5354 = vadd.f32 %v4706, %v5021
  %v5355 = vadd.f32 %v4707, %v5021
  %v5356 = vadd.f32 %v4708, %v5021
  %v5357 = vadd.f32 %v4709, %v5026
  %v5358 = vadd.f32 %v4710, %v5026
  %v5359 = vadd.f32 %v4711, %v5026
  %v5360 = vadd.f32 %v4712, %v5026
  %v5361 = vadd.f32 %v4713, %v5026
  %v5362 = vadd.f32 %v4714, %v5026
  %v5363 = vadd.f32 %v4715, %v5026
  %v5364 = vadd.f32 %v4716, %v5031
  %v5365 = vadd.f32 %v4717, %v5031
  %v5366 = vadd.f32 %v4718, %v5031
  %v5367 = vadd.f32 %v4719, %v5031
  %v5368 = vadd.f32 %v4720, %v5031
  %v5369 = vadd.f32 %v4721, %v5031
  %v5370 = vadd.f32 %v4722, %v5031
  %v5371 = vadd.f32 %v4723, %v5036
  %v5372 = vadd.f32 %v4724, %v5036
  %v5373 = vadd.f32 %v4725, %v5036
  %v5374 = vadd.f32 %v4726, %v5036
  %v5375 = vadd.f32 %v4727, %v5036
  %v5376 = vadd.f32 %v4728, %v5036
  %v5377 = vadd.f32 %v4729, %v5036
  %v5378 = vadd.f32 %v4730, %v5041
  %v5379 = vadd.f32 %v4731, %v5041
  %v5380 = vadd.f32 %v4732, %v5041
  %v5381 = vadd.f32 %v4733, %v5041
  %v5382 = vadd.f32 %v4734, %v5041
  %v5383 = vadd.f32 %v4735, %v5041
  %v5384 = vadd.f32 %v4736, %v5041
  %v5385 = vadd.f32 %v4737, %v5046
  %v5386 = vadd.f32 %v4738, %v5046
  %v5387 = vadd.f32 %v4739, %v5046
  %v5388 = vadd.f32 %v4740, %v5046
  %v5389 = vadd.f32 %v4741, %v5046
  %v5390 = vadd.f32 %v4742, %v5046
  %v5391 = vadd.f32 %v4743, %v5046
  %v5392 = vadd.f32 %v4744, %v5051
  %v5393 = vadd.f32 %v4745, %v5051
  %v5394 = vadd.f32 %v4746, %v5051
  %v5395 = vadd.f32 %v4747, %v5051
  %v5396 = vadd.f32 %v4748, %v5051
  %v5397 = vadd.f32 %v4749, %v5051
  %v5398 = vadd.f32 %v4750, %v5051
  %v5399 = vadd.f32 %v4751, %v5056
  %v5400 = vadd.f32 %v4752, %v5056
  %v5401 = vadd.f32 %v4753, %v5056
  %v5402 = vadd.f32 %v4754, %v5056
  %v5403 = vadd.f32 %v4755, %v5056
  %v5404 = vadd.f32 %v4756, %v5056
  %v5405 = vadd.f32 %v4757, %v5056
  %v5406 = vadd.f32 %v4758, %v5061
  %v5407 = vadd.f32 %v4759, %v5061
  %v5408 = vadd.f32 %v4760, %v5061
  %v5409 = vadd.f32 %v4761, %v5061
  %v5410 = vadd.f32 %v4762, %v5061
  %v5411 = vadd.f32 %v4763, %v5061
  %v5412 = vadd.f32 %v4764, %v5061
  %v5413 = vadd.f32 %v4765, %v5066
  %v5414 = vadd.f32 %v4766, %v5066
  %v5415 = vadd.f32 %v4767, %v5066
  %v5416 = vadd.f32 %v4768, %v5066
  %v5417 = vadd.f32 %v4769, %v5066
  %v5418 = vadd.f32 %v4770, %v5066
  %v5419 = vadd.f32 %v4771, %v5066
  %v5420 = vadd.f32 %v4772, %v5071
  %v5421 = vadd.f32 %v4773, %v5071
  %v5422 = vadd.f32 %v4774, %v5071
  %v5423 = vadd.f32 %v4775, %v5071
  %v5424 = vadd.f32 %v4776, %v5071
  %v5425 = vadd.f32 %v4777, %v5071
  %v5426 = vadd.f32 %v4778, %v5071
  %v5427 = vadd.f32 %v4779, %v5076
  %v5428 = vadd.f32 %v4780, %v5076
  %v5429 = vadd.f32 %v4781, %v5076
  %v5430 = vadd.f32 %v4782, %v5076
  %v5431 = vadd.f32 %v4783, %v5076
  %v5432 = vadd.f32 %v4784, %v5076
  %v5433 = vadd.f32 %v4785, %v5076
  %v5434 = vadd.f32 %v4786, %v5081
  %v5435 = vadd.f32 %v4787, %v5081
  %v5436 = vadd.f32 %v4788, %v5081
  %v5437 = vadd.f32 %v4789, %v5081
  %v5438 = vadd.f32 %v4790, %v5081
  %v5439 = vadd.f32 %v4791, %v5081
  %v5440 = vadd.f32 %v4792, %v5081
  %v5441 = vadd.f32 %v4793, %v5086
  %v5442 = vadd.f32 %v4794, %v5086
  %v5443 = vadd.f32 %v4795, %v5086
  %v5444 = vadd.f32 %v4796, %v5086
  %v5445 = vadd.f32 %v4797, %v5086
  %v5446 = vadd.f32 %v4798, %v5086
  %v5447 = vadd.f32 %v4799, %v5086
  %v5448 = vadd.f32 %v4800, %v5091
  %v5449 = vadd.f32 %v4801, %v5091
  %v5450 = vadd.f32 %v4802, %v5091
  %v5451 = vadd.f32 %v4803, %v5091
  %v5452 = vadd.f32 %v4804, %v5091
  %v5453 = vadd.f32 %v4805, %v5091
  %v5454 = vadd.f32 %v4806, %v5091
  %v5455 = vadd.f32 %v4807, %v5096
  %v5456 = vadd.f32 %v4808, %v5096
  %v5457 = vadd.f32 %v4809, %v5096
  %v5458 = vadd.f32 %v4810, %v5096
  %v5459 = vadd.f32 %v4811, %v5096
  %v5460 = vadd.f32 %v4812, %v5096
  %v5461 = vadd.f32 %v4813, %v5096
  %v5462 = vadd.f32 %v4814, %v5101
  %v5463 = vadd.f32 %v4815, %v5101
  %v5464 = vadd.f32 %v4816, %v5101
  %v5465 = vadd.f32 %v4817, %v5101
  %v5466 = vadd.f32 %v4818, %v5101
  %v5467 = vadd.f32 %v4819, %v5101
  %v5468 = vadd.f32 %v4820, %v5101
  %v5469 = vadd.f32 %v4821, %v5106
  %v5470 = vadd.f32 %v4822, %v5106
  %v5471 = vadd.f32 %v4823, %v5106
  %v5472 = vadd.f32 %v4824, %v5106
  %v5473 = vadd.f32 %v4825, %v5106
  %v5474 = vadd.f32 %v4826, %v5106
  %v5475 = vadd.f32 %v4827, %v5106
  %v5476 = vadd.f32 %v4828, %v5111
  %v5477 = vadd.f32 %v4829, %v5111
  %v5478 = vadd.f32 %v4830, %v5111
  %v5479 = vadd.f32 %v4831, %v5111
  %v5480 = vadd.f32 %v4832, %v5111
  %v5481 = vadd.f32 %v4833, %v5111
  %v5482 = vadd.f32 %v4834, %v5111
  %v5483 = vadd.f32 %v4835, %v5116
  %v5484 = vadd.f32 %v4836, %v5116
  %v5485 = vadd.f32 %v4837, %v5116
  %v5486 = vadd.f32 %v4838, %v5116
  %v5487 = vadd.f32 %v4839, %v5116
  %v5488 = vadd.f32 %v4840, %v5116
  %v5489 = vadd.f32 %v4841, %v5116
  %v5490 = vadd.f32 %v4842, %v5121
  %v5491 = vadd.f32 %v4843, %v5121
  %v5492 = vadd.f32 %v4844, %v5121
  %v5493 = vadd.f32 %v4845, %v5121
  %v5494 = vadd.f32 %v4846, %v5121
  %v5495 = vadd.f32 %v4847, %v5121
  %v5496 = vadd.f32 %v4848, %v5121
  %v5497 = vadd.f32 %v4849, %v5126
  %v5498 = vadd.f32 %v4850, %v5126
  %v5499 = vadd.f32 %v4851, %v5126
  %v5500 = vadd.f32 %v4852, %v5126
  %v5501 = vadd.f32 %v4853, %v5126
  %v5502 = vadd.f32 %v4854, %v5126
  %v5503 = vadd.f32 %v4855, %v5126
  %v5504 = vadd.f32 %v4856, %v5131
  %v5505 = vadd.f32 %v4857, %v5131
  %v5506 = vadd.f32 %v4858, %v5131
  %v5507 = vadd.f32 %v4859, %v5131
  %v5508 = vadd.f32 %v4860, %v5131
  %v5509 = vadd.f32 %v4861, %v5131
  %v5510 = vadd.f32 %v4862, %v5131
  %5511 = vst [vmem:[%s7] sm:$0xff] %v5133
  %5512 = vst [vmem:[%s7 + $0x8] sm:$0xff] %v5134
  %5513 = vst [vmem:[%s7 + $0x10] sm:$0xff] %v5135
  %5514 = vst [vmem:[%s7 + $0x18] sm:$0xff] %v5136
  %5515 = vst [vmem:[%s7 + $0x20] sm:$0xff] %v5137
  %5516 = vst [vmem:[%s7 + $0x28] sm:$0xff] %v5138
  %5517 = vst [vmem:[%s7 + $0x30] sm:$0xff] %v5139
  %5518 = vst [vmem:[%s7 + $0x38] sm:$0xff] %v5140
  %5519 = vst [vmem:[%s7 + $0x40] sm:$0xff] %v5141
  %5520 = vst [vmem:[%s7 + $0x48] sm:$0xff] %v5142
  %5521 = vst [vmem:[%s7 + $0x50] sm:$0xff] %v5143
  %5522 = vst [vmem:[%s7 + $0x58] sm:$0xff] %v5144
  %5523 = vst [vmem:[%s7 + $0x60] sm:$0xff] %v5145
  %5524 = vst [vmem:[%s7 + $0x68] sm:$0xff] %v5146
  %5525 = vst [vmem:[%s7 + $0x70] sm:$0xff] %v5147
  %5526 = vst [vmem:[%s7 + $0x78] sm:$0xff] %v5148
  %5527 = vst [vmem:[%s7 + $0x80] sm:$0xff] %v5149
  %5528 = vst [vmem:[%s7 + $0x88] sm:$0xff] %v5150
  %5529 = vst [vmem:[%s7 + $0x90] sm:$0xff] %v5151
  %5530 = vst [vmem:[%s7 + $0x98] sm:$0xff] %v5152
  %5531 = vst [vmem:[%s7 + $0xa0] sm:$0xff] %v5153
  %5532 = vst [vmem:[%s7 + $0xa8] sm:$0xff] %v5154
  %5533 = vst [vmem:[%s7 + $0xb0] sm:$0xff] %v5155
  %5534 = vst [vmem:[%s7 + $0xb8] sm:$0xff] %v5156
  %5535 = vst [vmem:[%s7 + $0xc0] sm:$0xff] %v5157
  %5536 = vst [vmem:[%s7 + $0xc8] sm:$0xff] %v5158
  %5537 = vst [vmem:[%s7 + $0xd0] sm:$0xff] %v5159
  %5538 = vst [vmem:[%s7 + $0xd8] sm:$0xff] %v5160
  %5539 = vst [vmem:[%s7 + $0xe0] sm:$0xff] %v5161
  %5540 = vst [vmem:[%s7 + $0xe8] sm:$0xff] %v5162
  %5541 = vst [vmem:[%s7 + $0xf0] sm:$0xff] %v5163
  %5542 = vst [vmem:[%s7 + $0xf8] sm:$0xff] %v5164
  %5543 = vst [vmem:[%s7 + $0x100] sm:$0xff] %v5165
  %5544 = vst [vmem:[%s7 + $0x108] sm:$0xff] %v5166
  %5545 = vst [vmem:[%s7 + $0x110] sm:$0xff] %v5167
  %5546 = vst [vmem:[%s7 + $0x118] sm:$0xff] %v5168
  %5547 = vst [vmem:[%s7 + $0x120] sm:$0xff] %v5169
  %5548 = vst [vmem:[%s7 + $0x128] sm:$0xff] %v5170
  %5549 = vst [vmem:[%s7 + $0x130] sm:$0xff] %v5171
  %5550 = vst [vmem:[%s7 + $0x138] sm:$0xff] %v5172
  %5551 = vst [vmem:[%s7 + $0x140] sm:$0xff] %v5173
  %5552 = vst [vmem:[%s7 + $0x148] sm:$0xff] %v5174
  %5553 = vst [vmem:[%s7 + $0x150] sm:$0xff] %v5175
  %5554 = vst [vmem:[%s7 + $0x158] sm:$0xff] %v5176
  %5555 = vst [vmem:[%s7 + $0x160] sm:$0xff] %v5177
  %5556 = vst [vmem:[%s7 + $0x168] sm:$0xff] %v5178
  %5557 = vst [vmem:[%s7 + $0x170] sm:$0xff] %v5179
  %5558 = vst [vmem:[%s7 + $0x178] sm:$0xff] %v5180
  %5559 = vst [vmem:[%s7 + $0x180] sm:$0xff] %v5181
  %5560 = vst [vmem:[%s7 + $0x188] sm:$0xff] %v5182
  %5561 = vst [vmem:[%s7 + $0x190] sm:$0xff] %v5183
  %5562 = vst [vmem:[%s7 + $0x198] sm:$0xff] %v5184
  %5563 = vst [vmem:[%s7 + $0x1a0] sm:$0xff] %v5185
  %5564 = vst [vmem:[%s7 + $0x1a8] sm:$0xff] %v5186
  %5565 = vst [vmem:[%s7 + $0x1b0] sm:$0xff] %v5187
  %5566 = vst [vmem:[%s7 + $0x1b8] sm:$0xff] %v5188
  %5567 = vst [vmem:[%s7 + $0x1c0] sm:$0xff] %v5189
  %5568 = vst [vmem:[%s7 + $0x1c8] sm:$0xff] %v5190
  %5569 = vst [vmem:[%s7 + $0x1d0] sm:$0xff] %v5191
  %5570 = vst [vmem:[%s7 + $0x1d8] sm:$0xff] %v5192
  %5571 = vst [vmem:[%s7 + $0x1e0] sm:$0xff] %v5193
  %5572 = vst [vmem:[%s7 + $0x1e8] sm:$0xff] %v5194
  %5573 = vst [vmem:[%s7 + $0x1f0] sm:$0xff] %v5195
  %5574 = vst [vmem:[%s7 + $0x1f8] sm:$0xff] %v5196
  %5575 = vst [vmem:[%s7 + $0x200] sm:$0xff] %v5197
  %5576 = vst [vmem:[%s7 + $0x208] sm:$0xff] %v5198
  %5577 = vst [vmem:[%s7 + $0x210] sm:$0xff] %v5199
  %5578 = vst [vmem:[%s7 + $0x218] sm:$0xff] %v5200
  %5579 = vst [vmem:[%s7 + $0x220] sm:$0xff] %v5201
  %5580 = vst [vmem:[%s7 + $0x228] sm:$0xff] %v5202
  %5581 = vst [vmem:[%s7 + $0x230] sm:$0xff] %v5203
  %5582 = vst [vmem:[%s7 + $0x238] sm:$0xff] %v5204
  %5583 = vst [vmem:[%s7 + $0x240] sm:$0xff] %v5205
  %5584 = vst [vmem:[%s7 + $0x248] sm:$0xff] %v5206
  %5585 = vst [vmem:[%s7 + $0x250] sm:$0xff] %v5207
  %5586 = vst [vmem:[%s7 + $0x258] sm:$0xff] %v5208
  %5587 = vst [vmem:[%s7 + $0x260] sm:$0xff] %v5209
  %5588 = vst [vmem:[%s7 + $0x268] sm:$0xff] %v5210
  %5589 = vst [vmem:[%s7 + $0x270] sm:$0xff] %v5211
  %5590 = vst [vmem:[%s7 + $0x278] sm:$0xff] %v5212
  %5591 = vst [vmem:[%s7 + $0x280] sm:$0xff] %v5213
  %5592 = vst [vmem:[%s7 + $0x288] sm:$0xff] %v5214
  %5593 = vst [vmem:[%s7 + $0x290] sm:$0xff] %v5215
  %5594 = vst [vmem:[%s7 + $0x298] sm:$0xff] %v5216
  %5595 = vst [vmem:[%s7 + $0x2a0] sm:$0xff] %v5217
  %5596 = vst [vmem:[%s7 + $0x2a8] sm:$0xff] %v5218
  %5597 = vst [vmem:[%s7 + $0x2b0] sm:$0xff] %v5219
  %5598 = vst [vmem:[%s7 + $0x2b8] sm:$0xff] %v5220
  %5599 = vst [vmem:[%s7 + $0x2c0] sm:$0xff] %v5221
  %5600 = vst [vmem:[%s7 + $0x2c8] sm:$0xff] %v5222
  %5601 = vst [vmem:[%s7 + $0x2d0] sm:$0xff] %v5223
  %5602 = vst [vmem:[%s7 + $0x2d8] sm:$0xff] %v5224
  %5603 = vst [vmem:[%s7 + $0x2e0] sm:$0xff] %v5225
  %5604 = vst [vmem:[%s7 + $0x2e8] sm:$0xff] %v5226
  %5605 = vst [vmem:[%s7 + $0x2f0] sm:$0xff] %v5227
  %5606 = vst [vmem:[%s7 + $0x2f8] sm:$0xff] %v5228
  %5607 = vst [vmem:[%s7 + $0x300] sm:$0xff] %v5229
  %5608 = vst [vmem:[%s7 + $0x308] sm:$0xff] %v5230
  %5609 = vst [vmem:[%s7 + $0x310] sm:$0xff] %v5231
  %5610 = vst [vmem:[%s7 + $0x318] sm:$0xff] %v5232
  %5611 = vst [vmem:[%s7 + $0x320] sm:$0xff] %v5233
  %5612 = vst [vmem:[%s7 + $0x328] sm:$0xff] %v5234
  %5613 = vst [vmem:[%s7 + $0x330] sm:$0xff] %v5235
  %5614 = vst [vmem:[%s7 + $0x338] sm:$0xff] %v5236
  %5615 = vst [vmem:[%s7 + $0x340] sm:$0xff] %v5237
  %5616 = vst [vmem:[%s7 + $0x348] sm:$0xff] %v5238
  %5617 = vst [vmem:[%s7 + $0x350] sm:$0xff] %v5239
  %5618 = vst [vmem:[%s7 + $0x358] sm:$0xff] %v5240
  %5619 = vst [vmem:[%s7 + $0x360] sm:$0xff] %v5241
  %5620 = vst [vmem:[%s7 + $0x368] sm:$0xff] %v5242
  %5621 = vst [vmem:[%s7 + $0x370] sm:$0xff] %v5243
  %5622 = vst [vmem:[%s7 + $0x378] sm:$0xff] %v5244
  %5623 = vst [vmem:[%s7 + $0x380] sm:$0xff] %v5245
  %5624 = vst [vmem:[%s7 + $0x388] sm:$0xff] %v5246
  %5625 = vst [vmem:[%s7 + $0x390] sm:$0xff] %v5247
  %5626 = vst [vmem:[%s7 + $0x398] sm:$0xff] %v5248
  %5627 = vst [vmem:[%s7 + $0x3a0] sm:$0xff] %v5249
  %5628 = vst [vmem:[%s7 + $0x3a8] sm:$0xff] %v5250
  %5629 = vst [vmem:[%s7 + $0x3b0] sm:$0xff] %v5251
  %5630 = vst [vmem:[%s7 + $0x3b8] sm:$0xff] %v5252
  %5631 = vst [vmem:[%s7 + $0x3c0] sm:$0xff] %v5253
  %5632 = vst [vmem:[%s7 + $0x3c8] sm:$0xff] %v5254
  %5633 = vst [vmem:[%s7 + $0x3d0] sm:$0xff] %v5255
  %5634 = vst [vmem:[%s7 + $0x3d8] sm:$0xff] %v5256
  %5635 = vst [vmem:[%s7 + $0x3e0] sm:$0xff] %v5257
  %5636 = vst [vmem:[%s7 + $0x3e8] sm:$0xff] %v5258
  %5637 = vst [vmem:[%s7 + $0x3f0] sm:$0xff] %v5259
  %5638 = vst [vmem:[%s7 + $0x3f8] sm:$0xff] %v5260
  %5639 = vst [vmem:[%s7 + $0x400] sm:$0xff] %v5261
  %5640 = vst [vmem:[%s7 + $0x408] sm:$0xff] %v5262
  %5641 = vst [vmem:[%s7 + $0x410] sm:$0xff] %v5263
  %5642 = vst [vmem:[%s7 + $0x418] sm:$0xff] %v5264
  %5643 = vst [vmem:[%s7 + $0x420] sm:$0xff] %v5265
  %5644 = vst [vmem:[%s7 + $0x428] sm:$0xff] %v5266
  %5645 = vst [vmem:[%s7 + $0x430] sm:$0xff] %v5267
  %5646 = vst [vmem:[%s7 + $0x438] sm:$0xff] %v5268
  %5647 = vst [vmem:[%s7 + $0x440] sm:$0xff] %v5269
  %5648 = vst [vmem:[%s7 + $0x448] sm:$0xff] %v5270
  %5649 = vst [vmem:[%s7 + $0x450] sm:$0xff] %v5271
  %5650 = vst [vmem:[%s7 + $0x458] sm:$0xff] %v5272
  %5651 = vst [vmem:[%s7 + $0x460] sm:$0xff] %v5273
  %5652 = vst [vmem:[%s7 + $0x468] sm:$0xff] %v5274
  %5653 = vst [vmem:[%s7 + $0x470] sm:$0xff] %v5275
  %5654 = vst [vmem:[%s7 + $0x478] sm:$0xff] %v5276
  %5655 = vst [vmem:[%s7 + $0x480] sm:$0xff] %v5277
  %5656 = vst [vmem:[%s7 + $0x488] sm:$0xff] %v5278
  %5657 = vst [vmem:[%s7 + $0x490] sm:$0xff] %v5279
  %5658 = vst [vmem:[%s7 + $0x498] sm:$0xff] %v5280
  %5659 = vst [vmem:[%s7 + $0x4a0] sm:$0xff] %v5281
  %5660 = vst [vmem:[%s7 + $0x4a8] sm:$0xff] %v5282
  %5661 = vst [vmem:[%s7 + $0x4b0] sm:$0xff] %v5283
  %5662 = vst [vmem:[%s7 + $0x4b8] sm:$0xff] %v5284
  %5663 = vst [vmem:[%s7 + $0x4c0] sm:$0xff] %v5285
  %5664 = vst [vmem:[%s7 + $0x4c8] sm:$0xff] %v5286
  %5665 = vst [vmem:[%s7 + $0x4d0] sm:$0xff] %v5287
  %5666 = vst [vmem:[%s7 + $0x4d8] sm:$0xff] %v5288
  %5667 = vst [vmem:[%s7 + $0x4e0] sm:$0xff] %v5289
  %5668 = vst [vmem:[%s7 + $0x4e8] sm:$0xff] %v5290
  %5669 = vst [vmem:[%s7 + $0x4f0] sm:$0xff] %v5291
  %5670 = vst [vmem:[%s7 + $0x4f8] sm:$0xff] %v5292
  %5671 = vst [vmem:[%s7 + $0x500] sm:$0xff] %v5293
  %5672 = vst [vmem:[%s7 + $0x508] sm:$0xff] %v5294
  %5673 = vst [vmem:[%s7 + $0x510] sm:$0xff] %v5295
  %5674 = vst [vmem:[%s7 + $0x518] sm:$0xff] %v5296
  %5675 = vst [vmem:[%s7 + $0x520] sm:$0xff] %v5297
  %5676 = vst [vmem:[%s7 + $0x528] sm:$0xff] %v5298
  %5677 = vst [vmem:[%s7 + $0x530] sm:$0xff] %v5299
  %5678 = vst [vmem:[%s7 + $0x538] sm:$0xff] %v5300
  %5679 = vst [vmem:[%s7 + $0x540] sm:$0xff] %v5301
  %5680 = vst [vmem:[%s7 + $0x548] sm:$0xff] %v5302
  %5681 = vst [vmem:[%s7 + $0x550] sm:$0xff] %v5303
  %5682 = vst [vmem:[%s7 + $0x558] sm:$0xff] %v5304
  %5683 = vst [vmem:[%s7 + $0x560] sm:$0xff] %v5305
  %5684 = vst [vmem:[%s7 + $0x568] sm:$0xff] %v5306
  %5685 = vst [vmem:[%s7 + $0x570] sm:$0xff] %v5307
  %5686 = vst [vmem:[%s7 + $0x578] sm:$0xff] %v5308
  %5687 = vst [vmem:[%s7 + $0x580] sm:$0xff] %v5309
  %5688 = vst [vmem:[%s7 + $0x588] sm:$0xff] %v5310
  %5689 = vst [vmem:[%s7 + $0x590] sm:$0xff] %v5311
  %5690 = vst [vmem:[%s7 + $0x598] sm:$0xff] %v5312
  %5691 = vst [vmem:[%s7 + $0x5a0] sm:$0xff] %v5313
  %5692 = vst [vmem:[%s7 + $0x5a8] sm:$0xff] %v5314
  %5693 = vst [vmem:[%s7 + $0x5b0] sm:$0xff] %v5315
  %5694 = vst [vmem:[%s7 + $0x5b8] sm:$0xff] %v5316
  %5695 = vst [vmem:[%s7 + $0x5c0] sm:$0xff] %v5317
  %5696 = vst [vmem:[%s7 + $0x5c8] sm:$0xff] %v5318
  %5697 = vst [vmem:[%s7 + $0x5d0] sm:$0xff] %v5319
  %5698 = vst [vmem:[%s7 + $0x5d8] sm:$0xff] %v5320
  %5699 = vst [vmem:[%s7 + $0x5e0] sm:$0xff] %v5321
  %5700 = vst [vmem:[%s7 + $0x5e8] sm:$0xff] %v5322
  %5701 = vst [vmem:[%s7 + $0x5f0] sm:$0xff] %v5323
  %5702 = vst [vmem:[%s7 + $0x5f8] sm:$0xff] %v5324
  %5703 = vst [vmem:[%s7 + $0x600] sm:$0xff] %v5325
  %5704 = vst [vmem:[%s7 + $0x608] sm:$0xff] %v5326
  %5705 = vst [vmem:[%s7 + $0x610] sm:$0xff] %v5327
  %5706 = vst [vmem:[%s7 + $0x618] sm:$0xff] %v5328
  %5707 = vst [vmem:[%s7 + $0x620] sm:$0xff] %v5329
  %5708 = vst [vmem:[%s7 + $0x628] sm:$0xff] %v5330
  %5709 = vst [vmem:[%s7 + $0x630] sm:$0xff] %v5331
  %5710 = vst [vmem:[%s7 + $0x638] sm:$0xff] %v5332
  %5711 = vst [vmem:[%s7 + $0x640] sm:$0xff] %v5333
  %5712 = vst [vmem:[%s7 + $0x648] sm:$0xff] %v5334
  %5713 = vst [vmem:[%s7 + $0x650] sm:$0xff] %v5335
  %5714 = vst [vmem:[%s7 + $0x658] sm:$0xff] %v5336
  %5715 = vst [vmem:[%s7 + $0x660] sm:$0xff] %v5337
  %5716 = vst [vmem:[%s7 + $0x668] sm:$0xff] %v5338
  %5717 = vst [vmem:[%s7 + $0x670] sm:$0xff] %v5339
  %5718 = vst [vmem:[%s7 + $0x678] sm:$0xff] %v5340
  %5719 = vst [vmem:[%s7 + $0x680] sm:$0xff] %v5341
  %5720 = vst [vmem:[%s7 + $0x688] sm:$0xff] %v5342
  %5721 = vst [vmem:[%s7 + $0x690] sm:$0xff] %v5343
  %5722 = vst [vmem:[%s7 + $0x698] sm:$0xff] %v5344
  %5723 = vst [vmem:[%s7 + $0x6a0] sm:$0xff] %v5345
  %5724 = vst [vmem:[%s7 + $0x6a8] sm:$0xff] %v5346
  %5725 = vst [vmem:[%s7 + $0x6b0] sm:$0xff] %v5347
  %5726 = vst [vmem:[%s7 + $0x6b8] sm:$0xff] %v5348
  %5727 = vst [vmem:[%s7 + $0x6c0] sm:$0xff] %v5349
  %5728 = vst [vmem:[%s7 + $0x6c8] sm:$0xff] %v5350
  %5729 = vst [vmem:[%s7 + $0x6d0] sm:$0xff] %v5351
  %5730 = vst [vmem:[%s7 + $0x6d8] sm:$0xff] %v5352
  %5731 = vst [vmem:[%s7 + $0x6e0] sm:$0xff] %v5353
  %5732 = vst [vmem:[%s7 + $0x6e8] sm:$0xff] %v5354
  %5733 = vst [vmem:[%s7 + $0x6f0] sm:$0xff] %v5355
  %5734 = vst [vmem:[%s7 + $0x6f8] sm:$0xff] %v5356
  %5735 = vst [vmem:[%s7 + $0x700] sm:$0xff] %v5357
  %5736 = vst [vmem:[%s7 + $0x708] sm:$0xff] %v5358
  %5737 = vst [vmem:[%s7 + $0x710] sm:$0xff] %v5359
  %5738 = vst [vmem:[%s7 + $0x718] sm:$0xff] %v5360
  %5739 = vst [vmem:[%s7 + $0x720] sm:$0xff] %v5361
  %5740 = vst [vmem:[%s7 + $0x728] sm:$0xff] %v5362
  %5741 = vst [vmem:[%s7 + $0x730] sm:$0xff] %v5363
  %5742 = vst [vmem:[%s7 + $0x738] sm:$0xff] %v5364
  %5743 = vst [vmem:[%s7 + $0x740] sm:$0xff] %v5365
  %5744 = vst [vmem:[%s7 + $0x748] sm:$0xff] %v5366
  %5745 = vst [vmem:[%s7 + $0x750] sm:$0xff] %v5367
  %5746 = vst [vmem:[%s7 + $0x758] sm:$0xff] %v5368
  %5747 = vst [vmem:[%s7 + $0x760] sm:$0xff] %v5369
  %5748 = vst [vmem:[%s7 + $0x768] sm:$0xff] %v5370
  %5749 = vst [vmem:[%s7 + $0x770] sm:$0xff] %v5371
  %5750 = vst [vmem:[%s7 + $0x778] sm:$0xff] %v5372
  %5751 = vst [vmem:[%s7 + $0x780] sm:$0xff] %v5373
  %5752 = vst [vmem:[%s7 + $0x788] sm:$0xff] %v5374
  %5753 = vst [vmem:[%s7 + $0x790] sm:$0xff] %v5375
  %5754 = vst [vmem:[%s7 + $0x798] sm:$0xff] %v5376
  %5755 = vst [vmem:[%s7 + $0x7a0] sm:$0xff] %v5377
  %5756 = vst [vmem:[%s7 + $0x7a8] sm:$0xff] %v5378
  %5757 = vst [vmem:[%s7 + $0x7b0] sm:$0xff] %v5379
  %5758 = vst [vmem:[%s7 + $0x7b8] sm:$0xff] %v5380
  %5759 = vst [vmem:[%s7 + $0x7c0] sm:$0xff] %v5381
  %5760 = vst [vmem:[%s7 + $0x7c8] sm:$0xff] %v5382
  %5761 = vst [vmem:[%s7 + $0x7d0] sm:$0xff] %v5383
  %5762 = vst [vmem:[%s7 + $0x7d8] sm:$0xff] %v5384
  %5763 = vst [vmem:[%s7 + $0x7e0] sm:$0xff] %v5385
  %5764 = vst [vmem:[%s7 + $0x7e8] sm:$0xff] %v5386
  %5765 = vst [vmem:[%s7 + $0x7f0] sm:$0xff] %v5387
  %5766 = vst [vmem:[%s7 + $0x7f8] sm:$0xff] %v5388
  %5767 = vst [vmem:[%s7 + $0x800] sm:$0xff] %v5389
  %5768 = vst [vmem:[%s7 + $0x808] sm:$0xff] %v5390
  %5769 = vst [vmem:[%s7 + $0x810] sm:$0xff] %v5391
  %5770 = vst [vmem:[%s7 + $0x818] sm:$0xff] %v5392
  %5771 = vst [vmem:[%s7 + $0x820] sm:$0xff] %v5393
  %5772 = vst [vmem:[%s7 + $0x828] sm:$0xff] %v5394
  %5773 = vst [vmem:[%s7 + $0x830] sm:$0xff] %v5395
  %5774 = vst [vmem:[%s7 + $0x838] sm:$0xff] %v5396
  %5775 = vst [vmem:[%s7 + $0x840] sm:$0xff] %v5397
  %5776 = vst [vmem:[%s7 + $0x848] sm:$0xff] %v5398
  %5777 = vst [vmem:[%s7 + $0x850] sm:$0xff] %v5399
  %5778 = vst [vmem:[%s7 + $0x858] sm:$0xff] %v5400
  %5779 = vst [vmem:[%s7 + $0x860] sm:$0xff] %v5401
  %5780 = vst [vmem:[%s7 + $0x868] sm:$0xff] %v5402
  %5781 = vst [vmem:[%s7 + $0x870] sm:$0xff] %v5403
  %5782 = vst [vmem:[%s7 + $0x878] sm:$0xff] %v5404
  %5783 = vst [vmem:[%s7 + $0x880] sm:$0xff] %v5405
  %5784 = vst [vmem:[%s7 + $0x888] sm:$0xff] %v5406
  %5785 = vst [vmem:[%s7 + $0x890] sm:$0xff] %v5407
  %5786 = vst [vmem:[%s7 + $0x898] sm:$0xff] %v5408
  %5787 = vst [vmem:[%s7 + $0x8a0] sm:$0xff] %v5409
  %5788 = vst [vmem:[%s7 + $0x8a8] sm:$0xff] %v5410
  %5789 = vst [vmem:[%s7 + $0x8b0] sm:$0xff] %v5411
  %5790 = vst [vmem:[%s7 + $0x8b8] sm:$0xff] %v5412
  %5791 = vst [vmem:[%s7 + $0x8c0] sm:$0xff] %v5413
  %5792 = vst [vmem:[%s7 + $0x8c8] sm:$0xff] %v5414
  %5793 = vst [vmem:[%s7 + $0x8d0] sm:$0xff] %v5415
  %5794 = vst [vmem:[%s7 + $0x8d8] sm:$0xff] %v5416
  %5795 = vst [vmem:[%s7 + $0x8e0] sm:$0xff] %v5417
  %5796 = vst [vmem:[%s7 + $0x8e8] sm:$0xff] %v5418
  %5797 = vst [vmem:[%s7 + $0x8f0] sm:$0xff] %v5419
  %5798 = vst [vmem:[%s7 + $0x8f8] sm:$0xff] %v5420
  %5799 = vst [vmem:[%s7 + $0x900] sm:$0xff] %v5421
  %5800 = vst [vmem:[%s7 + $0x908] sm:$0xff] %v5422
  %5801 = vst [vmem:[%s7 + $0x910] sm:$0xff] %v5423
  %5802 = vst [vmem:[%s7 + $0x918] sm:$0xff] %v5424
  %5803 = vst [vmem:[%s7 + $0x920] sm:$0xff] %v5425
  %5804 = vst [vmem:[%s7 + $0x928] sm:$0xff] %v5426
  %5805 = vst [vmem:[%s7 + $0x930] sm:$0xff] %v5427
  %5806 = vst [vmem:[%s7 + $0x938] sm:$0xff] %v5428
  %5807 = vst [vmem:[%s7 + $0x940] sm:$0xff] %v5429
  %5808 = vst [vmem:[%s7 + $0x948] sm:$0xff] %v5430
  %5809 = vst [vmem:[%s7 + $0x950] sm:$0xff] %v5431
  %5810 = vst [vmem:[%s7 + $0x958] sm:$0xff] %v5432
  %5811 = vst [vmem:[%s7 + $0x960] sm:$0xff] %v5433
  %5812 = vst [vmem:[%s7 + $0x968] sm:$0xff] %v5434
  %5813 = vst [vmem:[%s7 + $0x970] sm:$0xff] %v5435
  %5814 = vst [vmem:[%s7 + $0x978] sm:$0xff] %v5436
  %5815 = vst [vmem:[%s7 + $0x980] sm:$0xff] %v5437
  %5816 = vst [vmem:[%s7 + $0x988] sm:$0xff] %v5438
  %5817 = vst [vmem:[%s7 + $0x990] sm:$0xff] %v5439
  %5818 = vst [vmem:[%s7 + $0x998] sm:$0xff] %v5440
  %5819 = vst [vmem:[%s7 + $0x9a0] sm:$0xff] %v5441
  %5820 = vst [vmem:[%s7 + $0x9a8] sm:$0xff] %v5442
  %5821 = vst [vmem:[%s7 + $0x9b0] sm:$0xff] %v5443
  %5822 = vst [vmem:[%s7 + $0x9b8] sm:$0xff] %v5444
  %5823 = vst [vmem:[%s7 + $0x9c0] sm:$0xff] %v5445
  %5824 = vst [vmem:[%s7 + $0x9c8] sm:$0xff] %v5446
  %5825 = vst [vmem:[%s7 + $0x9d0] sm:$0xff] %v5447
  %5826 = vst [vmem:[%s7 + $0x9d8] sm:$0xff] %v5448
  %5827 = vst [vmem:[%s7 + $0x9e0] sm:$0xff] %v5449
  %5828 = vst [vmem:[%s7 + $0x9e8] sm:$0xff] %v5450
  %5829 = vst [vmem:[%s7 + $0x9f0] sm:$0xff] %v5451
  %5830 = vst [vmem:[%s7 + $0x9f8] sm:$0xff] %v5452
  %5831 = vst [vmem:[%s7 + $0xa00] sm:$0xff] %v5453
  %5832 = vst [vmem:[%s7 + $0xa08] sm:$0xff] %v5454
  %5833 = vst [vmem:[%s7 + $0xa10] sm:$0xff] %v5455
  %5834 = vst [vmem:[%s7 + $0xa18] sm:$0xff] %v5456
  %5835 = vst [vmem:[%s7 + $0xa20] sm:$0xff] %v5457
  %5836 = vst [vmem:[%s7 + $0xa28] sm:$0xff] %v5458
  %5837 = vst [vmem:[%s7 + $0xa30] sm:$0xff] %v5459
  %5838 = vst [vmem:[%s7 + $0xa38] sm:$0xff] %v5460
  %5839 = vst [vmem:[%s7 + $0xa40] sm:$0xff] %v5461
  %5840 = vst [vmem:[%s7 + $0xa48] sm:$0xff] %v5462
  %5841 = vst [vmem:[%s7 + $0xa50] sm:$0xff] %v5463
  %5842 = vst [vmem:[%s7 + $0xa58] sm:$0xff] %v5464
  %5843 = vst [vmem:[%s7 + $0xa60] sm:$0xff] %v5465
  %5844 = vst [vmem:[%s7 + $0xa68] sm:$0xff] %v5466
  %5845 = vst [vmem:[%s7 + $0xa70] sm:$0xff] %v5467
  %5846 = vst [vmem:[%s7 + $0xa78] sm:$0xff] %v5468
  %5847 = vst [vmem:[%s7 + $0xa80] sm:$0xff] %v5469
  %5848 = vst [vmem:[%s7 + $0xa88] sm:$0xff] %v5470
  %5849 = vst [vmem:[%s7 + $0xa90] sm:$0xff] %v5471
  %5850 = vst [vmem:[%s7 + $0xa98] sm:$0xff] %v5472
  %5851 = vst [vmem:[%s7 + $0xaa0] sm:$0xff] %v5473
  %5852 = vst [vmem:[%s7 + $0xaa8] sm:$0xff] %v5474
  %5853 = vst [vmem:[%s7 + $0xab0] sm:$0xff] %v5475
  %5854 = vst [vmem:[%s7 + $0xab8] sm:$0xff] %v5476
  %5855 = vst [vmem:[%s7 + $0xac0] sm:$0xff] %v5477
  %5856 = vst [vmem:[%s7 + $0xac8] sm:$0xff] %v5478
  %5857 = vst [vmem:[%s7 + $0xad0] sm:$0xff] %v5479
  %5858 = vst [vmem:[%s7 + $0xad8] sm:$0xff] %v5480
  %5859 = vst [vmem:[%s7 + $0xae0] sm:$0xff] %v5481
  %5860 = vst [vmem:[%s7 + $0xae8] sm:$0xff] %v5482
  %5861 = vst [vmem:[%s7 + $0xaf0] sm:$0xff] %v5483
  %5862 = vst [vmem:[%s7 + $0xaf8] sm:$0xff] %v5484
  %5863 = vst [vmem:[%s7 + $0xb00] sm:$0xff] %v5485
  %5864 = vst [vmem:[%s7 + $0xb08] sm:$0xff] %v5486
  %5865 = vst [vmem:[%s7 + $0xb10] sm:$0xff] %v5487
  %5866 = vst [vmem:[%s7 + $0xb18] sm:$0xff] %v5488
  %5867 = vst [vmem:[%s7 + $0xb20] sm:$0xff] %v5489
  %5868 = vst [vmem:[%s7 + $0xb28] sm:$0xff] %v5490
  %5869 = vst [vmem:[%s7 + $0xb30] sm:$0xff] %v5491
  %5870 = vst [vmem:[%s7 + $0xb38] sm:$0xff] %v5492
  %5871 = vst [vmem:[%s7 + $0xb40] sm:$0xff] %v5493
  %5872 = vst [vmem:[%s7 + $0xb48] sm:$0xff] %v5494
  %5873 = vst [vmem:[%s7 + $0xb50] sm:$0xff] %v5495
  %5874 = vst [vmem:[%s7 + $0xb58] sm:$0xff] %v5496
  %5875 = vst [vmem:[%s7 + $0xb60] sm:$0xff] %v5497
  %5876 = vst [vmem:[%s7 + $0xb68] sm:$0xff] %v5498
  %5877 = vst [vmem:[%s7 + $0xb70] sm:$0xff] %v5499
  %5878 = vst [vmem:[%s7 + $0xb78] sm:$0xff] %v5500
  %5879 = vst [vmem:[%s7 + $0xb80] sm:$0xff] %v5501
  %5880 = vst [vmem:[%s7 + $0xb88] sm:$0xff] %v5502
  %5881 = vst [vmem:[%s7 + $0xb90] sm:$0xff] %v5503
  %5882 = vst [vmem:[%s7 + $0xb98] sm:$0xff] %v5504
  %5883 = vst [vmem:[%s7 + $0xba0] sm:$0xff] %v5505
  %5884 = vst [vmem:[%s7 + $0xba8] sm:$0xff] %v5506
  %5885 = vst [vmem:[%s7 + $0xbb0] sm:$0xff] %v5507
  %5886 = vst [vmem:[%s7 + $0xbb8] sm:$0xff] %v5508
  %5887 = vst [vmem:[%s7 + $0xbc0] sm:$0xff] %v5509
  %5888 = vst [vmem:[%s7 + $0xbc8] sm:$0xff] %v5510
  // Predicated region
  $region30: #{fused_bn_add_conv_bn.1} parent=0 // pred_check
    _
  $region31: #{fused_bn_add_conv_bn.1} parent=0 // pred_check_branch
    %5890 = sbr.rel (0) target = $region33
  $region32: #{fused_bn_add_conv_bn.1} parent=0 // pred_region
    _
  $region33: #{fused_bn_add_conv_bn.1} parent=0 // pred_fallthru
    _
  // Predicated region
  $region34: #{fused_bn_add_conv_bn.1} parent=0 // pred_check
    _
  $region35: #{fused_bn_add_conv_bn.1} parent=0 // pred_check_branch
    %5892 = sbr.rel (0) target = $region37
  $region36: #{fused_bn_add_conv_bn.1} parent=0 // pred_region
    _
  $region37: #{fused_bn_add_conv_bn.1} parent=0 // pred_fallthru
    _

</llo_original>
